<compile_context>
chip_gen: v5e
topology: v5e:2x2
jax: 0.10.0
libtpu: 0.0.40
codegen_flags: <defaults>
</compile_context>

<pallas_src>
import numpy as np
import jax
import jax.numpy as jnp
from jax.experimental import pallas as pl
from jax.experimental.pallas import tpu as pltpu


# ----------------------------------------------------------------------------
# Fused kernel: bidirectional LSTM stack -> attention pool -> MLP head.
# Layout: sequence activations live in VMEM as time-major-flattened 2D arrays,
# row = t*Bp + b (Bp = batch padded to a multiple of 8).  Scratch:
#   gx_sc  (S*Bp, 8H): hoisted input-projection gates for the current layer
#                      columns = [fwd i|f|o|g | bwd i|f|o|g]
#   seq_sc (S*Bp, 2H): current layer's bidirectional output (= final lstm_out)
# ----------------------------------------------------------------------------
def _make_fused_kernel(num_layers, S, Bp, H):
    G = 4 * H

    def kernel(*args):
        n_in = 1 + 3 * num_layers + 9
        x_ref = args[0]
        layer_refs = args[1:1 + 3 * num_layers]
        (aw1_ref, ab1_ref, aw2_ref,
         f1w_ref, f1b_ref, f2w_ref, f2b_ref,
         f3w_ref, f3b_ref) = args[1 + 3 * num_layers:n_in]
        out_ref = args[n_in]
        gx_sc, seq_sc = args[n_in + 1], args[n_in + 2]

        # -------------------- bidirectional LSTM stack --------------------
        for layer in range(num_layers):
            w_ih = layer_refs[3 * layer][...]      # (D_in, 8H) bf16  [fwd gates | bwd gates]
            w_hh = layer_refs[3 * layer + 1][...]  # (2H, 8H)  bf16  block-diag [fwd | bwd]
            b_fb = layer_refs[3 * layer + 2][...]  # (1, 8H)   f32   b_ih + b_hh

            act = x_ref[...] if layer == 0 else seq_sc[...]   # (S*Bp, D_in)

            # Hoisted input projection: all timesteps, both directions, one MXU op.
            gx_sc[...] = jnp.dot(act.astype(jnp.bfloat16), w_ih,
                                 preferred_element_type=jnp.float32) + b_fb

            def step(t, carry):
                h_cat, c_cat = carry                       # (Bp, 2H) f32, cols [fwd | bwd]

                # Single fused fwd+bwd recurrent matmul (block-diagonal weights).
                g_all = jnp.dot(h_cat.astype(jnp.bfloat16), w_hh,
                                preferred_element_type=jnp.float32)   # (Bp, 8H)

                row_f = pl.multiple_of(t * Bp, Bp)
                row_b = pl.multiple_of((S - 1 - t) * Bp, Bp)
                g_f = gx_sc[pl.ds(row_f, Bp), 0:G] + g_all[:, 0:G]
                g_b = gx_sc[pl.ds(row_b, Bp), G:2 * G] + g_all[:, G:2 * G]

                # gate order [i | f | o | g]: one contiguous sigmoid + one tanh per dir
                sig_f = jax.nn.sigmoid(g_f[:, 0:3 * H])
                gg_f = jnp.tanh(g_f[:, 3 * H:4 * H])
                c_f = sig_f[:, H:2 * H] * c_cat[:, 0:H] + sig_f[:, 0:H] * gg_f
                h_f = sig_f[:, 2 * H:3 * H] * jnp.tanh(c_f)

                sig_b = jax.nn.sigmoid(g_b[:, 0:3 * H])
                gg_b = jnp.tanh(g_b[:, 3 * H:4 * H])
                c_b = sig_b[:, H:2 * H] * c_cat[:, H:2 * H] + sig_b[:, 0:H] * gg_b
                h_b = sig_b[:, 2 * H:3 * H] * jnp.tanh(c_b)

                seq_sc[pl.ds(row_f, Bp), 0:H] = h_f
                seq_sc[pl.ds(row_b, Bp), H:2 * H] = h_b

                return (jnp.concatenate([h_f, h_b], axis=1),
                        jnp.concatenate([c_f, c_b], axis=1))

            z = jnp.zeros((Bp, 2 * H), jnp.float32)
            jax.lax.fori_loop(0, S, step, (z, z), unroll=min(S, 8))

        # -------------------- attention pooling (per-batch softmax over seq) -------
        lstm_flat = seq_sc[...]                                        # (S*Bp, 2H)
        e_act = jnp.tanh(jnp.dot(lstm_flat, aw1_ref[...],
                                 preferred_element_type=jnp.float32) + ab1_ref[...])
        # second linear as a VPU/XLU reduction (no N=1 matmul); its bias is dropped
        # because softmax is shift-invariant.
        e3 = e_act.reshape(S, Bp, H)
        scores3 = jnp.sum(e3 * aw2_ref[...], axis=2, keepdims=True)    # (S, Bp, 1)
        ew = jnp.exp(scores3 - jnp.max(scores3, axis=0, keepdims=True))  # per-batch max
        denom = jnp.sum(ew, axis=0)                                    # (Bp, 1), >= 1
        lstm3 = lstm_flat.reshape(S, Bp, 2 * H)
        ctx = jnp.sum(ew * lstm3, axis=0) * pl.reciprocal(denom, approx=True)  # (Bp, 2H)

        # -------------------- MLP head (eval BN folded into fc1/fc2) ---------------
        h1 = jnp.maximum(jnp.dot(ctx, f1w_ref[...],
                                 preferred_element_type=jnp.float32) + f1b_ref[...], 0.0)
        h2 = jnp.maximum(jnp.dot(h1, f2w_ref[...],
                                 preferred_element_type=jnp.float32) + f2b_ref[...], 0.0)
        logit = jnp.sum(h2 * f3w_ref[...], axis=1, keepdims=True) + f3b_ref[...]
        out_ref[...] = jax.nn.sigmoid(logit)

    return kernel


def _reorder_gates(w):
    """PyTorch gate order [i|f|g|o] -> kernel order [i|f|o|g] along last axis."""
    H = w.shape[-1] // 4
    return jnp.concatenate([w[..., :2 * H], w[..., 3 * H:], w[..., 2 * H:3 * H]], axis=-1)


# ----------------------------------------------------------------------------
# Wrapper: host-side weight packing / BN folding / batch padding + one pallas_call.
# ----------------------------------------------------------------------------
def enhanced_lstm_trader_forward(x, params, num_layers):
    """x: (batch, seq, input_size) float32 -> (batch, 1).  Inference semantics."""
    B, S, D = x.shape
    H = params['lstm'][0]['w_hh_f'].shape[0]
    Bp = -(-B // 8) * 8                      # pad batch to a sublane multiple

    x_p = jnp.pad(x, ((0, Bp - B), (0, 0), (0, 0))) if Bp != B else x
    # Time-major flattened input: row index = t*Bp + b.
    x_flat = jnp.transpose(x_p, (1, 0, 2)).reshape(S * Bp, D)

    eps = 1e-5

    def fold_bn(w, b, gamma, beta, mean, var):
        s = gamma * jax.lax.rsqrt(var + eps)          # (1, out)
        return w * s, (b - mean) * s + beta

    f1w, f1b = fold_bn(params['fc1_w'], params['fc1_b'], params['bn1_g'],
                       params['bn1_b'], params['bn1_m'], params['bn1_v'])
    f2w, f2b = fold_bn(params['fc2_w'], params['fc2_b'], params['bn2_g'],
                       params['bn2_b'], params['bn2_m'], params['bn2_v'])

    args = [x_flat]
    for layer in range(num_layers):
        lp = params['lstm'][layer]
        w_ih = jnp.concatenate([_reorder_gates(lp['w_ih_f']),
                                _reorder_gates(lp['w_ih_b'])], axis=1)     # (D_in, 8H)
        w_hh_f = _reorder_gates(lp['w_hh_f'])                               # (H, 4H)
        w_hh_b = _reorder_gates(lp['w_hh_b'])
        zero = jnp.zeros((H, 4 * H), jnp.float32)
        w_hh_blk = jnp.concatenate(
            [jnp.concatenate([w_hh_f, zero], axis=1),
             jnp.concatenate([zero, w_hh_b], axis=1)], axis=0)              # (2H, 8H)
        b_fb = jnp.concatenate([_reorder_gates(lp['b_f']),
                                _reorder_gates(lp['b_b'])], axis=1)         # (1, 8H)
        args += [w_ih.astype(jnp.bfloat16), w_hh_blk.astype(jnp.bfloat16), b_fb]

    args += [params['attn_w1'], params['attn_b1'],
             jnp.reshape(params['attn_w2'], (1, H)),
             f1w, f1b, f2w, f2b,
             jnp.reshape(params['fc3_w'], (1, -1)), params['fc3_b']]

    # ---- cost estimate + VMEM budget ----
    flops = 0
    din = D
    for _ in range(num_layers):
        flops += 2 * S * Bp * din * 8 * H           # hoisted input projection
        flops += 2 * S * Bp * (2 * H) * (8 * H)     # fused recurrent matmuls
        din = 2 * H
    flops += 2 * S * Bp * (2 * H) * H               # attention linear 1
    flops += 2 * Bp * (2 * H * 128 + 128 * 64 + 64)  # MLP head
    transcendentals = num_layers * S * Bp * 2 * 5 * H + S * Bp * (H + 1) + Bp

    in_bytes = sum(int(np.prod(a.shape)) * a.dtype.itemsize for a in args)
    scratch_bytes = (S * Bp * 8 * H + S * Bp * 2 * H) * 4
    footprint = in_bytes + scratch_bytes + Bp * 4
    vmem_limit = min(max(2 * footprint + (4 << 20), 16 << 20), 64 << 20)

    vmem = pl.BlockSpec(memory_space=pltpu.MemorySpace.VMEM)
    kernel = _make_fused_kernel(num_layers, S, Bp, H)
    out = pl.pallas_call(
        kernel,
        out_shape=jax.ShapeDtypeStruct((Bp, 1), jnp.float32),
        in_specs=[vmem] * len(args),
        out_specs=vmem,
        scratch_shapes=[
            pltpu.VMEM((S * Bp, 8 * H), jnp.float32),   # hoisted gate projections
            pltpu.VMEM((S * Bp, 2 * H), jnp.float32),   # per-layer bidirectional output
        ],
        compiler_params=pltpu.CompilerParams(vmem_limit_bytes=int(vmem_limit)),
        cost_estimate=pl.CostEstimate(flops=int(flops),
                                      transcendentals=int(transcendentals),
                                      bytes_accessed=int(in_bytes + Bp * 4)),
    )(*args)
    return out[:B]


# ----------------------------------------------------------------------------
# Deterministic parameter init (PyTorch-style uniform fan-in scaling).
# Weights stored transposed vs torch state_dict, in torch gate order [i|f|g|o];
# the wrapper reorders / packs them for the kernel.
# ----------------------------------------------------------------------------
def init_params(key, input_size, hidden_size, num_layers):
    H = hidden_size
    keys = iter(jax.random.split(key, 256))

    def unif(shape, k):
        return jax.random.uniform(next(keys), shape, jnp.float32, -k, k)

    k_lstm = 1.0 / np.sqrt(H)
    lstm = []
    for layer in range(num_layers):
        din = input_size if layer == 0 else 2 * H
        lp = {}
        for d in ('f', 'b'):
            lp['w_ih_' + d] = unif((din, 4 * H), k_lstm)          # transposed vs torch
            lp['w_hh_' + d] = unif((H, 4 * H), k_lstm)
            lp['b_' + d] = unif((1, 4 * H), k_lstm) + unif((1, 4 * H), k_lstm)  # b_ih + b_hh
        lstm.append(lp)

    k_a1 = 1.0 / np.sqrt(2 * H)
    k_a2 = 1.0 / np.sqrt(H)
    params = {
        'lstm': lstm,
        'attn_w1': unif((2 * H, H), k_a1), 'attn_b1': unif((1, H), k_a1),
        'attn_w2': unif((H, 1), k_a2),
        # attn_b2 exists in the torch module but is mathematically dead in forward
        # (uniform shift before softmax), so it is not used by the kernel.
        'attn_b2': unif((1, 1), k_a2),
        'fc1_w': unif((2 * H, 128), 1.0 / np.sqrt(2 * H)), 'fc1_b': unif((1, 128), 1.0 / np.sqrt(2 * H)),
        'bn1_g': jnp.ones((1, 128), jnp.float32), 'bn1_b': jnp.zeros((1, 128), jnp.float32),
        'bn1_m': jnp.zeros((1, 128), jnp.float32), 'bn1_v': jnp.ones((1, 128), jnp.float32),
        'fc2_w': unif((128, 64), 1.0 / np.sqrt(128)), 'fc2_b': unif((1, 64), 1.0 / np.sqrt(128)),
        'bn2_g': jnp.ones((1, 64), jnp.float32), 'bn2_b': jnp.zeros((1, 64), jnp.float32),
        'bn2_m': jnp.zeros((1, 64), jnp.float32), 'bn2_v': jnp.ones((1, 64), jnp.float32),
        'fc3_w': unif((64, 1), 1.0 / np.sqrt(64)), 'fc3_b': unif((1, 1), 1.0 / np.sqrt(64)),
    }
    return params


if __name__ == "__main__":
    batch, seq, input_size = 2, 8, 8
    hidden_size, num_layers = 32, 2

    key = jax.random.PRNGKey(0)
    k_x, k_p = jax.random.split(key)
    x = jax.random.normal(k_x, (batch, seq, input_size), jnp.float32)
    params = init_params(k_p, input_size, hidden_size, num_layers)

    fwd = jax.jit(enhanced_lstm_trader_forward, static_argnums=(2,))
    out = fwd(x, params, num_layers)
    out = jax.block_until_ready(out)

    assert out.shape == (batch, 1), out.shape
    assert bool(jnp.all(jnp.isfinite(out)))
    assert bool(jnp.all((out >= 0.0) & (out <= 1.0)))
    print("KERNEL_OK")
</pallas_src>

<mosaic_0001>
module attributes {stable_mosaic.version = 11 : i64} {
  func.func @kernel(%arg0: memref<64x8xf32, #tpu.memory_space<vmem>>, %arg1: memref<8x256xbf16, #tpu.memory_space<vmem>>, %arg2: memref<64x256xbf16, #tpu.memory_space<vmem>>, %arg3: memref<1x256xf32, #tpu.memory_space<vmem>>, %arg4: memref<64x256xbf16, #tpu.memory_space<vmem>>, %arg5: memref<64x256xbf16, #tpu.memory_space<vmem>>, %arg6: memref<1x256xf32, #tpu.memory_space<vmem>>, %arg7: memref<64x32xf32, #tpu.memory_space<vmem>>, %arg8: memref<1x32xf32, #tpu.memory_space<vmem>>, %arg9: memref<1x32xf32, #tpu.memory_space<vmem>>, %arg10: memref<64x128xf32, #tpu.memory_space<vmem>>, %arg11: memref<1x128xf32, #tpu.memory_space<vmem>>, %arg12: memref<128x64xf32, #tpu.memory_space<vmem>>, %arg13: memref<1x64xf32, #tpu.memory_space<vmem>>, %arg14: memref<1x64xf32, #tpu.memory_space<vmem>>, %arg15: memref<1x1xf32, #tpu.memory_space<vmem>>, %arg16: memref<8x1xf32, #tpu.memory_space<vmem>>, %arg17: memref<64x256xf32, #tpu.memory_space<vmem>>, %arg18: memref<64x64xf32, #tpu.memory_space<vmem>>) attributes {dimension_semantics = [], scalar_prefetch = 0 : i64, scratch_operands = 2 : i64, tpu.core_type = #tpu.core_type<tc>} {
    %c0 = arith.constant 0 : index
    %c0_0 = arith.constant 0 : index
    %0 = vector.load %arg1[%c0, %c0_0] : memref<8x256xbf16, #tpu.memory_space<vmem>>, vector<8x256xbf16>
    %c0_1 = arith.constant 0 : index
    %c0_2 = arith.constant 0 : index
    %1 = vector.load %arg2[%c0_1, %c0_2] : memref<64x256xbf16, #tpu.memory_space<vmem>>, vector<64x256xbf16>
    %c0_3 = arith.constant 0 : index
    %c0_4 = arith.constant 0 : index
    %2 = vector.load %arg3[%c0_3, %c0_4] : memref<1x256xf32, #tpu.memory_space<vmem>>, vector<1x256xf32>
    %c0_5 = arith.constant 0 : index
    %c0_6 = arith.constant 0 : index
    %3 = vector.load %arg0[%c0_5, %c0_6] : memref<64x8xf32, #tpu.memory_space<vmem>>, vector<64x8xf32>
    %4 = arith.truncf %3 : vector<64x8xf32> to vector<64x8xbf16>
    %cst = arith.constant dense<0.000000e+00> : vector<64x256xf32>
    %5 = tpu.matmul %4, %0, %cst {dimension_numbers = #tpu.dot_dimension_numbers<[1], [0], [0], [1], [0, 0, 1, 1], [], []>} : vector<64x8xbf16>, vector<8x256xbf16>, vector<64x256xf32> -> vector<64x256xf32>
    %6 = vector.broadcast %2 : vector<1x256xf32> to vector<64x256xf32>
    %7 = arith.addf %5, %6 : vector<64x256xf32>
    %c0_7 = arith.constant 0 : index
    %c0_8 = arith.constant 0 : index
    %8 = vector.load %arg17[%c0_7, %c0_8] : memref<64x256xf32, #tpu.memory_space<vmem>>, vector<64x256xf32>
    tpu.vector_store %arg17[%c0_7, %c0_8], %7 {strides = array<i32>} : memref<64x256xf32, #tpu.memory_space<vmem>>, vector<64x256xf32>,
    %cst_9 = arith.constant 0.000000e+00 : f32
    %9 = vector.broadcast %cst_9 : f32 to vector<8x64xf32>
    %c0_i32 = arith.constant 0 : i32
    %10 = arith.truncf %9 : vector<8x64xf32> to vector<8x64xbf16>
    %cst_10 = arith.constant dense<0.000000e+00> : vector<8x256xf32>
    %11 = tpu.matmul %10, %1, %cst_10 {dimension_numbers = #tpu.dot_dimension_numbers<[1], [0], [0], [1], [0, 0, 1, 1], [], []>} : vector<8x64xbf16>, vector<64x256xbf16>, vector<8x256xf32> -> vector<8x256xf32>
    %c8_i32 = arith.constant 8 : i32
    %12 = arith.muli %c0_i32, %c8_i32 : i32
    %13 = tpu.assume_multiple %12, 8 : i32
    %c7_i32 = arith.constant 7 : i32
    %14 = arith.subi %c7_i32, %c0_i32 : i32
    %c8_i32_11 = arith.constant 8 : i32
    %15 = arith.muli %14, %c8_i32_11 : i32
    %16 = tpu.assume_multiple %15, 8 : i32
    %17 = arith.index_cast %13 : i32 to index
    %c0_12 = arith.constant 0 : index
    %18 = vector.load %arg17[%17, %c0_12] : memref<64x256xf32, #tpu.memory_space<vmem>>, vector<8x128xf32>
    %19 = vector.extract_strided_slice %11 {offsets = [0, 0], sizes = [8, 128], strides = [1, 1]} : vector<8x256xf32> to vector<8x128xf32>
    %20 = arith.addf %18, %19 : vector<8x128xf32>
    %21 = arith.index_cast %16 : i32 to index
    %c128 = arith.constant 128 : index
    %22 = vector.load %arg17[%21, %c128] : memref<64x256xf32, #tpu.memory_space<vmem>>, vector<8x128xf32>
    %23 = vector.extract_strided_slice %11 {offsets = [0, 128], sizes = [8, 128], strides = [1, 1]} : vector<8x256xf32> to vector<8x128xf32>
    %24 = arith.addf %22, %23 : vector<8x128xf32>
    %25 = vector.extract_strided_slice %20 {offsets = [0, 0], sizes = [8, 96], strides = [1, 1]} : vector<8x128xf32> to vector<8x96xf32>
    %26 = arith.negf %25 : vector<8x96xf32>
    %27 = math.exp %26 : vector<8x96xf32>
    %cst_13 = arith.constant 1.000000e+00 : f32
    %28 = vector.broadcast %cst_13 : f32 to vector<8x96xf32>
    %29 = arith.addf %28, %27 : vector<8x96xf32>
    %30 = arith.divf %28, %29 : vector<8x96xf32>
    %31 = vector.extract_strided_slice %20 {offsets = [0, 96], sizes = [8, 32], strides = [1, 1]} : vector<8x128xf32> to vector<8x32xf32>
    %32 = math.tanh %31 : vector<8x32xf32>
    %33 = vector.extract_strided_slice %30 {offsets = [0, 32], sizes = [8, 32], strides = [1, 1]} : vector<8x96xf32> to vector<8x32xf32>
    %34 = vector.extract_strided_slice %9 {offsets = [0, 0], sizes = [8, 32], strides = [1, 1]} : vector<8x64xf32> to vector<8x32xf32>
    %35 = arith.mulf %33, %34 : vector<8x32xf32>
    %36 = vector.extract_strided_slice %30 {offsets = [0, 0], sizes = [8, 32], strides = [1, 1]} : vector<8x96xf32> to vector<8x32xf32>
    %37 = arith.mulf %36, %32 : vector<8x32xf32>
    %38 = arith.addf %35, %37 : vector<8x32xf32>
    %39 = vector.extract_strided_slice %30 {offsets = [0, 64], sizes = [8, 32], strides = [1, 1]} : vector<8x96xf32> to vector<8x32xf32>
    %40 = math.tanh %38 : vector<8x32xf32>
    %41 = arith.mulf %39, %40 : vector<8x32xf32>
    %42 = vector.extract_strided_slice %24 {offsets = [0, 0], sizes = [8, 96], strides = [1, 1]} : vector<8x128xf32> to vector<8x96xf32>
    %43 = arith.negf %42 : vector<8x96xf32>
    %44 = math.exp %43 : vector<8x96xf32>
    %cst_14 = arith.constant 1.000000e+00 : f32
    %45 = vector.broadcast %cst_14 : f32 to vector<8x96xf32>
    %46 = arith.addf %45, %44 : vector<8x96xf32>
    %47 = arith.divf %45, %46 : vector<8x96xf32>
    %48 = vector.extract_strided_slice %24 {offsets = [0, 96], sizes = [8, 32], strides = [1, 1]} : vector<8x128xf32> to vector<8x32xf32>
    %49 = math.tanh %48 : vector<8x32xf32>
    %50 = vector.extract_strided_slice %47 {offsets = [0, 32], sizes = [8, 32], strides = [1, 1]} : vector<8x96xf32> to vector<8x32xf32>
    %51 = vector.extract_strided_slice %9 {offsets = [0, 32], sizes = [8, 32], strides = [1, 1]} : vector<8x64xf32> to vector<8x32xf32>
    %52 = arith.mulf %50, %51 : vector<8x32xf32>
    %53 = vector.extract_strided_slice %47 {offsets = [0, 0], sizes = [8, 32], strides = [1, 1]} : vector<8x96xf32> to vector<8x32xf32>
    %54 = arith.mulf %53, %49 : vector<8x32xf32>
    %55 = arith.addf %52, %54 : vector<8x32xf32>
    %56 = vector.extract_strided_slice %47 {offsets = [0, 64], sizes = [8, 32], strides = [1, 1]} : vector<8x96xf32> to vector<8x32xf32>
    %57 = math.tanh %55 : vector<8x32xf32>
    %58 = arith.mulf %56, %57 : vector<8x32xf32>
    %59 = arith.index_cast %13 : i32 to index
    %c0_15 = arith.constant 0 : index
    %60 = vector.load %arg18[%59, %c0_15] : memref<64x64xf32, #tpu.memory_space<vmem>>, vector<8x32xf32>
    tpu.vector_store %arg18[%59, %c0_15], %41 {strides = array<i32>} : memref<64x64xf32, #tpu.memory_space<vmem>>, vector<8x32xf32>,
    %61 = arith.index_cast %16 : i32 to index
    %c32 = arith.constant 32 : index
    %62 = vector.load %arg18[%61, %c32] : memref<64x64xf32, #tpu.memory_space<vmem>>, vector<8x32xf32>
    tpu.vector_store %arg18[%61, %c32], %58 {strides = array<i32>} : memref<64x64xf32, #tpu.memory_space<vmem>>, vector<8x32xf32>,
    %63 = tpu.concatenate %41, %58 in 1 : vector<8x32xf32>, vector<8x32xf32> -> vector<8x64xf32>
    %64 = tpu.concatenate %38, %55 in 1 : vector<8x32xf32>, vector<8x32xf32> -> vector<8x64xf32>
    %c1_i32 = arith.constant 1 : i32
    %65 = arith.truncf %63 : vector<8x64xf32> to vector<8x64xbf16>
    %cst_16 = arith.constant dense<0.000000e+00> : vector<8x256xf32>
    %66 = tpu.matmul %65, %1, %cst_16 {dimension_numbers = #tpu.dot_dimension_numbers<[1], [0], [0], [1], [0, 0, 1, 1], [], []>} : vector<8x64xbf16>, vector<64x256xbf16>, vector<8x256xf32> -> vector<8x256xf32>
    %c8_i32_17 = arith.constant 8 : i32
    %67 = arith.muli %c1_i32, %c8_i32_17 : i32
    %68 = tpu.assume_multiple %67, 8 : i32
    %c7_i32_18 = arith.constant 7 : i32
    %69 = arith.subi %c7_i32_18, %c1_i32 : i32
    %c8_i32_19 = arith.constant 8 : i32
    %70 = arith.muli %69, %c8_i32_19 : i32
    %71 = tpu.assume_multiple %70, 8 : i32
    %72 = arith.index_cast %68 : i32 to index
    %c0_20 = arith.constant 0 : index
    %73 = vector.load %arg17[%72, %c0_20] : memref<64x256xf32, #tpu.memory_space<vmem>>, vector<8x128xf32>
    %74 = vector.extract_strided_slice %66 {offsets = [0, 0], sizes = [8, 128], strides = [1, 1]} : vector<8x256xf32> to vector<8x128xf32>
    %75 = arith.addf %73, %74 : vector<8x128xf32>
    %76 = arith.index_cast %71 : i32 to index
    %c128_21 = arith.constant 128 : index
    %77 = vector.load %arg17[%76, %c128_21] : memref<64x256xf32, #tpu.memory_space<vmem>>, vector<8x128xf32>
    %78 = vector.extract_strided_slice %66 {offsets = [0, 128], sizes = [8, 128], strides = [1, 1]} : vector<8x256xf32> to vector<8x128xf32>
    %79 = arith.addf %77, %78 : vector<8x128xf32>
    %80 = vector.extract_strided_slice %75 {offsets = [0, 0], sizes = [8, 96], strides = [1, 1]} : vector<8x128xf32> to vector<8x96xf32>
    %81 = arith.negf %80 : vector<8x96xf32>
    %82 = math.exp %81 : vector<8x96xf32>
    %cst_22 = arith.constant 1.000000e+00 : f32
    %83 = vector.broadcast %cst_22 : f32 to vector<8x96xf32>
    %84 = arith.addf %83, %82 : vector<8x96xf32>
    %85 = arith.divf %83, %84 : vector<8x96xf32>
    %86 = vector.extract_strided_slice %75 {offsets = [0, 96], sizes = [8, 32], strides = [1, 1]} : vector<8x128xf32> to vector<8x32xf32>
    %87 = math.tanh %86 : vector<8x32xf32>
    %88 = vector.extract_strided_slice %85 {offsets = [0, 32], sizes = [8, 32], strides = [1, 1]} : vector<8x96xf32> to vector<8x32xf32>
    %89 = vector.extract_strided_slice %64 {offsets = [0, 0], sizes = [8, 32], strides = [1, 1]} : vector<8x64xf32> to vector<8x32xf32>
    %90 = arith.mulf %88, %89 : vector<8x32xf32>
    %91 = vector.extract_strided_slice %85 {offsets = [0, 0], sizes = [8, 32], strides = [1, 1]} : vector<8x96xf32> to vector<8x32xf32>
    %92 = arith.mulf %91, %87 : vector<8x32xf32>
    %93 = arith.addf %90, %92 : vector<8x32xf32>
    %94 = vector.extract_strided_slice %85 {offsets = [0, 64], sizes = [8, 32], strides = [1, 1]} : vector<8x96xf32> to vector<8x32xf32>
    %95 = math.tanh %93 : vector<8x32xf32>
    %96 = arith.mulf %94, %95 : vector<8x32xf32>
    %97 = vector.extract_strided_slice %79 {offsets = [0, 0], sizes = [8, 96], strides = [1, 1]} : vector<8x128xf32> to vector<8x96xf32>
    %98 = arith.negf %97 : vector<8x96xf32>
    %99 = math.exp %98 : vector<8x96xf32>
    %cst_23 = arith.constant 1.000000e+00 : f32
    %100 = vector.broadcast %cst_23 : f32 to vector<8x96xf32>
    %101 = arith.addf %100, %99 : vector<8x96xf32>
    %102 = arith.divf %100, %101 : vector<8x96xf32>
    %103 = vector.extract_strided_slice %79 {offsets = [0, 96], sizes = [8, 32], strides = [1, 1]} : vector<8x128xf32> to vector<8x32xf32>
    %104 = math.tanh %103 : vector<8x32xf32>
    %105 = vector.extract_strided_slice %102 {offsets = [0, 32], sizes = [8, 32], strides = [1, 1]} : vector<8x96xf32> to vector<8x32xf32>
    %106 = vector.extract_strided_slice %64 {offsets = [0, 32], sizes = [8, 32], strides = [1, 1]} : vector<8x64xf32> to vector<8x32xf32>
    %107 = arith.mulf %105, %106 : vector<8x32xf32>
    %108 = vector.extract_strided_slice %102 {offsets = [0, 0], sizes = [8, 32], strides = [1, 1]} : vector<8x96xf32> to vector<8x32xf32>
    %109 = arith.mulf %108, %104 : vector<8x32xf32>
    %110 = arith.addf %107, %109 : vector<8x32xf32>
    %111 = vector.extract_strided_slice %102 {offsets = [0, 64], sizes = [8, 32], strides = [1, 1]} : vector<8x96xf32> to vector<8x32xf32>
    %112 = math.tanh %110 : vector<8x32xf32>
    %113 = arith.mulf %111, %112 : vector<8x32xf32>
    %114 = arith.index_cast %68 : i32 to index
    %c0_24 = arith.constant 0 : index
    %115 = vector.load %arg18[%114, %c0_24] : memref<64x64xf32, #tpu.memory_space<vmem>>, vector<8x32xf32>
    tpu.vector_store %arg18[%114, %c0_24], %96 {strides = array<i32>} : memref<64x64xf32, #tpu.memory_space<vmem>>, vector<8x32xf32>,
    %116 = arith.index_cast %71 : i32 to index
    %c32_25 = arith.constant 32 : index
    %117 = vector.load %arg18[%116, %c32_25] : memref<64x64xf32, #tpu.memory_space<vmem>>, vector<8x32xf32>
    tpu.vector_store %arg18[%116, %c32_25], %113 {strides = array<i32>} : memref<64x64xf32, #tpu.memory_space<vmem>>, vector<8x32xf32>,
    %118 = tpu.concatenate %96, %113 in 1 : vector<8x32xf32>, vector<8x32xf32> -> vector<8x64xf32>
    %119 = tpu.concatenate %93, %110 in 1 : vector<8x32xf32>, vector<8x32xf32> -> vector<8x64xf32>
    %c2_i32 = arith.constant 2 : i32
    %120 = arith.truncf %118 : vector<8x64xf32> to vector<8x64xbf16>
    %cst_26 = arith.constant dense<0.000000e+00> : vector<8x256xf32>
    %121 = tpu.matmul %120, %1, %cst_26 {dimension_numbers = #tpu.dot_dimension_numbers<[1], [0], [0], [1], [0, 0, 1, 1], [], []>} : vector<8x64xbf16>, vector<64x256xbf16>, vector<8x256xf32> -> vector<8x256xf32>
    %c8_i32_27 = arith.constant 8 : i32
    %122 = arith.muli %c2_i32, %c8_i32_27 : i32
    %123 = tpu.assume_multiple %122, 8 : i32
    %c7_i32_28 = arith.constant 7 : i32
    %124 = arith.subi %c7_i32_28, %c2_i32 : i32
    %c8_i32_29 = arith.constant 8 : i32
    %125 = arith.muli %124, %c8_i32_29 : i32
    %126 = tpu.assume_multiple %125, 8 : i32
    %127 = arith.index_cast %123 : i32 to index
    %c0_30 = arith.constant 0 : index
    %128 = vector.load %arg17[%127, %c0_30] : memref<64x256xf32, #tpu.memory_space<vmem>>, vector<8x128xf32>
    %129 = vector.extract_strided_slice %121 {offsets = [0, 0], sizes = [8, 128], strides = [1, 1]} : vector<8x256xf32> to vector<8x128xf32>
    %130 = arith.addf %128, %129 : vector<8x128xf32>
    %131 = arith.index_cast %126 : i32 to index
    %c128_31 = arith.constant 128 : index
    %132 = vector.load %arg17[%131, %c128_31] : memref<64x256xf32, #tpu.memory_space<vmem>>, vector<8x128xf32>
    %133 = vector.extract_strided_slice %121 {offsets = [0, 128], sizes = [8, 128], strides = [1, 1]} : vector<8x256xf32> to vector<8x128xf32>
    %134 = arith.addf %132, %133 : vector<8x128xf32>
    %135 = vector.extract_strided_slice %130 {offsets = [0, 0], sizes = [8, 96], strides = [1, 1]} : vector<8x128xf32> to vector<8x96xf32>
    %136 = arith.negf %135 : vector<8x96xf32>
    %137 = math.exp %136 : vector<8x96xf32>
    %cst_32 = arith.constant 1.000000e+00 : f32
    %138 = vector.broadcast %cst_32 : f32 to vector<8x96xf32>
    %139 = arith.addf %138, %137 : vector<8x96xf32>
    %140 = arith.divf %138, %139 : vector<8x96xf32>
    %141 = vector.extract_strided_slice %130 {offsets = [0, 96], sizes = [8, 32], strides = [1, 1]} : vector<8x128xf32> to vector<8x32xf32>
    %142 = math.tanh %141 : vector<8x32xf32>
    %143 = vector.extract_strided_slice %140 {offsets = [0, 32], sizes = [8, 32], strides = [1, 1]} : vector<8x96xf32> to vector<8x32xf32>
    %144 = vector.extract_strided_slice %119 {offsets = [0, 0], sizes = [8, 32], strides = [1, 1]} : vector<8x64xf32> to vector<8x32xf32>
    %145 = arith.mulf %143, %144 : vector<8x32xf32>
    %146 = vector.extract_strided_slice %140 {offsets = [0, 0], sizes = [8, 32], strides = [1, 1]} : vector<8x96xf32> to vector<8x32xf32>
    %147 = arith.mulf %146, %142 : vector<8x32xf32>
    %148 = arith.addf %145, %147 : vector<8x32xf32>
    %149 = vector.extract_strided_slice %140 {offsets = [0, 64], sizes = [8, 32], strides = [1, 1]} : vector<8x96xf32> to vector<8x32xf32>
    %150 = math.tanh %148 : vector<8x32xf32>
    %151 = arith.mulf %149, %150 : vector<8x32xf32>
    %152 = vector.extract_strided_slice %134 {offsets = [0, 0], sizes = [8, 96], strides = [1, 1]} : vector<8x128xf32> to vector<8x96xf32>
    %153 = arith.negf %152 : vector<8x96xf32>
    %154 = math.exp %153 : vector<8x96xf32>
    %cst_33 = arith.constant 1.000000e+00 : f32
    %155 = vector.broadcast %cst_33 : f32 to vector<8x96xf32>
    %156 = arith.addf %155, %154 : vector<8x96xf32>
    %157 = arith.divf %155, %156 : vector<8x96xf32>
    %158 = vector.extract_strided_slice %134 {offsets = [0, 96], sizes = [8, 32], strides = [1, 1]} : vector<8x128xf32> to vector<8x32xf32>
    %159 = math.tanh %158 : vector<8x32xf32>
    %160 = vector.extract_strided_slice %157 {offsets = [0, 32], sizes = [8, 32], strides = [1, 1]} : vector<8x96xf32> to vector<8x32xf32>
    %161 = vector.extract_strided_slice %119 {offsets = [0, 32], sizes = [8, 32], strides = [1, 1]} : vector<8x64xf32> to vector<8x32xf32>
    %162 = arith.mulf %160, %161 : vector<8x32xf32>
    %163 = vector.extract_strided_slice %157 {offsets = [0, 0], sizes = [8, 32], strides = [1, 1]} : vector<8x96xf32> to vector<8x32xf32>
    %164 = arith.mulf %163, %159 : vector<8x32xf32>
    %165 = arith.addf %162, %164 : vector<8x32xf32>
    %166 = vector.extract_strided_slice %157 {offsets = [0, 64], sizes = [8, 32], strides = [1, 1]} : vector<8x96xf32> to vector<8x32xf32>
    %167 = math.tanh %165 : vector<8x32xf32>
    %168 = arith.mulf %166, %167 : vector<8x32xf32>
    %169 = arith.index_cast %123 : i32 to index
    %c0_34 = arith.constant 0 : index
    %170 = vector.load %arg18[%169, %c0_34] : memref<64x64xf32, #tpu.memory_space<vmem>>, vector<8x32xf32>
    tpu.vector_store %arg18[%169, %c0_34], %151 {strides = array<i32>} : memref<64x64xf32, #tpu.memory_space<vmem>>, vector<8x32xf32>,
    %171 = arith.index_cast %126 : i32 to index
    %c32_35 = arith.constant 32 : index
    %172 = vector.load %arg18[%171, %c32_35] : memref<64x64xf32, #tpu.memory_space<vmem>>, vector<8x32xf32>
    tpu.vector_store %arg18[%171, %c32_35], %168 {strides = array<i32>} : memref<64x64xf32, #tpu.memory_space<vmem>>, vector<8x32xf32>,
    %173 = tpu.concatenate %151, %168 in 1 : vector<8x32xf32>, vector<8x32xf32> -> vector<8x64xf32>
    %174 = tpu.concatenate %148, %165 in 1 : vector<8x32xf32>, vector<8x32xf32> -> vector<8x64xf32>
    %c3_i32 = arith.constant 3 : i32
    %175 = arith.truncf %173 : vector<8x64xf32> to vector<8x64xbf16>
    %cst_36 = arith.constant dense<0.000000e+00> : vector<8x256xf32>
    %176 = tpu.matmul %175, %1, %cst_36 {dimension_numbers = #tpu.dot_dimension_numbers<[1], [0], [0], [1], [0, 0, 1, 1], [], []>} : vector<8x64xbf16>, vector<64x256xbf16>, vector<8x256xf32> -> vector<8x256xf32>
    %c8_i32_37 = arith.constant 8 : i32
    %177 = arith.muli %c3_i32, %c8_i32_37 : i32
    %178 = tpu.assume_multiple %177, 8 : i32
    %c7_i32_38 = arith.constant 7 : i32
    %179 = arith.subi %c7_i32_38, %c3_i32 : i32
    %c8_i32_39 = arith.constant 8 : i32
    %180 = arith.muli %179, %c8_i32_39 : i32
    %181 = tpu.assume_multiple %180, 8 : i32
    %182 = arith.index_cast %178 : i32 to index
    %c0_40 = arith.constant 0 : index
    %183 = vector.load %arg17[%182, %c0_40] : memref<64x256xf32, #tpu.memory_space<vmem>>, vector<8x128xf32>
    %184 = vector.extract_strided_slice %176 {offsets = [0, 0], sizes = [8, 128], strides = [1, 1]} : vector<8x256xf32> to vector<8x128xf32>
    %185 = arith.addf %183, %184 : vector<8x128xf32>
    %186 = arith.index_cast %181 : i32 to index
    %c128_41 = arith.constant 128 : index
    %187 = vector.load %arg17[%186, %c128_41] : memref<64x256xf32, #tpu.memory_space<vmem>>, vector<8x128xf32>
    %188 = vector.extract_strided_slice %176 {offsets = [0, 128], sizes = [8, 128], strides = [1, 1]} : vector<8x256xf32> to vector<8x128xf32>
    %189 = arith.addf %187, %188 : vector<8x128xf32>
    %190 = vector.extract_strided_slice %185 {offsets = [0, 0], sizes = [8, 96], strides = [1, 1]} : vector<8x128xf32> to vector<8x96xf32>
    %191 = arith.negf %190 : vector<8x96xf32>
    %192 = math.exp %191 : vector<8x96xf32>
    %cst_42 = arith.constant 1.000000e+00 : f32
    %193 = vector.broadcast %cst_42 : f32 to vector<8x96xf32>
    %194 = arith.addf %193, %192 : vector<8x96xf32>
    %195 = arith.divf %193, %194 : vector<8x96xf32>
    %196 = vector.extract_strided_slice %185 {offsets = [0, 96], sizes = [8, 32], strides = [1, 1]} : vector<8x128xf32> to vector<8x32xf32>
    %197 = math.tanh %196 : vector<8x32xf32>
    %198 = vector.extract_strided_slice %195 {offsets = [0, 32], sizes = [8, 32], strides = [1, 1]} : vector<8x96xf32> to vector<8x32xf32>
    %199 = vector.extract_strided_slice %174 {offsets = [0, 0], sizes = [8, 32], strides = [1, 1]} : vector<8x64xf32> to vector<8x32xf32>
    %200 = arith.mulf %198, %199 : vector<8x32xf32>
    %201 = vector.extract_strided_slice %195 {offsets = [0, 0], sizes = [8, 32], strides = [1, 1]} : vector<8x96xf32> to vector<8x32xf32>
    %202 = arith.mulf %201, %197 : vector<8x32xf32>
    %203 = arith.addf %200, %202 : vector<8x32xf32>
    %204 = vector.extract_strided_slice %195 {offsets = [0, 64], sizes = [8, 32], strides = [1, 1]} : vector<8x96xf32> to vector<8x32xf32>
    %205 = math.tanh %203 : vector<8x32xf32>
    %206 = arith.mulf %204, %205 : vector<8x32xf32>
    %207 = vector.extract_strided_slice %189 {offsets = [0, 0], sizes = [8, 96], strides = [1, 1]} : vector<8x128xf32> to vector<8x96xf32>
    %208 = arith.negf %207 : vector<8x96xf32>
    %209 = math.exp %208 : vector<8x96xf32>
    %cst_43 = arith.constant 1.000000e+00 : f32
    %210 = vector.broadcast %cst_43 : f32 to vector<8x96xf32>
    %211 = arith.addf %210, %209 : vector<8x96xf32>
    %212 = arith.divf %210, %211 : vector<8x96xf32>
    %213 = vector.extract_strided_slice %189 {offsets = [0, 96], sizes = [8, 32], strides = [1, 1]} : vector<8x128xf32> to vector<8x32xf32>
    %214 = math.tanh %213 : vector<8x32xf32>
    %215 = vector.extract_strided_slice %212 {offsets = [0, 32], sizes = [8, 32], strides = [1, 1]} : vector<8x96xf32> to vector<8x32xf32>
    %216 = vector.extract_strided_slice %174 {offsets = [0, 32], sizes = [8, 32], strides = [1, 1]} : vector<8x64xf32> to vector<8x32xf32>
    %217 = arith.mulf %215, %216 : vector<8x32xf32>
    %218 = vector.extract_strided_slice %212 {offsets = [0, 0], sizes = [8, 32], strides = [1, 1]} : vector<8x96xf32> to vector<8x32xf32>
    %219 = arith.mulf %218, %214 : vector<8x32xf32>
    %220 = arith.addf %217, %219 : vector<8x32xf32>
    %221 = vector.extract_strided_slice %212 {offsets = [0, 64], sizes = [8, 32], strides = [1, 1]} : vector<8x96xf32> to vector<8x32xf32>
    %222 = math.tanh %220 : vector<8x32xf32>
    %223 = arith.mulf %221, %222 : vector<8x32xf32>
    %224 = arith.index_cast %178 : i32 to index
    %c0_44 = arith.constant 0 : index
    %225 = vector.load %arg18[%224, %c0_44] : memref<64x64xf32, #tpu.memory_space<vmem>>, vector<8x32xf32>
    tpu.vector_store %arg18[%224, %c0_44], %206 {strides = array<i32>} : memref<64x64xf32, #tpu.memory_space<vmem>>, vector<8x32xf32>,
    %226 = arith.index_cast %181 : i32 to index
    %c32_45 = arith.constant 32 : index
    %227 = vector.load %arg18[%226, %c32_45] : memref<64x64xf32, #tpu.memory_space<vmem>>, vector<8x32xf32>
    tpu.vector_store %arg18[%226, %c32_45], %223 {strides = array<i32>} : memref<64x64xf32, #tpu.memory_space<vmem>>, vector<8x32xf32>,
    %228 = tpu.concatenate %206, %223 in 1 : vector<8x32xf32>, vector<8x32xf32> -> vector<8x64xf32>
    %229 = tpu.concatenate %203, %220 in 1 : vector<8x32xf32>, vector<8x32xf32> -> vector<8x64xf32>
    %c4_i32 = arith.constant 4 : i32
    %230 = arith.truncf %228 : vector<8x64xf32> to vector<8x64xbf16>
    %cst_46 = arith.constant dense<0.000000e+00> : vector<8x256xf32>
    %231 = tpu.matmul %230, %1, %cst_46 {dimension_numbers = #tpu.dot_dimension_numbers<[1], [0], [0], [1], [0, 0, 1, 1], [], []>} : vector<8x64xbf16>, vector<64x256xbf16>, vector<8x256xf32> -> vector<8x256xf32>
    %c8_i32_47 = arith.constant 8 : i32
    %232 = arith.muli %c4_i32, %c8_i32_47 : i32
    %233 = tpu.assume_multiple %232, 8 : i32
    %c7_i32_48 = arith.constant 7 : i32
    %234 = arith.subi %c7_i32_48, %c4_i32 : i32
    %c8_i32_49 = arith.constant 8 : i32
    %235 = arith.muli %234, %c8_i32_49 : i32
    %236 = tpu.assume_multiple %235, 8 : i32
    %237 = arith.index_cast %233 : i32 to index
    %c0_50 = arith.constant 0 : index
    %238 = vector.load %arg17[%237, %c0_50] : memref<64x256xf32, #tpu.memory_space<vmem>>, vector<8x128xf32>
    %239 = vector.extract_strided_slice %231 {offsets = [0, 0], sizes = [8, 128], strides = [1, 1]} : vector<8x256xf32> to vector<8x128xf32>
    %240 = arith.addf %238, %239 : vector<8x128xf32>
    %241 = arith.index_cast %236 : i32 to index
    %c128_51 = arith.constant 128 : index
    %242 = vector.load %arg17[%241, %c128_51] : memref<64x256xf32, #tpu.memory_space<vmem>>, vector<8x128xf32>
    %243 = vector.extract_strided_slice %231 {offsets = [0, 128], sizes = [8, 128], strides = [1, 1]} : vector<8x256xf32> to vector<8x128xf32>
    %244 = arith.addf %242, %243 : vector<8x128xf32>
    %245 = vector.extract_strided_slice %240 {offsets = [0, 0], sizes = [8, 96], strides = [1, 1]} : vector<8x128xf32> to vector<8x96xf32>
    %246 = arith.negf %245 : vector<8x96xf32>
    %247 = math.exp %246 : vector<8x96xf32>
    %cst_52 = arith.constant 1.000000e+00 : f32
    %248 = vector.broadcast %cst_52 : f32 to vector<8x96xf32>
    %249 = arith.addf %248, %247 : vector<8x96xf32>
    %250 = arith.divf %248, %249 : vector<8x96xf32>
    %251 = vector.extract_strided_slice %240 {offsets = [0, 96], sizes = [8, 32], strides = [1, 1]} : vector<8x128xf32> to vector<8x32xf32>
    %252 = math.tanh %251 : vector<8x32xf32>
    %253 = vector.extract_strided_slice %250 {offsets = [0, 32], sizes = [8, 32], strides = [1, 1]} : vector<8x96xf32> to vector<8x32xf32>
    %254 = vector.extract_strided_slice %229 {offsets = [0, 0], sizes = [8, 32], strides = [1, 1]} : vector<8x64xf32> to vector<8x32xf32>
    %255 = arith.mulf %253, %254 : vector<8x32xf32>
    %256 = vector.extract_strided_slice %250 {offsets = [0, 0], sizes = [8, 32], strides = [1, 1]} : vector<8x96xf32> to vector<8x32xf32>
    %257 = arith.mulf %256, %252 : vector<8x32xf32>
    %258 = arith.addf %255, %257 : vector<8x32xf32>
    %259 = vector.extract_strided_slice %250 {offsets = [0, 64], sizes = [8, 32], strides = [1, 1]} : vector<8x96xf32> to vector<8x32xf32>
    %260 = math.tanh %258 : vector<8x32xf32>
    %261 = arith.mulf %259, %260 : vector<8x32xf32>
    %262 = vector.extract_strided_slice %244 {offsets = [0, 0], sizes = [8, 96], strides = [1, 1]} : vector<8x128xf32> to vector<8x96xf32>
    %263 = arith.negf %262 : vector<8x96xf32>
    %264 = math.exp %263 : vector<8x96xf32>
    %cst_53 = arith.constant 1.000000e+00 : f32
    %265 = vector.broadcast %cst_53 : f32 to vector<8x96xf32>
    %266 = arith.addf %265, %264 : vector<8x96xf32>
    %267 = arith.divf %265, %266 : vector<8x96xf32>
    %268 = vector.extract_strided_slice %244 {offsets = [0, 96], sizes = [8, 32], strides = [1, 1]} : vector<8x128xf32> to vector<8x32xf32>
    %269 = math.tanh %268 : vector<8x32xf32>
    %270 = vector.extract_strided_slice %267 {offsets = [0, 32], sizes = [8, 32], strides = [1, 1]} : vector<8x96xf32> to vector<8x32xf32>
    %271 = vector.extract_strided_slice %229 {offsets = [0, 32], sizes = [8, 32], strides = [1, 1]} : vector<8x64xf32> to vector<8x32xf32>
    %272 = arith.mulf %270, %271 : vector<8x32xf32>
    %273 = vector.extract_strided_slice %267 {offsets = [0, 0], sizes = [8, 32], strides = [1, 1]} : vector<8x96xf32> to vector<8x32xf32>
    %274 = arith.mulf %273, %269 : vector<8x32xf32>
    %275 = arith.addf %272, %274 : vector<8x32xf32>
    %276 = vector.extract_strided_slice %267 {offsets = [0, 64], sizes = [8, 32], strides = [1, 1]} : vector<8x96xf32> to vector<8x32xf32>
    %277 = math.tanh %275 : vector<8x32xf32>
    %278 = arith.mulf %276, %277 : vector<8x32xf32>
    %279 = arith.index_cast %233 : i32 to index
    %c0_54 = arith.constant 0 : index
    %280 = vector.load %arg18[%279, %c0_54] : memref<64x64xf32, #tpu.memory_space<vmem>>, vector<8x32xf32>
    tpu.vector_store %arg18[%279, %c0_54], %261 {strides = array<i32>} : memref<64x64xf32, #tpu.memory_space<vmem>>, vector<8x32xf32>,
    %281 = arith.index_cast %236 : i32 to index
    %c32_55 = arith.constant 32 : index
    %282 = vector.load %arg18[%281, %c32_55] : memref<64x64xf32, #tpu.memory_space<vmem>>, vector<8x32xf32>
    tpu.vector_store %arg18[%281, %c32_55], %278 {strides = array<i32>} : memref<64x64xf32, #tpu.memory_space<vmem>>, vector<8x32xf32>,
    %283 = tpu.concatenate %261, %278 in 1 : vector<8x32xf32>, vector<8x32xf32> -> vector<8x64xf32>
    %284 = tpu.concatenate %258, %275 in 1 : vector<8x32xf32>, vector<8x32xf32> -> vector<8x64xf32>
    %c5_i32 = arith.constant 5 : i32
    %285 = arith.truncf %283 : vector<8x64xf32> to vector<8x64xbf16>
    %cst_56 = arith.constant dense<0.000000e+00> : vector<8x256xf32>
    %286 = tpu.matmul %285, %1, %cst_56 {dimension_numbers = #tpu.dot_dimension_numbers<[1], [0], [0], [1], [0, 0, 1, 1], [], []>} : vector<8x64xbf16>, vector<64x256xbf16>, vector<8x256xf32> -> vector<8x256xf32>
    %c8_i32_57 = arith.constant 8 : i32
    %287 = arith.muli %c5_i32, %c8_i32_57 : i32
    %288 = tpu.assume_multiple %287, 8 : i32
    %c7_i32_58 = arith.constant 7 : i32
    %289 = arith.subi %c7_i32_58, %c5_i32 : i32
    %c8_i32_59 = arith.constant 8 : i32
    %290 = arith.muli %289, %c8_i32_59 : i32
    %291 = tpu.assume_multiple %290, 8 : i32
    %292 = arith.index_cast %288 : i32 to index
    %c0_60 = arith.constant 0 : index
    %293 = vector.load %arg17[%292, %c0_60] : memref<64x256xf32, #tpu.memory_space<vmem>>, vector<8x128xf32>
    %294 = vector.extract_strided_slice %286 {offsets = [0, 0], sizes = [8, 128], strides = [1, 1]} : vector<8x256xf32> to vector<8x128xf32>
    %295 = arith.addf %293, %294 : vector<8x128xf32>
    %296 = arith.index_cast %291 : i32 to index
    %c128_61 = arith.constant 128 : index
    %297 = vector.load %arg17[%296, %c128_61] : memref<64x256xf32, #tpu.memory_space<vmem>>, vector<8x128xf32>
    %298 = vector.extract_strided_slice %286 {offsets = [0, 128], sizes = [8, 128], strides = [1, 1]} : vector<8x256xf32> to vector<8x128xf32>
    %299 = arith.addf %297, %298 : vector<8x128xf32>
    %300 = vector.extract_strided_slice %295 {offsets = [0, 0], sizes = [8, 96], strides = [1, 1]} : vector<8x128xf32> to vector<8x96xf32>
    %301 = arith.negf %300 : vector<8x96xf32>
    %302 = math.exp %301 : vector<8x96xf32>
    %cst_62 = arith.constant 1.000000e+00 : f32
    %303 = vector.broadcast %cst_62 : f32 to vector<8x96xf32>
    %304 = arith.addf %303, %302 : vector<8x96xf32>
    %305 = arith.divf %303, %304 : vector<8x96xf32>
    %306 = vector.extract_strided_slice %295 {offsets = [0, 96], sizes = [8, 32], strides = [1, 1]} : vector<8x128xf32> to vector<8x32xf32>
    %307 = math.tanh %306 : vector<8x32xf32>
    %308 = vector.extract_strided_slice %305 {offsets = [0, 32], sizes = [8, 32], strides = [1, 1]} : vector<8x96xf32> to vector<8x32xf32>
    %309 = vector.extract_strided_slice %284 {offsets = [0, 0], sizes = [8, 32], strides = [1, 1]} : vector<8x64xf32> to vector<8x32xf32>
    %310 = arith.mulf %308, %309 : vector<8x32xf32>
    %311 = vector.extract_strided_slice %305 {offsets = [0, 0], sizes = [8, 32], strides = [1, 1]} : vector<8x96xf32> to vector<8x32xf32>
    %312 = arith.mulf %311, %307 : vector<8x32xf32>
    %313 = arith.addf %310, %312 : vector<8x32xf32>
    %314 = vector.extract_strided_slice %305 {offsets = [0, 64], sizes = [8, 32], strides = [1, 1]} : vector<8x96xf32> to vector<8x32xf32>
    %315 = math.tanh %313 : vector<8x32xf32>
    %316 = arith.mulf %314, %315 : vector<8x32xf32>
    %317 = vector.extract_strided_slice %299 {offsets = [0, 0], sizes = [8, 96], strides = [1, 1]} : vector<8x128xf32> to vector<8x96xf32>
    %318 = arith.negf %317 : vector<8x96xf32>
    %319 = math.exp %318 : vector<8x96xf32>
    %cst_63 = arith.constant 1.000000e+00 : f32
    %320 = vector.broadcast %cst_63 : f32 to vector<8x96xf32>
    %321 = arith.addf %320, %319 : vector<8x96xf32>
    %322 = arith.divf %320, %321 : vector<8x96xf32>
    %323 = vector.extract_strided_slice %299 {offsets = [0, 96], sizes = [8, 32], strides = [1, 1]} : vector<8x128xf32> to vector<8x32xf32>
    %324 = math.tanh %323 : vector<8x32xf32>
    %325 = vector.extract_strided_slice %322 {offsets = [0, 32], sizes = [8, 32], strides = [1, 1]} : vector<8x96xf32> to vector<8x32xf32>
    %326 = vector.extract_strided_slice %284 {offsets = [0, 32], sizes = [8, 32], strides = [1, 1]} : vector<8x64xf32> to vector<8x32xf32>
    %327 = arith.mulf %325, %326 : vector<8x32xf32>
    %328 = vector.extract_strided_slice %322 {offsets = [0, 0], sizes = [8, 32], strides = [1, 1]} : vector<8x96xf32> to vector<8x32xf32>
    %329 = arith.mulf %328, %324 : vector<8x32xf32>
    %330 = arith.addf %327, %329 : vector<8x32xf32>
    %331 = vector.extract_strided_slice %322 {offsets = [0, 64], sizes = [8, 32], strides = [1, 1]} : vector<8x96xf32> to vector<8x32xf32>
    %332 = math.tanh %330 : vector<8x32xf32>
    %333 = arith.mulf %331, %332 : vector<8x32xf32>
    %334 = arith.index_cast %288 : i32 to index
    %c0_64 = arith.constant 0 : index
    %335 = vector.load %arg18[%334, %c0_64] : memref<64x64xf32, #tpu.memory_space<vmem>>, vector<8x32xf32>
    tpu.vector_store %arg18[%334, %c0_64], %316 {strides = array<i32>} : memref<64x64xf32, #tpu.memory_space<vmem>>, vector<8x32xf32>,
    %336 = arith.index_cast %291 : i32 to index
    %c32_65 = arith.constant 32 : index
    %337 = vector.load %arg18[%336, %c32_65] : memref<64x64xf32, #tpu.memory_space<vmem>>, vector<8x32xf32>
    tpu.vector_store %arg18[%336, %c32_65], %333 {strides = array<i32>} : memref<64x64xf32, #tpu.memory_space<vmem>>, vector<8x32xf32>,
    %338 = tpu.concatenate %316, %333 in 1 : vector<8x32xf32>, vector<8x32xf32> -> vector<8x64xf32>
    %339 = tpu.concatenate %313, %330 in 1 : vector<8x32xf32>, vector<8x32xf32> -> vector<8x64xf32>
    %c6_i32 = arith.constant 6 : i32
    %340 = arith.truncf %338 : vector<8x64xf32> to vector<8x64xbf16>
    %cst_66 = arith.constant dense<0.000000e+00> : vector<8x256xf32>
    %341 = tpu.matmul %340, %1, %cst_66 {dimension_numbers = #tpu.dot_dimension_numbers<[1], [0], [0], [1], [0, 0, 1, 1], [], []>} : vector<8x64xbf16>, vector<64x256xbf16>, vector<8x256xf32> -> vector<8x256xf32>
    %c8_i32_67 = arith.constant 8 : i32
    %342 = arith.muli %c6_i32, %c8_i32_67 : i32
    %343 = tpu.assume_multiple %342, 8 : i32
    %c7_i32_68 = arith.constant 7 : i32
    %344 = arith.subi %c7_i32_68, %c6_i32 : i32
    %c8_i32_69 = arith.constant 8 : i32
    %345 = arith.muli %344, %c8_i32_69 : i32
    %346 = tpu.assume_multiple %345, 8 : i32
    %347 = arith.index_cast %343 : i32 to index
    %c0_70 = arith.constant 0 : index
    %348 = vector.load %arg17[%347, %c0_70] : memref<64x256xf32, #tpu.memory_space<vmem>>, vector<8x128xf32>
    %349 = vector.extract_strided_slice %341 {offsets = [0, 0], sizes = [8, 128], strides = [1, 1]} : vector<8x256xf32> to vector<8x128xf32>
    %350 = arith.addf %348, %349 : vector<8x128xf32>
    %351 = arith.index_cast %346 : i32 to index
    %c128_71 = arith.constant 128 : index
    %352 = vector.load %arg17[%351, %c128_71] : memref<64x256xf32, #tpu.memory_space<vmem>>, vector<8x128xf32>
    %353 = vector.extract_strided_slice %341 {offsets = [0, 128], sizes = [8, 128], strides = [1, 1]} : vector<8x256xf32> to vector<8x128xf32>
    %354 = arith.addf %352, %353 : vector<8x128xf32>
    %355 = vector.extract_strided_slice %350 {offsets = [0, 0], sizes = [8, 96], strides = [1, 1]} : vector<8x128xf32> to vector<8x96xf32>
    %356 = arith.negf %355 : vector<8x96xf32>
    %357 = math.exp %356 : vector<8x96xf32>
    %cst_72 = arith.constant 1.000000e+00 : f32
    %358 = vector.broadcast %cst_72 : f32 to vector<8x96xf32>
    %359 = arith.addf %358, %357 : vector<8x96xf32>
    %360 = arith.divf %358, %359 : vector<8x96xf32>
    %361 = vector.extract_strided_slice %350 {offsets = [0, 96], sizes = [8, 32], strides = [1, 1]} : vector<8x128xf32> to vector<8x32xf32>
    %362 = math.tanh %361 : vector<8x32xf32>
    %363 = vector.extract_strided_slice %360 {offsets = [0, 32], sizes = [8, 32], strides = [1, 1]} : vector<8x96xf32> to vector<8x32xf32>
    %364 = vector.extract_strided_slice %339 {offsets = [0, 0], sizes = [8, 32], strides = [1, 1]} : vector<8x64xf32> to vector<8x32xf32>
    %365 = arith.mulf %363, %364 : vector<8x32xf32>
    %366 = vector.extract_strided_slice %360 {offsets = [0, 0], sizes = [8, 32], strides = [1, 1]} : vector<8x96xf32> to vector<8x32xf32>
    %367 = arith.mulf %366, %362 : vector<8x32xf32>
    %368 = arith.addf %365, %367 : vector<8x32xf32>
    %369 = vector.extract_strided_slice %360 {offsets = [0, 64], sizes = [8, 32], strides = [1, 1]} : vector<8x96xf32> to vector<8x32xf32>
    %370 = math.tanh %368 : vector<8x32xf32>
    %371 = arith.mulf %369, %370 : vector<8x32xf32>
    %372 = vector.extract_strided_slice %354 {offsets = [0, 0], sizes = [8, 96], strides = [1, 1]} : vector<8x128xf32> to vector<8x96xf32>
    %373 = arith.negf %372 : vector<8x96xf32>
    %374 = math.exp %373 : vector<8x96xf32>
    %cst_73 = arith.constant 1.000000e+00 : f32
    %375 = vector.broadcast %cst_73 : f32 to vector<8x96xf32>
    %376 = arith.addf %375, %374 : vector<8x96xf32>
    %377 = arith.divf %375, %376 : vector<8x96xf32>
    %378 = vector.extract_strided_slice %354 {offsets = [0, 96], sizes = [8, 32], strides = [1, 1]} : vector<8x128xf32> to vector<8x32xf32>
    %379 = math.tanh %378 : vector<8x32xf32>
    %380 = vector.extract_strided_slice %377 {offsets = [0, 32], sizes = [8, 32], strides = [1, 1]} : vector<8x96xf32> to vector<8x32xf32>
    %381 = vector.extract_strided_slice %339 {offsets = [0, 32], sizes = [8, 32], strides = [1, 1]} : vector<8x64xf32> to vector<8x32xf32>
    %382 = arith.mulf %380, %381 : vector<8x32xf32>
    %383 = vector.extract_strided_slice %377 {offsets = [0, 0], sizes = [8, 32], strides = [1, 1]} : vector<8x96xf32> to vector<8x32xf32>
    %384 = arith.mulf %383, %379 : vector<8x32xf32>
    %385 = arith.addf %382, %384 : vector<8x32xf32>
    %386 = vector.extract_strided_slice %377 {offsets = [0, 64], sizes = [8, 32], strides = [1, 1]} : vector<8x96xf32> to vector<8x32xf32>
    %387 = math.tanh %385 : vector<8x32xf32>
    %388 = arith.mulf %386, %387 : vector<8x32xf32>
    %389 = arith.index_cast %343 : i32 to index
    %c0_74 = arith.constant 0 : index
    %390 = vector.load %arg18[%389, %c0_74] : memref<64x64xf32, #tpu.memory_space<vmem>>, vector<8x32xf32>
    tpu.vector_store %arg18[%389, %c0_74], %371 {strides = array<i32>} : memref<64x64xf32, #tpu.memory_space<vmem>>, vector<8x32xf32>,
    %391 = arith.index_cast %346 : i32 to index
    %c32_75 = arith.constant 32 : index
    %392 = vector.load %arg18[%391, %c32_75] : memref<64x64xf32, #tpu.memory_space<vmem>>, vector<8x32xf32>
    tpu.vector_store %arg18[%391, %c32_75], %388 {strides = array<i32>} : memref<64x64xf32, #tpu.memory_space<vmem>>, vector<8x32xf32>,
    %393 = tpu.concatenate %371, %388 in 1 : vector<8x32xf32>, vector<8x32xf32> -> vector<8x64xf32>
    %394 = tpu.concatenate %368, %385 in 1 : vector<8x32xf32>, vector<8x32xf32> -> vector<8x64xf32>
    %c7_i32_76 = arith.constant 7 : i32
    %395 = arith.truncf %393 : vector<8x64xf32> to vector<8x64xbf16>
    %cst_77 = arith.constant dense<0.000000e+00> : vector<8x256xf32>
    %396 = tpu.matmul %395, %1, %cst_77 {dimension_numbers = #tpu.dot_dimension_numbers<[1], [0], [0], [1], [0, 0, 1, 1], [], []>} : vector<8x64xbf16>, vector<64x256xbf16>, vector<8x256xf32> -> vector<8x256xf32>
    %c8_i32_78 = arith.constant 8 : i32
    %397 = arith.muli %c7_i32_76, %c8_i32_78 : i32
    %398 = tpu.assume_multiple %397, 8 : i32
    %c7_i32_79 = arith.constant 7 : i32
    %399 = arith.subi %c7_i32_79, %c7_i32_76 : i32
    %c8_i32_80 = arith.constant 8 : i32
    %400 = arith.muli %399, %c8_i32_80 : i32
    %401 = tpu.assume_multiple %400, 8 : i32
    %402 = arith.index_cast %398 : i32 to index
    %c0_81 = arith.constant 0 : index
    %403 = vector.load %arg17[%402, %c0_81] : memref<64x256xf32, #tpu.memory_space<vmem>>, vector<8x128xf32>
    %404 = vector.extract_strided_slice %396 {offsets = [0, 0], sizes = [8, 128], strides = [1, 1]} : vector<8x256xf32> to vector<8x128xf32>
    %405 = arith.addf %403, %404 : vector<8x128xf32>
    %406 = arith.index_cast %401 : i32 to index
    %c128_82 = arith.constant 128 : index
    %407 = vector.load %arg17[%406, %c128_82] : memref<64x256xf32, #tpu.memory_space<vmem>>, vector<8x128xf32>
    %408 = vector.extract_strided_slice %396 {offsets = [0, 128], sizes = [8, 128], strides = [1, 1]} : vector<8x256xf32> to vector<8x128xf32>
    %409 = arith.addf %407, %408 : vector<8x128xf32>
    %410 = vector.extract_strided_slice %405 {offsets = [0, 0], sizes = [8, 96], strides = [1, 1]} : vector<8x128xf32> to vector<8x96xf32>
    %411 = arith.negf %410 : vector<8x96xf32>
    %412 = math.exp %411 : vector<8x96xf32>
    %cst_83 = arith.constant 1.000000e+00 : f32
    %413 = vector.broadcast %cst_83 : f32 to vector<8x96xf32>
    %414 = arith.addf %413, %412 : vector<8x96xf32>
    %415 = arith.divf %413, %414 : vector<8x96xf32>
    %416 = vector.extract_strided_slice %405 {offsets = [0, 96], sizes = [8, 32], strides = [1, 1]} : vector<8x128xf32> to vector<8x32xf32>
    %417 = math.tanh %416 : vector<8x32xf32>
    %418 = vector.extract_strided_slice %415 {offsets = [0, 32], sizes = [8, 32], strides = [1, 1]} : vector<8x96xf32> to vector<8x32xf32>
    %419 = vector.extract_strided_slice %394 {offsets = [0, 0], sizes = [8, 32], strides = [1, 1]} : vector<8x64xf32> to vector<8x32xf32>
    %420 = arith.mulf %418, %419 : vector<8x32xf32>
    %421 = vector.extract_strided_slice %415 {offsets = [0, 0], sizes = [8, 32], strides = [1, 1]} : vector<8x96xf32> to vector<8x32xf32>
    %422 = arith.mulf %421, %417 : vector<8x32xf32>
    %423 = arith.addf %420, %422 : vector<8x32xf32>
    %424 = vector.extract_strided_slice %415 {offsets = [0, 64], sizes = [8, 32], strides = [1, 1]} : vector<8x96xf32> to vector<8x32xf32>
    %425 = math.tanh %423 : vector<8x32xf32>
    %426 = arith.mulf %424, %425 : vector<8x32xf32>
    %427 = vector.extract_strided_slice %409 {offsets = [0, 0], sizes = [8, 96], strides = [1, 1]} : vector<8x128xf32> to vector<8x96xf32>
    %428 = arith.negf %427 : vector<8x96xf32>
    %429 = math.exp %428 : vector<8x96xf32>
    %cst_84 = arith.constant 1.000000e+00 : f32
    %430 = vector.broadcast %cst_84 : f32 to vector<8x96xf32>
    %431 = arith.addf %430, %429 : vector<8x96xf32>
    %432 = arith.divf %430, %431 : vector<8x96xf32>
    %433 = vector.extract_strided_slice %409 {offsets = [0, 96], sizes = [8, 32], strides = [1, 1]} : vector<8x128xf32> to vector<8x32xf32>
    %434 = math.tanh %433 : vector<8x32xf32>
    %435 = vector.extract_strided_slice %432 {offsets = [0, 32], sizes = [8, 32], strides = [1, 1]} : vector<8x96xf32> to vector<8x32xf32>
    %436 = vector.extract_strided_slice %394 {offsets = [0, 32], sizes = [8, 32], strides = [1, 1]} : vector<8x64xf32> to vector<8x32xf32>
    %437 = arith.mulf %435, %436 : vector<8x32xf32>
    %438 = vector.extract_strided_slice %432 {offsets = [0, 0], sizes = [8, 32], strides = [1, 1]} : vector<8x96xf32> to vector<8x32xf32>
    %439 = arith.mulf %438, %434 : vector<8x32xf32>
    %440 = arith.addf %437, %439 : vector<8x32xf32>
    %441 = vector.extract_strided_slice %432 {offsets = [0, 64], sizes = [8, 32], strides = [1, 1]} : vector<8x96xf32> to vector<8x32xf32>
    %442 = math.tanh %440 : vector<8x32xf32>
    %443 = arith.mulf %441, %442 : vector<8x32xf32>
    %444 = arith.index_cast %398 : i32 to index
    %c0_85 = arith.constant 0 : index
    %445 = vector.load %arg18[%444, %c0_85] : memref<64x64xf32, #tpu.memory_space<vmem>>, vector<8x32xf32>
    tpu.vector_store %arg18[%444, %c0_85], %426 {strides = array<i32>} : memref<64x64xf32, #tpu.memory_space<vmem>>, vector<8x32xf32>,
    %446 = arith.index_cast %401 : i32 to index
    %c32_86 = arith.constant 32 : index
    %447 = vector.load %arg18[%446, %c32_86] : memref<64x64xf32, #tpu.memory_space<vmem>>, vector<8x32xf32>
    tpu.vector_store %arg18[%446, %c32_86], %443 {strides = array<i32>} : memref<64x64xf32, #tpu.memory_space<vmem>>, vector<8x32xf32>,
    %448 = tpu.concatenate %426, %443 in 1 : vector<8x32xf32>, vector<8x32xf32> -> vector<8x64xf32>
    %449 = tpu.concatenate %423, %440 in 1 : vector<8x32xf32>, vector<8x32xf32> -> vector<8x64xf32>
    %c8_i32_87 = arith.constant 8 : i32
    %c0_88 = arith.constant 0 : index
    %c0_89 = arith.constant 0 : index
    %450 = vector.load %arg4[%c0_88, %c0_89] : memref<64x256xbf16, #tpu.memory_space<vmem>>, vector<64x256xbf16>
    %c0_90 = arith.constant 0 : index
    %c0_91 = arith.constant 0 : index
    %451 = vector.load %arg5[%c0_90, %c0_91] : memref<64x256xbf16, #tpu.memory_space<vmem>>, vector<64x256xbf16>
    %c0_92 = arith.constant 0 : index
    %c0_93 = arith.constant 0 : index
    %452 = vector.load %arg6[%c0_92, %c0_93] : memref<1x256xf32, #tpu.memory_space<vmem>>, vector<1x256xf32>
    %c0_94 = arith.constant 0 : index
    %c0_95 = arith.constant 0 : index
    %453 = vector.load %arg18[%c0_94, %c0_95] : memref<64x64xf32, #tpu.memory_space<vmem>>, vector<64x64xf32>
    %454 = arith.truncf %453 : vector<64x64xf32> to vector<64x64xbf16>
    %cst_96 = arith.constant dense<0.000000e+00> : vector<64x256xf32>
    %455 = tpu.matmul %454, %450, %cst_96 {dimension_numbers = #tpu.dot_dimension_numbers<[1], [0], [0], [1], [0, 0, 1, 1], [], []>} : vector<64x64xbf16>, vector<64x256xbf16>, vector<64x256xf32> -> vector<64x256xf32>
    %456 = vector.broadcast %452 : vector<1x256xf32> to vector<64x256xf32>
    %457 = arith.addf %455, %456 : vector<64x256xf32>
    %c0_97 = arith.constant 0 : index
    %c0_98 = arith.constant 0 : index
    %458 = vector.load %arg17[%c0_97, %c0_98] : memref<64x256xf32, #tpu.memory_space<vmem>>, vector<64x256xf32>
    tpu.vector_store %arg17[%c0_97, %c0_98], %457 {strides = array<i32>} : memref<64x256xf32, #tpu.memory_space<vmem>>, vector<64x256xf32>,
    %cst_99 = arith.constant 0.000000e+00 : f32
    %459 = vector.broadcast %cst_99 : f32 to vector<8x64xf32>
    %c0_i32_100 = arith.constant 0 : i32
    %460 = arith.truncf %459 : vector<8x64xf32> to vector<8x64xbf16>
    %cst_101 = arith.constant dense<0.000000e+00> : vector<8x256xf32>
    %461 = tpu.matmul %460, %451, %cst_101 {dimension_numbers = #tpu.dot_dimension_numbers<[1], [0], [0], [1], [0, 0, 1, 1], [], []>} : vector<8x64xbf16>, vector<64x256xbf16>, vector<8x256xf32> -> vector<8x256xf32>
    %c8_i32_102 = arith.constant 8 : i32
    %462 = arith.muli %c0_i32_100, %c8_i32_102 : i32
    %463 = tpu.assume_multiple %462, 8 : i32
    %c7_i32_103 = arith.constant 7 : i32
    %464 = arith.subi %c7_i32_103, %c0_i32_100 : i32
    %c8_i32_104 = arith.constant 8 : i32
    %465 = arith.muli %464, %c8_i32_104 : i32
    %466 = tpu.assume_multiple %465, 8 : i32
    %467 = arith.index_cast %463 : i32 to index
    %c0_105 = arith.constant 0 : index
    %468 = vector.load %arg17[%467, %c0_105] : memref<64x256xf32, #tpu.memory_space<vmem>>, vector<8x128xf32>
    %469 = vector.extract_strided_slice %461 {offsets = [0, 0], sizes = [8, 128], strides = [1, 1]} : vector<8x256xf32> to vector<8x128xf32>
    %470 = arith.addf %468, %469 : vector<8x128xf32>
    %471 = arith.index_cast %466 : i32 to index
    %c128_106 = arith.constant 128 : index
    %472 = vector.load %arg17[%471, %c128_106] : memref<64x256xf32, #tpu.memory_space<vmem>>, vector<8x128xf32>
    %473 = vector.extract_strided_slice %461 {offsets = [0, 128], sizes = [8, 128], strides = [1, 1]} : vector<8x256xf32> to vector<8x128xf32>
    %474 = arith.addf %472, %473 : vector<8x128xf32>
    %475 = vector.extract_strided_slice %470 {offsets = [0, 0], sizes = [8, 96], strides = [1, 1]} : vector<8x128xf32> to vector<8x96xf32>
    %476 = arith.negf %475 : vector<8x96xf32>
    %477 = math.exp %476 : vector<8x96xf32>
    %cst_107 = arith.constant 1.000000e+00 : f32
    %478 = vector.broadcast %cst_107 : f32 to vector<8x96xf32>
    %479 = arith.addf %478, %477 : vector<8x96xf32>
    %480 = arith.divf %478, %479 : vector<8x96xf32>
    %481 = vector.extract_strided_slice %470 {offsets = [0, 96], sizes = [8, 32], strides = [1, 1]} : vector<8x128xf32> to vector<8x32xf32>
    %482 = math.tanh %481 : vector<8x32xf32>
    %483 = vector.extract_strided_slice %480 {offsets = [0, 32], sizes = [8, 32], strides = [1, 1]} : vector<8x96xf32> to vector<8x32xf32>
    %484 = vector.extract_strided_slice %459 {offsets = [0, 0], sizes = [8, 32], strides = [1, 1]} : vector<8x64xf32> to vector<8x32xf32>
    %485 = arith.mulf %483, %484 : vector<8x32xf32>
    %486 = vector.extract_strided_slice %480 {offsets = [0, 0], sizes = [8, 32], strides = [1, 1]} : vector<8x96xf32> to vector<8x32xf32>
    %487 = arith.mulf %486, %482 : vector<8x32xf32>
    %488 = arith.addf %485, %487 : vector<8x32xf32>
    %489 = vector.extract_strided_slice %480 {offsets = [0, 64], sizes = [8, 32], strides = [1, 1]} : vector<8x96xf32> to vector<8x32xf32>
    %490 = math.tanh %488 : vector<8x32xf32>
    %491 = arith.mulf %489, %490 : vector<8x32xf32>
    %492 = vector.extract_strided_slice %474 {offsets = [0, 0], sizes = [8, 96], strides = [1, 1]} : vector<8x128xf32> to vector<8x96xf32>
    %493 = arith.negf %492 : vector<8x96xf32>
    %494 = math.exp %493 : vector<8x96xf32>
    %cst_108 = arith.constant 1.000000e+00 : f32
    %495 = vector.broadcast %cst_108 : f32 to vector<8x96xf32>
    %496 = arith.addf %495, %494 : vector<8x96xf32>
    %497 = arith.divf %495, %496 : vector<8x96xf32>
    %498 = vector.extract_strided_slice %474 {offsets = [0, 96], sizes = [8, 32], strides = [1, 1]} : vector<8x128xf32> to vector<8x32xf32>
    %499 = math.tanh %498 : vector<8x32xf32>
    %500 = vector.extract_strided_slice %497 {offsets = [0, 32], sizes = [8, 32], strides = [1, 1]} : vector<8x96xf32> to vector<8x32xf32>
    %501 = vector.extract_strided_slice %459 {offsets = [0, 32], sizes = [8, 32], strides = [1, 1]} : vector<8x64xf32> to vector<8x32xf32>
    %502 = arith.mulf %500, %501 : vector<8x32xf32>
    %503 = vector.extract_strided_slice %497 {offsets = [0, 0], sizes = [8, 32], strides = [1, 1]} : vector<8x96xf32> to vector<8x32xf32>
    %504 = arith.mulf %503, %499 : vector<8x32xf32>
    %505 = arith.addf %502, %504 : vector<8x32xf32>
    %506 = vector.extract_strided_slice %497 {offsets = [0, 64], sizes = [8, 32], strides = [1, 1]} : vector<8x96xf32> to vector<8x32xf32>
    %507 = math.tanh %505 : vector<8x32xf32>
    %508 = arith.mulf %506, %507 : vector<8x32xf32>
    %509 = arith.index_cast %463 : i32 to index
    %c0_109 = arith.constant 0 : index
    %510 = vector.load %arg18[%509, %c0_109] : memref<64x64xf32, #tpu.memory_space<vmem>>, vector<8x32xf32>
    tpu.vector_store %arg18[%509, %c0_109], %491 {strides = array<i32>} : memref<64x64xf32, #tpu.memory_space<vmem>>, vector<8x32xf32>,
    %511 = arith.index_cast %466 : i32 to index
    %c32_110 = arith.constant 32 : index
    %512 = vector.load %arg18[%511, %c32_110] : memref<64x64xf32, #tpu.memory_space<vmem>>, vector<8x32xf32>
    tpu.vector_store %arg18[%511, %c32_110], %508 {strides = array<i32>} : memref<64x64xf32, #tpu.memory_space<vmem>>, vector<8x32xf32>,
    %513 = tpu.concatenate %491, %508 in 1 : vector<8x32xf32>, vector<8x32xf32> -> vector<8x64xf32>
    %514 = tpu.concatenate %488, %505 in 1 : vector<8x32xf32>, vector<8x32xf32> -> vector<8x64xf32>
    %c1_i32_111 = arith.constant 1 : i32
    %515 = arith.truncf %513 : vector<8x64xf32> to vector<8x64xbf16>
    %cst_112 = arith.constant dense<0.000000e+00> : vector<8x256xf32>
    %516 = tpu.matmul %515, %451, %cst_112 {dimension_numbers = #tpu.dot_dimension_numbers<[1], [0], [0], [1], [0, 0, 1, 1], [], []>} : vector<8x64xbf16>, vector<64x256xbf16>, vector<8x256xf32> -> vector<8x256xf32>
    %c8_i32_113 = arith.constant 8 : i32
    %517 = arith.muli %c1_i32_111, %c8_i32_113 : i32
    %518 = tpu.assume_multiple %517, 8 : i32
    %c7_i32_114 = arith.constant 7 : i32
    %519 = arith.subi %c7_i32_114, %c1_i32_111 : i32
    %c8_i32_115 = arith.constant 8 : i32
    %520 = arith.muli %519, %c8_i32_115 : i32
    %521 = tpu.assume_multiple %520, 8 : i32
    %522 = arith.index_cast %518 : i32 to index
    %c0_116 = arith.constant 0 : index
    %523 = vector.load %arg17[%522, %c0_116] : memref<64x256xf32, #tpu.memory_space<vmem>>, vector<8x128xf32>
    %524 = vector.extract_strided_slice %516 {offsets = [0, 0], sizes = [8, 128], strides = [1, 1]} : vector<8x256xf32> to vector<8x128xf32>
    %525 = arith.addf %523, %524 : vector<8x128xf32>
    %526 = arith.index_cast %521 : i32 to index
    %c128_117 = arith.constant 128 : index
    %527 = vector.load %arg17[%526, %c128_117] : memref<64x256xf32, #tpu.memory_space<vmem>>, vector<8x128xf32>
    %528 = vector.extract_strided_slice %516 {offsets = [0, 128], sizes = [8, 128], strides = [1, 1]} : vector<8x256xf32> to vector<8x128xf32>
    %529 = arith.addf %527, %528 : vector<8x128xf32>
    %530 = vector.extract_strided_slice %525 {offsets = [0, 0], sizes = [8, 96], strides = [1, 1]} : vector<8x128xf32> to vector<8x96xf32>
    %531 = arith.negf %530 : vector<8x96xf32>
    %532 = math.exp %531 : vector<8x96xf32>
    %cst_118 = arith.constant 1.000000e+00 : f32
    %533 = vector.broadcast %cst_118 : f32 to vector<8x96xf32>
    %534 = arith.addf %533, %532 : vector<8x96xf32>
    %535 = arith.divf %533, %534 : vector<8x96xf32>
    %536 = vector.extract_strided_slice %525 {offsets = [0, 96], sizes = [8, 32], strides = [1, 1]} : vector<8x128xf32> to vector<8x32xf32>
    %537 = math.tanh %536 : vector<8x32xf32>
    %538 = vector.extract_strided_slice %535 {offsets = [0, 32], sizes = [8, 32], strides = [1, 1]} : vector<8x96xf32> to vector<8x32xf32>
    %539 = vector.extract_strided_slice %514 {offsets = [0, 0], sizes = [8, 32], strides = [1, 1]} : vector<8x64xf32> to vector<8x32xf32>
    %540 = arith.mulf %538, %539 : vector<8x32xf32>
    %541 = vector.extract_strided_slice %535 {offsets = [0, 0], sizes = [8, 32], strides = [1, 1]} : vector<8x96xf32> to vector<8x32xf32>
    %542 = arith.mulf %541, %537 : vector<8x32xf32>
    %543 = arith.addf %540, %542 : vector<8x32xf32>
    %544 = vector.extract_strided_slice %535 {offsets = [0, 64], sizes = [8, 32], strides = [1, 1]} : vector<8x96xf32> to vector<8x32xf32>
    %545 = math.tanh %543 : vector<8x32xf32>
    %546 = arith.mulf %544, %545 : vector<8x32xf32>
    %547 = vector.extract_strided_slice %529 {offsets = [0, 0], sizes = [8, 96], strides = [1, 1]} : vector<8x128xf32> to vector<8x96xf32>
    %548 = arith.negf %547 : vector<8x96xf32>
    %549 = math.exp %548 : vector<8x96xf32>
    %cst_119 = arith.constant 1.000000e+00 : f32
    %550 = vector.broadcast %cst_119 : f32 to vector<8x96xf32>
    %551 = arith.addf %550, %549 : vector<8x96xf32>
    %552 = arith.divf %550, %551 : vector<8x96xf32>
    %553 = vector.extract_strided_slice %529 {offsets = [0, 96], sizes = [8, 32], strides = [1, 1]} : vector<8x128xf32> to vector<8x32xf32>
    %554 = math.tanh %553 : vector<8x32xf32>
    %555 = vector.extract_strided_slice %552 {offsets = [0, 32], sizes = [8, 32], strides = [1, 1]} : vector<8x96xf32> to vector<8x32xf32>
    %556 = vector.extract_strided_slice %514 {offsets = [0, 32], sizes = [8, 32], strides = [1, 1]} : vector<8x64xf32> to vector<8x32xf32>
    %557 = arith.mulf %555, %556 : vector<8x32xf32>
    %558 = vector.extract_strided_slice %552 {offsets = [0, 0], sizes = [8, 32], strides = [1, 1]} : vector<8x96xf32> to vector<8x32xf32>
    %559 = arith.mulf %558, %554 : vector<8x32xf32>
    %560 = arith.addf %557, %559 : vector<8x32xf32>
    %561 = vector.extract_strided_slice %552 {offsets = [0, 64], sizes = [8, 32], strides = [1, 1]} : vector<8x96xf32> to vector<8x32xf32>
    %562 = math.tanh %560 : vector<8x32xf32>
    %563 = arith.mulf %561, %562 : vector<8x32xf32>
    %564 = arith.index_cast %518 : i32 to index
    %c0_120 = arith.constant 0 : index
    %565 = vector.load %arg18[%564, %c0_120] : memref<64x64xf32, #tpu.memory_space<vmem>>, vector<8x32xf32>
    tpu.vector_store %arg18[%564, %c0_120], %546 {strides = array<i32>} : memref<64x64xf32, #tpu.memory_space<vmem>>, vector<8x32xf32>,
    %566 = arith.index_cast %521 : i32 to index
    %c32_121 = arith.constant 32 : index
    %567 = vector.load %arg18[%566, %c32_121] : memref<64x64xf32, #tpu.memory_space<vmem>>, vector<8x32xf32>
    tpu.vector_store %arg18[%566, %c32_121], %563 {strides = array<i32>} : memref<64x64xf32, #tpu.memory_space<vmem>>, vector<8x32xf32>,
    %568 = tpu.concatenate %546, %563 in 1 : vector<8x32xf32>, vector<8x32xf32> -> vector<8x64xf32>
    %569 = tpu.concatenate %543, %560 in 1 : vector<8x32xf32>, vector<8x32xf32> -> vector<8x64xf32>
    %c2_i32_122 = arith.constant 2 : i32
    %570 = arith.truncf %568 : vector<8x64xf32> to vector<8x64xbf16>
    %cst_123 = arith.constant dense<0.000000e+00> : vector<8x256xf32>
    %571 = tpu.matmul %570, %451, %cst_123 {dimension_numbers = #tpu.dot_dimension_numbers<[1], [0], [0], [1], [0, 0, 1, 1], [], []>} : vector<8x64xbf16>, vector<64x256xbf16>, vector<8x256xf32> -> vector<8x256xf32>
    %c8_i32_124 = arith.constant 8 : i32
    %572 = arith.muli %c2_i32_122, %c8_i32_124 : i32
    %573 = tpu.assume_multiple %572, 8 : i32
    %c7_i32_125 = arith.constant 7 : i32
    %574 = arith.subi %c7_i32_125, %c2_i32_122 : i32
    %c8_i32_126 = arith.constant 8 : i32
    %575 = arith.muli %574, %c8_i32_126 : i32
    %576 = tpu.assume_multiple %575, 8 : i32
    %577 = arith.index_cast %573 : i32 to index
    %c0_127 = arith.constant 0 : index
    %578 = vector.load %arg17[%577, %c0_127] : memref<64x256xf32, #tpu.memory_space<vmem>>, vector<8x128xf32>
    %579 = vector.extract_strided_slice %571 {offsets = [0, 0], sizes = [8, 128], strides = [1, 1]} : vector<8x256xf32> to vector<8x128xf32>
    %580 = arith.addf %578, %579 : vector<8x128xf32>
    %581 = arith.index_cast %576 : i32 to index
    %c128_128 = arith.constant 128 : index
    %582 = vector.load %arg17[%581, %c128_128] : memref<64x256xf32, #tpu.memory_space<vmem>>, vector<8x128xf32>
    %583 = vector.extract_strided_slice %571 {offsets = [0, 128], sizes = [8, 128], strides = [1, 1]} : vector<8x256xf32> to vector<8x128xf32>
    %584 = arith.addf %582, %583 : vector<8x128xf32>
    %585 = vector.extract_strided_slice %580 {offsets = [0, 0], sizes = [8, 96], strides = [1, 1]} : vector<8x128xf32> to vector<8x96xf32>
    %586 = arith.negf %585 : vector<8x96xf32>
    %587 = math.exp %586 : vector<8x96xf32>
    %cst_129 = arith.constant 1.000000e+00 : f32
    %588 = vector.broadcast %cst_129 : f32 to vector<8x96xf32>
    %589 = arith.addf %588, %587 : vector<8x96xf32>
    %590 = arith.divf %588, %589 : vector<8x96xf32>
    %591 = vector.extract_strided_slice %580 {offsets = [0, 96], sizes = [8, 32], strides = [1, 1]} : vector<8x128xf32> to vector<8x32xf32>
    %592 = math.tanh %591 : vector<8x32xf32>
    %593 = vector.extract_strided_slice %590 {offsets = [0, 32], sizes = [8, 32], strides = [1, 1]} : vector<8x96xf32> to vector<8x32xf32>
    %594 = vector.extract_strided_slice %569 {offsets = [0, 0], sizes = [8, 32], strides = [1, 1]} : vector<8x64xf32> to vector<8x32xf32>
    %595 = arith.mulf %593, %594 : vector<8x32xf32>
    %596 = vector.extract_strided_slice %590 {offsets = [0, 0], sizes = [8, 32], strides = [1, 1]} : vector<8x96xf32> to vector<8x32xf32>
    %597 = arith.mulf %596, %592 : vector<8x32xf32>
    %598 = arith.addf %595, %597 : vector<8x32xf32>
    %599 = vector.extract_strided_slice %590 {offsets = [0, 64], sizes = [8, 32], strides = [1, 1]} : vector<8x96xf32> to vector<8x32xf32>
    %600 = math.tanh %598 : vector<8x32xf32>
    %601 = arith.mulf %599, %600 : vector<8x32xf32>
    %602 = vector.extract_strided_slice %584 {offsets = [0, 0], sizes = [8, 96], strides = [1, 1]} : vector<8x128xf32> to vector<8x96xf32>
    %603 = arith.negf %602 : vector<8x96xf32>
    %604 = math.exp %603 : vector<8x96xf32>
    %cst_130 = arith.constant 1.000000e+00 : f32
    %605 = vector.broadcast %cst_130 : f32 to vector<8x96xf32>
    %606 = arith.addf %605, %604 : vector<8x96xf32>
    %607 = arith.divf %605, %606 : vector<8x96xf32>
    %608 = vector.extract_strided_slice %584 {offsets = [0, 96], sizes = [8, 32], strides = [1, 1]} : vector<8x128xf32> to vector<8x32xf32>
    %609 = math.tanh %608 : vector<8x32xf32>
    %610 = vector.extract_strided_slice %607 {offsets = [0, 32], sizes = [8, 32], strides = [1, 1]} : vector<8x96xf32> to vector<8x32xf32>
    %611 = vector.extract_strided_slice %569 {offsets = [0, 32], sizes = [8, 32], strides = [1, 1]} : vector<8x64xf32> to vector<8x32xf32>
    %612 = arith.mulf %610, %611 : vector<8x32xf32>
    %613 = vector.extract_strided_slice %607 {offsets = [0, 0], sizes = [8, 32], strides = [1, 1]} : vector<8x96xf32> to vector<8x32xf32>
    %614 = arith.mulf %613, %609 : vector<8x32xf32>
    %615 = arith.addf %612, %614 : vector<8x32xf32>
    %616 = vector.extract_strided_slice %607 {offsets = [0, 64], sizes = [8, 32], strides = [1, 1]} : vector<8x96xf32> to vector<8x32xf32>
    %617 = math.tanh %615 : vector<8x32xf32>
    %618 = arith.mulf %616, %617 : vector<8x32xf32>
    %619 = arith.index_cast %573 : i32 to index
    %c0_131 = arith.constant 0 : index
    %620 = vector.load %arg18[%619, %c0_131] : memref<64x64xf32, #tpu.memory_space<vmem>>, vector<8x32xf32>
    tpu.vector_store %arg18[%619, %c0_131], %601 {strides = array<i32>} : memref<64x64xf32, #tpu.memory_space<vmem>>, vector<8x32xf32>,
    %621 = arith.index_cast %576 : i32 to index
    %c32_132 = arith.constant 32 : index
    %622 = vector.load %arg18[%621, %c32_132] : memref<64x64xf32, #tpu.memory_space<vmem>>, vector<8x32xf32>
    tpu.vector_store %arg18[%621, %c32_132], %618 {strides = array<i32>} : memref<64x64xf32, #tpu.memory_space<vmem>>, vector<8x32xf32>,
    %623 = tpu.concatenate %601, %618 in 1 : vector<8x32xf32>, vector<8x32xf32> -> vector<8x64xf32>
    %624 = tpu.concatenate %598, %615 in 1 : vector<8x32xf32>, vector<8x32xf32> -> vector<8x64xf32>
    %c3_i32_133 = arith.constant 3 : i32
    %625 = arith.truncf %623 : vector<8x64xf32> to vector<8x64xbf16>
    %cst_134 = arith.constant dense<0.000000e+00> : vector<8x256xf32>
    %626 = tpu.matmul %625, %451, %cst_134 {dimension_numbers = #tpu.dot_dimension_numbers<[1], [0], [0], [1], [0, 0, 1, 1], [], []>} : vector<8x64xbf16>, vector<64x256xbf16>, vector<8x256xf32> -> vector<8x256xf32>
    %c8_i32_135 = arith.constant 8 : i32
    %627 = arith.muli %c3_i32_133, %c8_i32_135 : i32
    %628 = tpu.assume_multiple %627, 8 : i32
    %c7_i32_136 = arith.constant 7 : i32
    %629 = arith.subi %c7_i32_136, %c3_i32_133 : i32
    %c8_i32_137 = arith.constant 8 : i32
    %630 = arith.muli %629, %c8_i32_137 : i32
    %631 = tpu.assume_multiple %630, 8 : i32
    %632 = arith.index_cast %628 : i32 to index
    %c0_138 = arith.constant 0 : index
    %633 = vector.load %arg17[%632, %c0_138] : memref<64x256xf32, #tpu.memory_space<vmem>>, vector<8x128xf32>
    %634 = vector.extract_strided_slice %626 {offsets = [0, 0], sizes = [8, 128], strides = [1, 1]} : vector<8x256xf32> to vector<8x128xf32>
    %635 = arith.addf %633, %634 : vector<8x128xf32>
    %636 = arith.index_cast %631 : i32 to index
    %c128_139 = arith.constant 128 : index
    %637 = vector.load %arg17[%636, %c128_139] : memref<64x256xf32, #tpu.memory_space<vmem>>, vector<8x128xf32>
    %638 = vector.extract_strided_slice %626 {offsets = [0, 128], sizes = [8, 128], strides = [1, 1]} : vector<8x256xf32> to vector<8x128xf32>
    %639 = arith.addf %637, %638 : vector<8x128xf32>
    %640 = vector.extract_strided_slice %635 {offsets = [0, 0], sizes = [8, 96], strides = [1, 1]} : vector<8x128xf32> to vector<8x96xf32>
    %641 = arith.negf %640 : vector<8x96xf32>
    %642 = math.exp %641 : vector<8x96xf32>
    %cst_140 = arith.constant 1.000000e+00 : f32
    %643 = vector.broadcast %cst_140 : f32 to vector<8x96xf32>
    %644 = arith.addf %643, %642 : vector<8x96xf32>
    %645 = arith.divf %643, %644 : vector<8x96xf32>
    %646 = vector.extract_strided_slice %635 {offsets = [0, 96], sizes = [8, 32], strides = [1, 1]} : vector<8x128xf32> to vector<8x32xf32>
    %647 = math.tanh %646 : vector<8x32xf32>
    %648 = vector.extract_strided_slice %645 {offsets = [0, 32], sizes = [8, 32], strides = [1, 1]} : vector<8x96xf32> to vector<8x32xf32>
    %649 = vector.extract_strided_slice %624 {offsets = [0, 0], sizes = [8, 32], strides = [1, 1]} : vector<8x64xf32> to vector<8x32xf32>
    %650 = arith.mulf %648, %649 : vector<8x32xf32>
    %651 = vector.extract_strided_slice %645 {offsets = [0, 0], sizes = [8, 32], strides = [1, 1]} : vector<8x96xf32> to vector<8x32xf32>
    %652 = arith.mulf %651, %647 : vector<8x32xf32>
    %653 = arith.addf %650, %652 : vector<8x32xf32>
    %654 = vector.extract_strided_slice %645 {offsets = [0, 64], sizes = [8, 32], strides = [1, 1]} : vector<8x96xf32> to vector<8x32xf32>
    %655 = math.tanh %653 : vector<8x32xf32>
    %656 = arith.mulf %654, %655 : vector<8x32xf32>
    %657 = vector.extract_strided_slice %639 {offsets = [0, 0], sizes = [8, 96], strides = [1, 1]} : vector<8x128xf32> to vector<8x96xf32>
    %658 = arith.negf %657 : vector<8x96xf32>
    %659 = math.exp %658 : vector<8x96xf32>
    %cst_141 = arith.constant 1.000000e+00 : f32
    %660 = vector.broadcast %cst_141 : f32 to vector<8x96xf32>
    %661 = arith.addf %660, %659 : vector<8x96xf32>
    %662 = arith.divf %660, %661 : vector<8x96xf32>
    %663 = vector.extract_strided_slice %639 {offsets = [0, 96], sizes = [8, 32], strides = [1, 1]} : vector<8x128xf32> to vector<8x32xf32>
    %664 = math.tanh %663 : vector<8x32xf32>
    %665 = vector.extract_strided_slice %662 {offsets = [0, 32], sizes = [8, 32], strides = [1, 1]} : vector<8x96xf32> to vector<8x32xf32>
    %666 = vector.extract_strided_slice %624 {offsets = [0, 32], sizes = [8, 32], strides = [1, 1]} : vector<8x64xf32> to vector<8x32xf32>
    %667 = arith.mulf %665, %666 : vector<8x32xf32>
    %668 = vector.extract_strided_slice %662 {offsets = [0, 0], sizes = [8, 32], strides = [1, 1]} : vector<8x96xf32> to vector<8x32xf32>
    %669 = arith.mulf %668, %664 : vector<8x32xf32>
    %670 = arith.addf %667, %669 : vector<8x32xf32>
    %671 = vector.extract_strided_slice %662 {offsets = [0, 64], sizes = [8, 32], strides = [1, 1]} : vector<8x96xf32> to vector<8x32xf32>
    %672 = math.tanh %670 : vector<8x32xf32>
    %673 = arith.mulf %671, %672 : vector<8x32xf32>
    %674 = arith.index_cast %628 : i32 to index
    %c0_142 = arith.constant 0 : index
    %675 = vector.load %arg18[%674, %c0_142] : memref<64x64xf32, #tpu.memory_space<vmem>>, vector<8x32xf32>
    tpu.vector_store %arg18[%674, %c0_142], %656 {strides = array<i32>} : memref<64x64xf32, #tpu.memory_space<vmem>>, vector<8x32xf32>,
    %676 = arith.index_cast %631 : i32 to index
    %c32_143 = arith.constant 32 : index
    %677 = vector.load %arg18[%676, %c32_143] : memref<64x64xf32, #tpu.memory_space<vmem>>, vector<8x32xf32>
    tpu.vector_store %arg18[%676, %c32_143], %673 {strides = array<i32>} : memref<64x64xf32, #tpu.memory_space<vmem>>, vector<8x32xf32>,
    %678 = tpu.concatenate %656, %673 in 1 : vector<8x32xf32>, vector<8x32xf32> -> vector<8x64xf32>
    %679 = tpu.concatenate %653, %670 in 1 : vector<8x32xf32>, vector<8x32xf32> -> vector<8x64xf32>
    %c4_i32_144 = arith.constant 4 : i32
    %680 = arith.truncf %678 : vector<8x64xf32> to vector<8x64xbf16>
    %cst_145 = arith.constant dense<0.000000e+00> : vector<8x256xf32>
    %681 = tpu.matmul %680, %451, %cst_145 {dimension_numbers = #tpu.dot_dimension_numbers<[1], [0], [0], [1], [0, 0, 1, 1], [], []>} : vector<8x64xbf16>, vector<64x256xbf16>, vector<8x256xf32> -> vector<8x256xf32>
    %c8_i32_146 = arith.constant 8 : i32
    %682 = arith.muli %c4_i32_144, %c8_i32_146 : i32
    %683 = tpu.assume_multiple %682, 8 : i32
    %c7_i32_147 = arith.constant 7 : i32
    %684 = arith.subi %c7_i32_147, %c4_i32_144 : i32
    %c8_i32_148 = arith.constant 8 : i32
    %685 = arith.muli %684, %c8_i32_148 : i32
    %686 = tpu.assume_multiple %685, 8 : i32
    %687 = arith.index_cast %683 : i32 to index
    %c0_149 = arith.constant 0 : index
    %688 = vector.load %arg17[%687, %c0_149] : memref<64x256xf32, #tpu.memory_space<vmem>>, vector<8x128xf32>
    %689 = vector.extract_strided_slice %681 {offsets = [0, 0], sizes = [8, 128], strides = [1, 1]} : vector<8x256xf32> to vector<8x128xf32>
    %690 = arith.addf %688, %689 : vector<8x128xf32>
    %691 = arith.index_cast %686 : i32 to index
    %c128_150 = arith.constant 128 : index
    %692 = vector.load %arg17[%691, %c128_150] : memref<64x256xf32, #tpu.memory_space<vmem>>, vector<8x128xf32>
    %693 = vector.extract_strided_slice %681 {offsets = [0, 128], sizes = [8, 128], strides = [1, 1]} : vector<8x256xf32> to vector<8x128xf32>
    %694 = arith.addf %692, %693 : vector<8x128xf32>
    %695 = vector.extract_strided_slice %690 {offsets = [0, 0], sizes = [8, 96], strides = [1, 1]} : vector<8x128xf32> to vector<8x96xf32>
    %696 = arith.negf %695 : vector<8x96xf32>
    %697 = math.exp %696 : vector<8x96xf32>
    %cst_151 = arith.constant 1.000000e+00 : f32
    %698 = vector.broadcast %cst_151 : f32 to vector<8x96xf32>
    %699 = arith.addf %698, %697 : vector<8x96xf32>
    %700 = arith.divf %698, %699 : vector<8x96xf32>
    %701 = vector.extract_strided_slice %690 {offsets = [0, 96], sizes = [8, 32], strides = [1, 1]} : vector<8x128xf32> to vector<8x32xf32>
    %702 = math.tanh %701 : vector<8x32xf32>
    %703 = vector.extract_strided_slice %700 {offsets = [0, 32], sizes = [8, 32], strides = [1, 1]} : vector<8x96xf32> to vector<8x32xf32>
    %704 = vector.extract_strided_slice %679 {offsets = [0, 0], sizes = [8, 32], strides = [1, 1]} : vector<8x64xf32> to vector<8x32xf32>
    %705 = arith.mulf %703, %704 : vector<8x32xf32>
    %706 = vector.extract_strided_slice %700 {offsets = [0, 0], sizes = [8, 32], strides = [1, 1]} : vector<8x96xf32> to vector<8x32xf32>
    %707 = arith.mulf %706, %702 : vector<8x32xf32>
    %708 = arith.addf %705, %707 : vector<8x32xf32>
    %709 = vector.extract_strided_slice %700 {offsets = [0, 64], sizes = [8, 32], strides = [1, 1]} : vector<8x96xf32> to vector<8x32xf32>
    %710 = math.tanh %708 : vector<8x32xf32>
    %711 = arith.mulf %709, %710 : vector<8x32xf32>
    %712 = vector.extract_strided_slice %694 {offsets = [0, 0], sizes = [8, 96], strides = [1, 1]} : vector<8x128xf32> to vector<8x96xf32>
    %713 = arith.negf %712 : vector<8x96xf32>
    %714 = math.exp %713 : vector<8x96xf32>
    %cst_152 = arith.constant 1.000000e+00 : f32
    %715 = vector.broadcast %cst_152 : f32 to vector<8x96xf32>
    %716 = arith.addf %715, %714 : vector<8x96xf32>
    %717 = arith.divf %715, %716 : vector<8x96xf32>
    %718 = vector.extract_strided_slice %694 {offsets = [0, 96], sizes = [8, 32], strides = [1, 1]} : vector<8x128xf32> to vector<8x32xf32>
    %719 = math.tanh %718 : vector<8x32xf32>
    %720 = vector.extract_strided_slice %717 {offsets = [0, 32], sizes = [8, 32], strides = [1, 1]} : vector<8x96xf32> to vector<8x32xf32>
    %721 = vector.extract_strided_slice %679 {offsets = [0, 32], sizes = [8, 32], strides = [1, 1]} : vector<8x64xf32> to vector<8x32xf32>
    %722 = arith.mulf %720, %721 : vector<8x32xf32>
    %723 = vector.extract_strided_slice %717 {offsets = [0, 0], sizes = [8, 32], strides = [1, 1]} : vector<8x96xf32> to vector<8x32xf32>
    %724 = arith.mulf %723, %719 : vector<8x32xf32>
    %725 = arith.addf %722, %724 : vector<8x32xf32>
    %726 = vector.extract_strided_slice %717 {offsets = [0, 64], sizes = [8, 32], strides = [1, 1]} : vector<8x96xf32> to vector<8x32xf32>
    %727 = math.tanh %725 : vector<8x32xf32>
    %728 = arith.mulf %726, %727 : vector<8x32xf32>
    %729 = arith.index_cast %683 : i32 to index
    %c0_153 = arith.constant 0 : index
    %730 = vector.load %arg18[%729, %c0_153] : memref<64x64xf32, #tpu.memory_space<vmem>>, vector<8x32xf32>
    tpu.vector_store %arg18[%729, %c0_153], %711 {strides = array<i32>} : memref<64x64xf32, #tpu.memory_space<vmem>>, vector<8x32xf32>,
    %731 = arith.index_cast %686 : i32 to index
    %c32_154 = arith.constant 32 : index
    %732 = vector.load %arg18[%731, %c32_154] : memref<64x64xf32, #tpu.memory_space<vmem>>, vector<8x32xf32>
    tpu.vector_store %arg18[%731, %c32_154], %728 {strides = array<i32>} : memref<64x64xf32, #tpu.memory_space<vmem>>, vector<8x32xf32>,
    %733 = tpu.concatenate %711, %728 in 1 : vector<8x32xf32>, vector<8x32xf32> -> vector<8x64xf32>
    %734 = tpu.concatenate %708, %725 in 1 : vector<8x32xf32>, vector<8x32xf32> -> vector<8x64xf32>
    %c5_i32_155 = arith.constant 5 : i32
    %735 = arith.truncf %733 : vector<8x64xf32> to vector<8x64xbf16>
    %cst_156 = arith.constant dense<0.000000e+00> : vector<8x256xf32>
    %736 = tpu.matmul %735, %451, %cst_156 {dimension_numbers = #tpu.dot_dimension_numbers<[1], [0], [0], [1], [0, 0, 1, 1], [], []>} : vector<8x64xbf16>, vector<64x256xbf16>, vector<8x256xf32> -> vector<8x256xf32>
    %c8_i32_157 = arith.constant 8 : i32
    %737 = arith.muli %c5_i32_155, %c8_i32_157 : i32
    %738 = tpu.assume_multiple %737, 8 : i32
    %c7_i32_158 = arith.constant 7 : i32
    %739 = arith.subi %c7_i32_158, %c5_i32_155 : i32
    %c8_i32_159 = arith.constant 8 : i32
    %740 = arith.muli %739, %c8_i32_159 : i32
    %741 = tpu.assume_multiple %740, 8 : i32
    %742 = arith.index_cast %738 : i32 to index
    %c0_160 = arith.constant 0 : index
    %743 = vector.load %arg17[%742, %c0_160] : memref<64x256xf32, #tpu.memory_space<vmem>>, vector<8x128xf32>
    %744 = vector.extract_strided_slice %736 {offsets = [0, 0], sizes = [8, 128], strides = [1, 1]} : vector<8x256xf32> to vector<8x128xf32>
    %745 = arith.addf %743, %744 : vector<8x128xf32>
    %746 = arith.index_cast %741 : i32 to index
    %c128_161 = arith.constant 128 : index
    %747 = vector.load %arg17[%746, %c128_161] : memref<64x256xf32, #tpu.memory_space<vmem>>, vector<8x128xf32>
    %748 = vector.extract_strided_slice %736 {offsets = [0, 128], sizes = [8, 128], strides = [1, 1]} : vector<8x256xf32> to vector<8x128xf32>
    %749 = arith.addf %747, %748 : vector<8x128xf32>
    %750 = vector.extract_strided_slice %745 {offsets = [0, 0], sizes = [8, 96], strides = [1, 1]} : vector<8x128xf32> to vector<8x96xf32>
    %751 = arith.negf %750 : vector<8x96xf32>
    %752 = math.exp %751 : vector<8x96xf32>
    %cst_162 = arith.constant 1.000000e+00 : f32
    %753 = vector.broadcast %cst_162 : f32 to vector<8x96xf32>
    %754 = arith.addf %753, %752 : vector<8x96xf32>
    %755 = arith.divf %753, %754 : vector<8x96xf32>
    %756 = vector.extract_strided_slice %745 {offsets = [0, 96], sizes = [8, 32], strides = [1, 1]} : vector<8x128xf32> to vector<8x32xf32>
    %757 = math.tanh %756 : vector<8x32xf32>
    %758 = vector.extract_strided_slice %755 {offsets = [0, 32], sizes = [8, 32], strides = [1, 1]} : vector<8x96xf32> to vector<8x32xf32>
    %759 = vector.extract_strided_slice %734 {offsets = [0, 0], sizes = [8, 32], strides = [1, 1]} : vector<8x64xf32> to vector<8x32xf32>
    %760 = arith.mulf %758, %759 : vector<8x32xf32>
    %761 = vector.extract_strided_slice %755 {offsets = [0, 0], sizes = [8, 32], strides = [1, 1]} : vector<8x96xf32> to vector<8x32xf32>
    %762 = arith.mulf %761, %757 : vector<8x32xf32>
    %763 = arith.addf %760, %762 : vector<8x32xf32>
    %764 = vector.extract_strided_slice %755 {offsets = [0, 64], sizes = [8, 32], strides = [1, 1]} : vector<8x96xf32> to vector<8x32xf32>
    %765 = math.tanh %763 : vector<8x32xf32>
    %766 = arith.mulf %764, %765 : vector<8x32xf32>
    %767 = vector.extract_strided_slice %749 {offsets = [0, 0], sizes = [8, 96], strides = [1, 1]} : vector<8x128xf32> to vector<8x96xf32>
    %768 = arith.negf %767 : vector<8x96xf32>
    %769 = math.exp %768 : vector<8x96xf32>
    %cst_163 = arith.constant 1.000000e+00 : f32
    %770 = vector.broadcast %cst_163 : f32 to vector<8x96xf32>
    %771 = arith.addf %770, %769 : vector<8x96xf32>
    %772 = arith.divf %770, %771 : vector<8x96xf32>
    %773 = vector.extract_strided_slice %749 {offsets = [0, 96], sizes = [8, 32], strides = [1, 1]} : vector<8x128xf32> to vector<8x32xf32>
    %774 = math.tanh %773 : vector<8x32xf32>
    %775 = vector.extract_strided_slice %772 {offsets = [0, 32], sizes = [8, 32], strides = [1, 1]} : vector<8x96xf32> to vector<8x32xf32>
    %776 = vector.extract_strided_slice %734 {offsets = [0, 32], sizes = [8, 32], strides = [1, 1]} : vector<8x64xf32> to vector<8x32xf32>
    %777 = arith.mulf %775, %776 : vector<8x32xf32>
    %778 = vector.extract_strided_slice %772 {offsets = [0, 0], sizes = [8, 32], strides = [1, 1]} : vector<8x96xf32> to vector<8x32xf32>
    %779 = arith.mulf %778, %774 : vector<8x32xf32>
    %780 = arith.addf %777, %779 : vector<8x32xf32>
    %781 = vector.extract_strided_slice %772 {offsets = [0, 64], sizes = [8, 32], strides = [1, 1]} : vector<8x96xf32> to vector<8x32xf32>
    %782 = math.tanh %780 : vector<8x32xf32>
    %783 = arith.mulf %781, %782 : vector<8x32xf32>
    %784 = arith.index_cast %738 : i32 to index
    %c0_164 = arith.constant 0 : index
    %785 = vector.load %arg18[%784, %c0_164] : memref<64x64xf32, #tpu.memory_space<vmem>>, vector<8x32xf32>
    tpu.vector_store %arg18[%784, %c0_164], %766 {strides = array<i32>} : memref<64x64xf32, #tpu.memory_space<vmem>>, vector<8x32xf32>,
    %786 = arith.index_cast %741 : i32 to index
    %c32_165 = arith.constant 32 : index
    %787 = vector.load %arg18[%786, %c32_165] : memref<64x64xf32, #tpu.memory_space<vmem>>, vector<8x32xf32>
    tpu.vector_store %arg18[%786, %c32_165], %783 {strides = array<i32>} : memref<64x64xf32, #tpu.memory_space<vmem>>, vector<8x32xf32>,
    %788 = tpu.concatenate %766, %783 in 1 : vector<8x32xf32>, vector<8x32xf32> -> vector<8x64xf32>
    %789 = tpu.concatenate %763, %780 in 1 : vector<8x32xf32>, vector<8x32xf32> -> vector<8x64xf32>
    %c6_i32_166 = arith.constant 6 : i32
    %790 = arith.truncf %788 : vector<8x64xf32> to vector<8x64xbf16>
    %cst_167 = arith.constant dense<0.000000e+00> : vector<8x256xf32>
    %791 = tpu.matmul %790, %451, %cst_167 {dimension_numbers = #tpu.dot_dimension_numbers<[1], [0], [0], [1], [0, 0, 1, 1], [], []>} : vector<8x64xbf16>, vector<64x256xbf16>, vector<8x256xf32> -> vector<8x256xf32>
    %c8_i32_168 = arith.constant 8 : i32
    %792 = arith.muli %c6_i32_166, %c8_i32_168 : i32
    %793 = tpu.assume_multiple %792, 8 : i32
    %c7_i32_169 = arith.constant 7 : i32
    %794 = arith.subi %c7_i32_169, %c6_i32_166 : i32
    %c8_i32_170 = arith.constant 8 : i32
    %795 = arith.muli %794, %c8_i32_170 : i32
    %796 = tpu.assume_multiple %795, 8 : i32
    %797 = arith.index_cast %793 : i32 to index
    %c0_171 = arith.constant 0 : index
    %798 = vector.load %arg17[%797, %c0_171] : memref<64x256xf32, #tpu.memory_space<vmem>>, vector<8x128xf32>
    %799 = vector.extract_strided_slice %791 {offsets = [0, 0], sizes = [8, 128], strides = [1, 1]} : vector<8x256xf32> to vector<8x128xf32>
    %800 = arith.addf %798, %799 : vector<8x128xf32>
    %801 = arith.index_cast %796 : i32 to index
    %c128_172 = arith.constant 128 : index
    %802 = vector.load %arg17[%801, %c128_172] : memref<64x256xf32, #tpu.memory_space<vmem>>, vector<8x128xf32>
    %803 = vector.extract_strided_slice %791 {offsets = [0, 128], sizes = [8, 128], strides = [1, 1]} : vector<8x256xf32> to vector<8x128xf32>
    %804 = arith.addf %802, %803 : vector<8x128xf32>
    %805 = vector.extract_strided_slice %800 {offsets = [0, 0], sizes = [8, 96], strides = [1, 1]} : vector<8x128xf32> to vector<8x96xf32>
    %806 = arith.negf %805 : vector<8x96xf32>
    %807 = math.exp %806 : vector<8x96xf32>
    %cst_173 = arith.constant 1.000000e+00 : f32
    %808 = vector.broadcast %cst_173 : f32 to vector<8x96xf32>
    %809 = arith.addf %808, %807 : vector<8x96xf32>
    %810 = arith.divf %808, %809 : vector<8x96xf32>
    %811 = vector.extract_strided_slice %800 {offsets = [0, 96], sizes = [8, 32], strides = [1, 1]} : vector<8x128xf32> to vector<8x32xf32>
    %812 = math.tanh %811 : vector<8x32xf32>
    %813 = vector.extract_strided_slice %810 {offsets = [0, 32], sizes = [8, 32], strides = [1, 1]} : vector<8x96xf32> to vector<8x32xf32>
    %814 = vector.extract_strided_slice %789 {offsets = [0, 0], sizes = [8, 32], strides = [1, 1]} : vector<8x64xf32> to vector<8x32xf32>
    %815 = arith.mulf %813, %814 : vector<8x32xf32>
    %816 = vector.extract_strided_slice %810 {offsets = [0, 0], sizes = [8, 32], strides = [1, 1]} : vector<8x96xf32> to vector<8x32xf32>
    %817 = arith.mulf %816, %812 : vector<8x32xf32>
    %818 = arith.addf %815, %817 : vector<8x32xf32>
    %819 = vector.extract_strided_slice %810 {offsets = [0, 64], sizes = [8, 32], strides = [1, 1]} : vector<8x96xf32> to vector<8x32xf32>
    %820 = math.tanh %818 : vector<8x32xf32>
    %821 = arith.mulf %819, %820 : vector<8x32xf32>
    %822 = vector.extract_strided_slice %804 {offsets = [0, 0], sizes = [8, 96], strides = [1, 1]} : vector<8x128xf32> to vector<8x96xf32>
    %823 = arith.negf %822 : vector<8x96xf32>
    %824 = math.exp %823 : vector<8x96xf32>
    %cst_174 = arith.constant 1.000000e+00 : f32
    %825 = vector.broadcast %cst_174 : f32 to vector<8x96xf32>
    %826 = arith.addf %825, %824 : vector<8x96xf32>
    %827 = arith.divf %825, %826 : vector<8x96xf32>
    %828 = vector.extract_strided_slice %804 {offsets = [0, 96], sizes = [8, 32], strides = [1, 1]} : vector<8x128xf32> to vector<8x32xf32>
    %829 = math.tanh %828 : vector<8x32xf32>
    %830 = vector.extract_strided_slice %827 {offsets = [0, 32], sizes = [8, 32], strides = [1, 1]} : vector<8x96xf32> to vector<8x32xf32>
    %831 = vector.extract_strided_slice %789 {offsets = [0, 32], sizes = [8, 32], strides = [1, 1]} : vector<8x64xf32> to vector<8x32xf32>
    %832 = arith.mulf %830, %831 : vector<8x32xf32>
    %833 = vector.extract_strided_slice %827 {offsets = [0, 0], sizes = [8, 32], strides = [1, 1]} : vector<8x96xf32> to vector<8x32xf32>
    %834 = arith.mulf %833, %829 : vector<8x32xf32>
    %835 = arith.addf %832, %834 : vector<8x32xf32>
    %836 = vector.extract_strided_slice %827 {offsets = [0, 64], sizes = [8, 32], strides = [1, 1]} : vector<8x96xf32> to vector<8x32xf32>
    %837 = math.tanh %835 : vector<8x32xf32>
    %838 = arith.mulf %836, %837 : vector<8x32xf32>
    %839 = arith.index_cast %793 : i32 to index
    %c0_175 = arith.constant 0 : index
    %840 = vector.load %arg18[%839, %c0_175] : memref<64x64xf32, #tpu.memory_space<vmem>>, vector<8x32xf32>
    tpu.vector_store %arg18[%839, %c0_175], %821 {strides = array<i32>} : memref<64x64xf32, #tpu.memory_space<vmem>>, vector<8x32xf32>,
    %841 = arith.index_cast %796 : i32 to index
    %c32_176 = arith.constant 32 : index
    %842 = vector.load %arg18[%841, %c32_176] : memref<64x64xf32, #tpu.memory_space<vmem>>, vector<8x32xf32>
    tpu.vector_store %arg18[%841, %c32_176], %838 {strides = array<i32>} : memref<64x64xf32, #tpu.memory_space<vmem>>, vector<8x32xf32>,
    %843 = tpu.concatenate %821, %838 in 1 : vector<8x32xf32>, vector<8x32xf32> -> vector<8x64xf32>
    %844 = tpu.concatenate %818, %835 in 1 : vector<8x32xf32>, vector<8x32xf32> -> vector<8x64xf32>
    %c7_i32_177 = arith.constant 7 : i32
    %845 = arith.truncf %843 : vector<8x64xf32> to vector<8x64xbf16>
    %cst_178 = arith.constant dense<0.000000e+00> : vector<8x256xf32>
    %846 = tpu.matmul %845, %451, %cst_178 {dimension_numbers = #tpu.dot_dimension_numbers<[1], [0], [0], [1], [0, 0, 1, 1], [], []>} : vector<8x64xbf16>, vector<64x256xbf16>, vector<8x256xf32> -> vector<8x256xf32>
    %c8_i32_179 = arith.constant 8 : i32
    %847 = arith.muli %c7_i32_177, %c8_i32_179 : i32
    %848 = tpu.assume_multiple %847, 8 : i32
    %c7_i32_180 = arith.constant 7 : i32
    %849 = arith.subi %c7_i32_180, %c7_i32_177 : i32
    %c8_i32_181 = arith.constant 8 : i32
    %850 = arith.muli %849, %c8_i32_181 : i32
    %851 = tpu.assume_multiple %850, 8 : i32
    %852 = arith.index_cast %848 : i32 to index
    %c0_182 = arith.constant 0 : index
    %853 = vector.load %arg17[%852, %c0_182] : memref<64x256xf32, #tpu.memory_space<vmem>>, vector<8x128xf32>
    %854 = vector.extract_strided_slice %846 {offsets = [0, 0], sizes = [8, 128], strides = [1, 1]} : vector<8x256xf32> to vector<8x128xf32>
    %855 = arith.addf %853, %854 : vector<8x128xf32>
    %856 = arith.index_cast %851 : i32 to index
    %c128_183 = arith.constant 128 : index
    %857 = vector.load %arg17[%856, %c128_183] : memref<64x256xf32, #tpu.memory_space<vmem>>, vector<8x128xf32>
    %858 = vector.extract_strided_slice %846 {offsets = [0, 128], sizes = [8, 128], strides = [1, 1]} : vector<8x256xf32> to vector<8x128xf32>
    %859 = arith.addf %857, %858 : vector<8x128xf32>
    %860 = vector.extract_strided_slice %855 {offsets = [0, 0], sizes = [8, 96], strides = [1, 1]} : vector<8x128xf32> to vector<8x96xf32>
    %861 = arith.negf %860 : vector<8x96xf32>
    %862 = math.exp %861 : vector<8x96xf32>
    %cst_184 = arith.constant 1.000000e+00 : f32
    %863 = vector.broadcast %cst_184 : f32 to vector<8x96xf32>
    %864 = arith.addf %863, %862 : vector<8x96xf32>
    %865 = arith.divf %863, %864 : vector<8x96xf32>
    %866 = vector.extract_strided_slice %855 {offsets = [0, 96], sizes = [8, 32], strides = [1, 1]} : vector<8x128xf32> to vector<8x32xf32>
    %867 = math.tanh %866 : vector<8x32xf32>
    %868 = vector.extract_strided_slice %865 {offsets = [0, 32], sizes = [8, 32], strides = [1, 1]} : vector<8x96xf32> to vector<8x32xf32>
    %869 = vector.extract_strided_slice %844 {offsets = [0, 0], sizes = [8, 32], strides = [1, 1]} : vector<8x64xf32> to vector<8x32xf32>
    %870 = arith.mulf %868, %869 : vector<8x32xf32>
    %871 = vector.extract_strided_slice %865 {offsets = [0, 0], sizes = [8, 32], strides = [1, 1]} : vector<8x96xf32> to vector<8x32xf32>
    %872 = arith.mulf %871, %867 : vector<8x32xf32>
    %873 = arith.addf %870, %872 : vector<8x32xf32>
    %874 = vector.extract_strided_slice %865 {offsets = [0, 64], sizes = [8, 32], strides = [1, 1]} : vector<8x96xf32> to vector<8x32xf32>
    %875 = math.tanh %873 : vector<8x32xf32>
    %876 = arith.mulf %874, %875 : vector<8x32xf32>
    %877 = vector.extract_strided_slice %859 {offsets = [0, 0], sizes = [8, 96], strides = [1, 1]} : vector<8x128xf32> to vector<8x96xf32>
    %878 = arith.negf %877 : vector<8x96xf32>
    %879 = math.exp %878 : vector<8x96xf32>
    %cst_185 = arith.constant 1.000000e+00 : f32
    %880 = vector.broadcast %cst_185 : f32 to vector<8x96xf32>
    %881 = arith.addf %880, %879 : vector<8x96xf32>
    %882 = arith.divf %880, %881 : vector<8x96xf32>
    %883 = vector.extract_strided_slice %859 {offsets = [0, 96], sizes = [8, 32], strides = [1, 1]} : vector<8x128xf32> to vector<8x32xf32>
    %884 = math.tanh %883 : vector<8x32xf32>
    %885 = vector.extract_strided_slice %882 {offsets = [0, 32], sizes = [8, 32], strides = [1, 1]} : vector<8x96xf32> to vector<8x32xf32>
    %886 = vector.extract_strided_slice %844 {offsets = [0, 32], sizes = [8, 32], strides = [1, 1]} : vector<8x64xf32> to vector<8x32xf32>
    %887 = arith.mulf %885, %886 : vector<8x32xf32>
    %888 = vector.extract_strided_slice %882 {offsets = [0, 0], sizes = [8, 32], strides = [1, 1]} : vector<8x96xf32> to vector<8x32xf32>
    %889 = arith.mulf %888, %884 : vector<8x32xf32>
    %890 = arith.addf %887, %889 : vector<8x32xf32>
    %891 = vector.extract_strided_slice %882 {offsets = [0, 64], sizes = [8, 32], strides = [1, 1]} : vector<8x96xf32> to vector<8x32xf32>
    %892 = math.tanh %890 : vector<8x32xf32>
    %893 = arith.mulf %891, %892 : vector<8x32xf32>
    %894 = arith.index_cast %848 : i32 to index
    %c0_186 = arith.constant 0 : index
    %895 = vector.load %arg18[%894, %c0_186] : memref<64x64xf32, #tpu.memory_space<vmem>>, vector<8x32xf32>
    tpu.vector_store %arg18[%894, %c0_186], %876 {strides = array<i32>} : memref<64x64xf32, #tpu.memory_space<vmem>>, vector<8x32xf32>,
    %896 = arith.index_cast %851 : i32 to index
    %c32_187 = arith.constant 32 : index
    %897 = vector.load %arg18[%896, %c32_187] : memref<64x64xf32, #tpu.memory_space<vmem>>, vector<8x32xf32>
    tpu.vector_store %arg18[%896, %c32_187], %893 {strides = array<i32>} : memref<64x64xf32, #tpu.memory_space<vmem>>, vector<8x32xf32>,
    %898 = tpu.concatenate %876, %893 in 1 : vector<8x32xf32>, vector<8x32xf32> -> vector<8x64xf32>
    %899 = tpu.concatenate %873, %890 in 1 : vector<8x32xf32>, vector<8x32xf32> -> vector<8x64xf32>
    %c8_i32_188 = arith.constant 8 : i32
    %c0_189 = arith.constant 0 : index
    %c0_190 = arith.constant 0 : index
    %900 = vector.load %arg18[%c0_189, %c0_190] : memref<64x64xf32, #tpu.memory_space<vmem>>, vector<64x64xf32>
    %c0_191 = arith.constant 0 : index
    %c0_192 = arith.constant 0 : index
    %901 = vector.load %arg7[%c0_191, %c0_192] : memref<64x32xf32, #tpu.memory_space<vmem>>, vector<64x32xf32>
    %cst_193 = arith.constant dense<0.000000e+00> : vector<64x32xf32>
    %902 = tpu.matmul %900, %901, %cst_193 {dimension_numbers = #tpu.dot_dimension_numbers<[1], [0], [0], [1], [0, 0, 1, 1], [], []>} : vector<64x64xf32>, vector<64x32xf32>, vector<64x32xf32> -> vector<64x32xf32>
    %c0_194 = arith.constant 0 : index
    %c0_195 = arith.constant 0 : index
    %903 = vector.load %arg8[%c0_194, %c0_195] : memref<1x32xf32, #tpu.memory_space<vmem>>, vector<1x32xf32>
    %904 = vector.broadcast %903 : vector<1x32xf32> to vector<64x32xf32>
    %905 = arith.addf %902, %904 : vector<64x32xf32>
    %906 = math.tanh %905 : vector<64x32xf32>
    %907 = vector.shape_cast %906 : vector<64x32xf32> to vector<8x8x32xf32>
    %c0_196 = arith.constant 0 : index
    %c0_197 = arith.constant 0 : index
    %908 = vector.load %arg9[%c0_196, %c0_197] : memref<1x32xf32, #tpu.memory_space<vmem>>, vector<1x32xf32>
    %909 = vector.shape_cast %908 : vector<1x32xf32> to vector<1x1x32xf32>
    %910 = vector.broadcast %909 : vector<1x1x32xf32> to vector<8x8x32xf32>
    %911 = arith.mulf %907, %910 : vector<8x8x32xf32>
    %cst_198 = arith.constant dense<0.000000e+00> : vector<8x8xf32>
    %912 = vector.multi_reduction <add>, %911, %cst_198 [2] : vector<8x8x32xf32> to vector<8x8xf32>
    %913 = vector.shape_cast %912 : vector<8x8xf32> to vector<8x8x1xf32>
    %cst_199 = arith.constant dense<0xFF800000> : vector<8x1xf32>
    %914 = vector.multi_reduction <maximumf>, %913, %cst_199 [0] : vector<8x8x1xf32> to vector<8x1xf32>
    %915 = vector.shape_cast %914 : vector<8x1xf32> to vector<1x8x1xf32>
    %916 = vector.broadcast %915 : vector<1x8x1xf32> to vector<8x8x1xf32>
    %917 = arith.subf %913, %916 : vector<8x8x1xf32>
    %918 = math.exp %917 : vector<8x8x1xf32>
    %cst_200 = arith.constant dense<0.000000e+00> : vector<8x1xf32>
    %919 = vector.multi_reduction <add>, %918, %cst_200 [0] : vector<8x8x1xf32> to vector<8x1xf32>
    %920 = vector.shape_cast %900 : vector<64x64xf32> to vector<8x8x64xf32>
    %921 = vector.broadcast %918 : vector<8x8x1xf32> to vector<8x8x64xf32>
    %922 = arith.mulf %921, %920 : vector<8x8x64xf32>
    %cst_201 = arith.constant dense<0.000000e+00> : vector<8x64xf32>
    %923 = vector.multi_reduction <add>, %922, %cst_201 [0] : vector<8x8x64xf32> to vector<8x64xf32>
    %924 = tpu.reciprocal %919 {approx = true} : vector<8x1xf32> -> vector<8x1xf32>
    %925 = vector.broadcast %924 : vector<8x1xf32> to vector<8x64xf32>
    %926 = arith.mulf %923, %925 : vector<8x64xf32>
    %c0_202 = arith.constant 0 : index
    %c0_203 = arith.constant 0 : index
    %927 = vector.load %arg10[%c0_202, %c0_203] : memref<64x128xf32, #tpu.memory_space<vmem>>, vector<64x128xf32>
    %cst_204 = arith.constant dense<0.000000e+00> : vector<8x128xf32>
    %928 = tpu.matmul %926, %927, %cst_204 {dimension_numbers = #tpu.dot_dimension_numbers<[1], [0], [0], [1], [0, 0, 1, 1], [], []>} : vector<8x64xf32>, vector<64x128xf32>, vector<8x128xf32> -> vector<8x128xf32>
    %c0_205 = arith.constant 0 : index
    %c0_206 = arith.constant 0 : index
    %929 = vector.load %arg11[%c0_205, %c0_206] : memref<1x128xf32, #tpu.memory_space<vmem>>, vector<1x128xf32>
    %930 = vector.broadcast %929 : vector<1x128xf32> to vector<8x128xf32>
    %931 = arith.addf %928, %930 : vector<8x128xf32>
    %cst_207 = arith.constant 0.000000e+00 : f32
    %932 = vector.broadcast %cst_207 : f32 to vector<8x128xf32>
    %933 = arith.maximumf %931, %932 : vector<8x128xf32>
    %c0_208 = arith.constant 0 : index
    %c0_209 = arith.constant 0 : index
    %934 = vector.load %arg12[%c0_208, %c0_209] : memref<128x64xf32, #tpu.memory_space<vmem>>, vector<128x64xf32>
    %cst_210 = arith.constant dense<0.000000e+00> : vector<8x64xf32>
    %935 = tpu.matmul %933, %934, %cst_210 {dimension_numbers = #tpu.dot_dimension_numbers<[1], [0], [0], [1], [0, 0, 1, 1], [], []>} : vector<8x128xf32>, vector<128x64xf32>, vector<8x64xf32> -> vector<8x64xf32>
    %c0_211 = arith.constant 0 : index
    %c0_212 = arith.constant 0 : index
    %936 = vector.load %arg13[%c0_211, %c0_212] : memref<1x64xf32, #tpu.memory_space<vmem>>, vector<1x64xf32>
    %937 = vector.broadcast %936 : vector<1x64xf32> to vector<8x64xf32>
    %938 = arith.addf %935, %937 : vector<8x64xf32>
    %cst_213 = arith.constant 0.000000e+00 : f32
    %939 = vector.broadcast %cst_213 : f32 to vector<8x64xf32>
    %940 = arith.maximumf %938, %939 : vector<8x64xf32>
    %c0_214 = arith.constant 0 : index
    %c0_215 = arith.constant 0 : index
    %941 = vector.load %arg14[%c0_214, %c0_215] : memref<1x64xf32, #tpu.memory_space<vmem>>, vector<1x64xf32>
    %942 = vector.broadcast %941 : vector<1x64xf32> to vector<8x64xf32>
    %943 = arith.mulf %940, %942 : vector<8x64xf32>
    %cst_216 = arith.constant dense<0.000000e+00> : vector<8xf32>
    %944 = vector.multi_reduction <add>, %943, %cst_216 [1] : vector<8x64xf32> to vector<8xf32>
    %945 = vector.shape_cast %944 : vector<8xf32> to vector<8x1xf32>
    %c0_217 = arith.constant 0 : index
    %c0_218 = arith.constant 0 : index
    %946 = vector.load %arg15[%c0_217, %c0_218] : memref<1x1xf32, #tpu.memory_space<vmem>>, vector<1x1xf32>
    %947 = vector.broadcast %946 : vector<1x1xf32> to vector<8x1xf32>
    %948 = arith.addf %945, %947 : vector<8x1xf32>
    %949 = arith.negf %948 : vector<8x1xf32>
    %950 = math.exp %949 : vector<8x1xf32>
    %cst_219 = arith.constant 1.000000e+00 : f32
    %951 = vector.broadcast %cst_219 : f32 to vector<8x1xf32>
    %952 = arith.addf %951, %950 : vector<8x1xf32>
    %953 = arith.divf %951, %952 : vector<8x1xf32>
    %c0_220 = arith.constant 0 : index
    %c0_221 = arith.constant 0 : index
    %954 = vector.load %arg16[%c0_220, %c0_221] : memref<8x1xf32, #tpu.memory_space<vmem>>, vector<8x1xf32>
    tpu.vector_store %arg16[%c0_220, %c0_221], %953 {strides = array<i32>} : memref<8x1xf32, #tpu.memory_space<vmem>>, vector<8x1xf32>,
    return
  }
}

</mosaic_0001>

<llo_original>
// kernel: enhanced_lstm_trader_forward.1
$region0: #{enhanced_lstm_trader_forward.1}
  #allocation0 [shape = 'u32[]', space=smem, size = 0x4, offset = 0x4, fixed_abs, tag = 'smem constant byte address 0x4 - core index']
  #allocation1 [shape = 'u32[72,128]{1,0:T(1,128)}', space=vmem, size = 0x9000, scoped, tag = 'internal scratch']
  #allocation2 [shape = 'f32[64,256]{1,0:T(8,128)}', space=vmem, size = 0x10000, scoped, tag = 'scratch operand']
  #allocation3 [shape = 'f32[64,64]{1,0:T(8,128)}', space=vmem, size = 0x8000, scoped, tag = 'scratch operand']
  #allocation4 [shape = 'f32[1,1]{1,0:T(1,128)S(1)}', space=vmem, size = 0x200, scoped, tag = 'scoped memory for enhanced_lstm_trader_forward.1']
  %s0 = inlined_call_operand.vmem [shape: f32[64,8], index: 0, kind: input, shape index: {}]
  %s1 = inlined_call_operand.vmem [shape: bf16[8,256], index: 1, kind: input, shape index: {}]
  %s2 = inlined_call_operand.vmem [shape: bf16[64,256], index: 2, kind: input, shape index: {}]
  %s3 = inlined_call_operand.vmem [shape: f32[1,256], index: 3, kind: input, shape index: {}]
  %s4 = inlined_call_operand.vmem [shape: bf16[64,256], index: 4, kind: input, shape index: {}]
  %s5 = inlined_call_operand.vmem [shape: bf16[64,256], index: 5, kind: input, shape index: {}]
  %s6 = inlined_call_operand.vmem [shape: f32[1,256], index: 6, kind: input, shape index: {}]
  %s7 = inlined_call_operand.vmem [shape: f32[64,32], index: 7, kind: input, shape index: {}]
  %s8 = inlined_call_operand.vmem [shape: f32[1,32], index: 8, kind: input, shape index: {}]
  %s9 = inlined_call_operand.vmem [shape: f32[1,32], index: 9, kind: input, shape index: {}]
  %s10 = inlined_call_operand.vmem [shape: f32[64,128], index: 10, kind: input, shape index: {}]
  %s11 = inlined_call_operand.vmem [shape: f32[1,128], index: 11, kind: input, shape index: {}]
  %s12 = inlined_call_operand.vmem [shape: f32[128,64], index: 12, kind: input, shape index: {}]
  %s13 = inlined_call_operand.vmem [shape: f32[1,64], index: 13, kind: input, shape index: {}]
  %s14 = inlined_call_operand.vmem [shape: f32[1,64], index: 14, kind: input, shape index: {}]
  %s15 = inlined_call_operand.<no memory space> [shape: f32[1,1], index: 15, kind: input, shape index: {}]
  %s16 = inlined_call_operand.vmem [shape: f32[8,1], index: 16, kind: output, shape index: {}]
  %s17 = sld [smem:[#allocation0]]
  $region74: #{enhanced_lstm_trader_forward.1} parent=0
    _
  %s19 = ssub.s32 1, %s17
  %s20 = scalar_select 0, %s19, %s17
  %v21 = vstv %s15
  %22 = vst [vmem:[#allocation4] sm:$0x1] %v21
  // Predicated region
  $region2: #{enhanced_lstm_trader_forward.1} parent=0 // pred_check
    _
  $region3: #{enhanced_lstm_trader_forward.1} parent=0 // pred_check_branch
    %24 = sbr.rel (0) target = $region5
  $region4: #{enhanced_lstm_trader_forward.1} parent=0 // pred_region
    _
  $region5: #{enhanced_lstm_trader_forward.1} parent=0 // pred_fallthru
    _
  // Predicated region
  $region6: #{enhanced_lstm_trader_forward.1} parent=0 // pred_check
    _
  $region7: #{enhanced_lstm_trader_forward.1} parent=0 // pred_check_branch
    %26 = sbr.rel (0) target = $region9
  $region8: #{enhanced_lstm_trader_forward.1} parent=0 // pred_region
    _
  $region9: #{enhanced_lstm_trader_forward.1} parent=0 // pred_fallthru
    _
  // Predicated region
  $region10: #{enhanced_lstm_trader_forward.1} parent=0 // pred_check
    _
  $region11: #{enhanced_lstm_trader_forward.1} parent=0 // pred_check_branch
    %28 = sbr.rel (0) target = $region13
  $region12: #{enhanced_lstm_trader_forward.1} parent=0 // pred_region
    _
  $region13: #{enhanced_lstm_trader_forward.1} parent=0 // pred_fallthru
    _
  // Predicated region
  $region14: #{enhanced_lstm_trader_forward.1} parent=0 // pred_check
    _
  $region15: #{enhanced_lstm_trader_forward.1} parent=0 // pred_check_branch
    %30 = sbr.rel (0) target = $region17
  $region16: #{enhanced_lstm_trader_forward.1} parent=0 // pred_region
    _
  $region17: #{enhanced_lstm_trader_forward.1} parent=0 // pred_fallthru
    _
  // Predicated region
  $region18: #{enhanced_lstm_trader_forward.1} parent=0 // pred_check
    _
  $region19: #{enhanced_lstm_trader_forward.1} parent=0 // pred_check_branch
    %32 = sbr.rel (0) target = $region21
  $region20: #{enhanced_lstm_trader_forward.1} parent=0 // pred_region
    _
  $region21: #{enhanced_lstm_trader_forward.1} parent=0 // pred_fallthru
    _
  // Predicated region
  $region22: #{enhanced_lstm_trader_forward.1} parent=0 // pred_check
    _
  $region23: #{enhanced_lstm_trader_forward.1} parent=0 // pred_check_branch
    %34 = sbr.rel (0) target = $region25
  $region24: #{enhanced_lstm_trader_forward.1} parent=0 // pred_region
    _
  $region25: #{enhanced_lstm_trader_forward.1} parent=0 // pred_fallthru
    _
  // Predicated region
  $region26: #{enhanced_lstm_trader_forward.1} parent=0 // pred_check
    _
  $region27: #{enhanced_lstm_trader_forward.1} parent=0 // pred_check_branch
    %36 = sbr.rel (0) target = $region29
  $region28: #{enhanced_lstm_trader_forward.1} parent=0 // pred_region
    _
  $region29: #{enhanced_lstm_trader_forward.1} parent=0 // pred_fallthru
    _
  // Predicated region
  $region30: #{enhanced_lstm_trader_forward.1} parent=0 // pred_check
    _
  $region31: #{enhanced_lstm_trader_forward.1} parent=0 // pred_check_branch
    %38 = sbr.rel (0) target = $region33
  $region32: #{enhanced_lstm_trader_forward.1} parent=0 // pred_region
    _
  $region33: #{enhanced_lstm_trader_forward.1} parent=0 // pred_fallthru
    _
  // Predicated region
  $region34: #{enhanced_lstm_trader_forward.1} parent=0 // pred_check
    _
  $region35: #{enhanced_lstm_trader_forward.1} parent=0 // pred_check_branch
    %40 = sbr.rel (0) target = $region37
  $region36: #{enhanced_lstm_trader_forward.1} parent=0 // pred_region
    _
  $region37: #{enhanced_lstm_trader_forward.1} parent=0 // pred_fallthru
    _
  // Predicated region
  $region38: #{enhanced_lstm_trader_forward.1} parent=0 // pred_check
    _
  $region39: #{enhanced_lstm_trader_forward.1} parent=0 // pred_check_branch
    %42 = sbr.rel (0) target = $region41
  $region40: #{enhanced_lstm_trader_forward.1} parent=0 // pred_region
    _
  $region41: #{enhanced_lstm_trader_forward.1} parent=0 // pred_fallthru
    _
  // Predicated region
  $region42: #{enhanced_lstm_trader_forward.1} parent=0 // pred_check
    _
  $region43: #{enhanced_lstm_trader_forward.1} parent=0 // pred_check_branch
    %44 = sbr.rel (0) target = $region45
  $region44: #{enhanced_lstm_trader_forward.1} parent=0 // pred_region
    _
  $region45: #{enhanced_lstm_trader_forward.1} parent=0 // pred_fallthru
    _
  // Predicated region
  $region46: #{enhanced_lstm_trader_forward.1} parent=0 // pred_check
    _
  $region47: #{enhanced_lstm_trader_forward.1} parent=0 // pred_check_branch
    %46 = sbr.rel (0) target = $region49
  $region48: #{enhanced_lstm_trader_forward.1} parent=0 // pred_region
    _
  $region49: #{enhanced_lstm_trader_forward.1} parent=0 // pred_fallthru
    _
  // Predicated region
  $region50: #{enhanced_lstm_trader_forward.1} parent=0 // pred_check
    _
  $region51: #{enhanced_lstm_trader_forward.1} parent=0 // pred_check_branch
    %48 = sbr.rel (0) target = $region53
  $region52: #{enhanced_lstm_trader_forward.1} parent=0 // pred_region
    _
  $region53: #{enhanced_lstm_trader_forward.1} parent=0 // pred_fallthru
    _
  // Predicated region
  $region54: #{enhanced_lstm_trader_forward.1} parent=0 // pred_check
    _
  $region55: #{enhanced_lstm_trader_forward.1} parent=0 // pred_check_branch
    %50 = sbr.rel (0) target = $region57
  $region56: #{enhanced_lstm_trader_forward.1} parent=0 // pred_region
    _
  $region57: #{enhanced_lstm_trader_forward.1} parent=0 // pred_fallthru
    _
  // Predicated region
  $region58: #{enhanced_lstm_trader_forward.1} parent=0 // pred_check
    _
  $region59: #{enhanced_lstm_trader_forward.1} parent=0 // pred_check_branch
    %52 = sbr.rel (0) target = $region61
  $region60: #{enhanced_lstm_trader_forward.1} parent=0 // pred_region
    _
  $region61: #{enhanced_lstm_trader_forward.1} parent=0 // pred_fallthru
    _
  // Predicated region
  $region62: #{enhanced_lstm_trader_forward.1} parent=0 // pred_check
    _
  $region63: #{enhanced_lstm_trader_forward.1} parent=0 // pred_check_branch
    %54 = sbr.rel (0) target = $region65
  $region64: #{enhanced_lstm_trader_forward.1} parent=0 // pred_region
    _
  $region65: #{enhanced_lstm_trader_forward.1} parent=0 // pred_fallthru
    _
  %v56 = vld [vmem:[%s1] sm:$0xff]
  %v57 = vld [vmem:[%s2] sm:$0xff]
  %v58 = vld [vmem:[%s2 + $0x8] sm:$0xff]
  %v59 = vld [vmem:[%s2 + $0x10] sm:$0xff]
  %v60 = vld [vmem:[%s2 + $0x18] sm:$0xff]
  %v61 = vld [vmem:[%s2 + $0x20] sm:$0xff]
  %v62 = vld [vmem:[%s2 + $0x28] sm:$0xff]
  %v63 = vld [vmem:[%s2 + $0x30] sm:$0xff]
  %v64 = vld [vmem:[%s2 + $0x38] sm:$0xff]
  %v65 = vld [vmem:[%s3] sm:$0x3]
  %v66 = vld [vmem:[%s0] sm:$0xff]
  %v67 = vld [vmem:[%s0 + $0x8] sm:$0xff]
  %v68 = vld [vmem:[%s0 + $0x10] sm:$0xff]
  %v69 = vld [vmem:[%s0 + $0x18] sm:$0xff]
  %v70 = vld [vmem:[%s0 + $0x20] sm:$0xff]
  %v71 = vld [vmem:[%s0 + $0x28] sm:$0xff]
  %v72 = vld [vmem:[%s0 + $0x30] sm:$0xff]
  %v73 = vld [vmem:[%s0 + $0x38] sm:$0xff]
  %v74 = vpack.c.bf16 %v67, %v66
  %v75 = vpack.c.bf16 %v69, %v68
  %v76 = vpack.c.bf16 %v71, %v70
  %v77 = vpack.c.bf16 %v73, %v72
  %v79 = vperm.slane %v65, 0
  %v80 = vperm.slane %v65, 1
  %v84 = vunpack.c.l.b16 %v56
  %v85 = vunpack.c.h.b16 %v56
  %v86 = vpack.c.b16 %v84, %v84
  %v87 = vpack.c.b16 %v85, %v85
  %vm88 = vcmask 64512
  %v90 = vsel %vm88, %v74, 0
  %v93 = vsel %vm88, %v75, 0
  %v96 = vsel %vm88, %v76, 0
  %v99 = vsel %vm88, %v77, 0
  %vm101 = vcmask 1043456
  %v103 = vsel %vm101, %v86, 0
  %v106 = vsel %vm101, %v87, 0
  %108 = vmatpush.bf16.msra.mxu0 0
  %109 = vmatpush.bf16.msra.mxu0 0
  %110 = vmatpush.bf16.msra.mxu0 0
  %111 = vmatpush.bf16.msra.mxu0 0
  %112 = vmatpush.bf16.msra.mxu0 0
  %113 = vmatpush.bf16.msra.mxu0 0
  %114 = vmatpush.bf16.msra.mxu0 0
  %115 = vmatpush.bf16.msra.mxu0 %v103
  %116 = vmatmul.bf16.gmra.mxu0 %v90
  %v117 = vpop.f32.mrf.mxu0
  %v118 = vadd.f32 %v79, %v117
  %v119 = vpop.f32.mrf.mxu0
  %v120 = vadd.f32 %v79, %v119
  %121 = vmatmul.bf16.gmra.mxu0 %v93
  %v122 = vpop.f32.mrf.mxu0
  %v123 = vadd.f32 %v79, %v122
  %v124 = vpop.f32.mrf.mxu0
  %v125 = vadd.f32 %v79, %v124
  %126 = vmatmul.bf16.gmra.mxu0 %v96
  %v127 = vpop.f32.mrf.mxu0
  %v128 = vadd.f32 %v79, %v127
  %v129 = vpop.f32.mrf.mxu0
  %v130 = vadd.f32 %v79, %v129
  %131 = vmatmul.bf16.gmra.mxu0 %v99
  %v132 = vpop.f32.mrf.mxu0
  %v133 = vadd.f32 %v79, %v132
  %v134 = vpop.f32.mrf.mxu0
  %v135 = vadd.f32 %v79, %v134
  %136 = vdwg.mxu0
  %137 = vmatpush.bf16.msra.mxu0 0
  %138 = vmatpush.bf16.msra.mxu0 0
  %139 = vmatpush.bf16.msra.mxu0 0
  %140 = vmatpush.bf16.msra.mxu0 0
  %141 = vmatpush.bf16.msra.mxu0 0
  %142 = vmatpush.bf16.msra.mxu0 0
  %143 = vmatpush.bf16.msra.mxu0 0
  %144 = vmatpush.bf16.msra.mxu0 %v106
  %145 = vmatmul.bf16.gmra.mxu0 %v90
  %v146 = vpop.f32.mrf.mxu0
  %v147 = vadd.f32 %v80, %v146
  %v148 = vpop.f32.mrf.mxu0
  %v149 = vadd.f32 %v80, %v148
  %150 = vmatmul.bf16.gmra.mxu0 %v93
  %v151 = vpop.f32.mrf.mxu0
  %v152 = vadd.f32 %v80, %v151
  %v153 = vpop.f32.mrf.mxu0
  %v154 = vadd.f32 %v80, %v153
  %155 = vmatmul.bf16.gmra.mxu0 %v96
  %v156 = vpop.f32.mrf.mxu0
  %v157 = vadd.f32 %v80, %v156
  %v158 = vpop.f32.mrf.mxu0
  %v159 = vadd.f32 %v80, %v158
  %160 = vmatmul.bf16.gmra.mxu0 %v99
  %v161 = vpop.f32.mrf.mxu0
  %v162 = vadd.f32 %v80, %v161
  %v163 = vpop.f32.mrf.mxu0
  %v164 = vadd.f32 %v80, %v163
  %165 = vdwg.mxu0
  %166 = vst [vmem:[#allocation2] sm:$0xff] %v118
  %167 = vst [vmem:[#allocation2 + $0x8] sm:$0xff] %v147
  %168 = vst [vmem:[#allocation2 + $0x10] sm:$0xff] %v120
  %169 = vst [vmem:[#allocation2 + $0x18] sm:$0xff] %v149
  %170 = vst [vmem:[#allocation2 + $0x20] sm:$0xff] %v123
  %171 = vst [vmem:[#allocation2 + $0x28] sm:$0xff] %v152
  %172 = vst [vmem:[#allocation2 + $0x30] sm:$0xff] %v125
  %173 = vst [vmem:[#allocation2 + $0x38] sm:$0xff] %v154
  %174 = vst [vmem:[#allocation2 + $0x40] sm:$0xff] %v128
  %175 = vst [vmem:[#allocation2 + $0x48] sm:$0xff] %v157
  %176 = vst [vmem:[#allocation2 + $0x50] sm:$0xff] %v130
  %177 = vst [vmem:[#allocation2 + $0x58] sm:$0xff] %v159
  %178 = vst [vmem:[#allocation2 + $0x60] sm:$0xff] %v133
  %179 = vst [vmem:[#allocation2 + $0x68] sm:$0xff] %v162
  %180 = vst [vmem:[#allocation2 + $0x70] sm:$0xff] %v135
  %181 = vst [vmem:[#allocation2 + $0x78] sm:$0xff] %v164
  %v190 = vunpack.c.l.b16 %v57
  %v191 = vunpack.c.h.b16 %v57
  %v192 = vunpack.c.l.b16 %v58
  %v193 = vunpack.c.h.b16 %v58
  %v194 = vunpack.c.l.b16 %v59
  %v195 = vunpack.c.h.b16 %v59
  %v196 = vunpack.c.l.b16 %v60
  %v197 = vunpack.c.h.b16 %v60
  %v198 = vunpack.c.l.b16 %v61
  %v199 = vunpack.c.h.b16 %v61
  %v200 = vunpack.c.l.b16 %v62
  %v201 = vunpack.c.h.b16 %v62
  %v202 = vunpack.c.l.b16 %v63
  %v203 = vunpack.c.h.b16 %v63
  %v204 = vunpack.c.l.b16 %v64
  %v205 = vunpack.c.h.b16 %v64
  %v206 = vpack.c.b16 %v192, %v190
  %v207 = vpack.c.b16 %v193, %v191
  %v208 = vpack.c.b16 %v196, %v194
  %v209 = vpack.c.b16 %v197, %v195
  %v210 = vpack.c.b16 %v200, %v198
  %v211 = vpack.c.b16 %v201, %v199
  %v212 = vpack.c.b16 %v204, %v202
  %v213 = vpack.c.b16 %v205, %v203
  %vm222 = vcmask 523264
  %v224 = vsel %vm222, 0, 0
  %226 = vmatpush.bf16.msra.mxu0 0
  %227 = vmatpush.bf16.msra.mxu0 0
  %228 = vmatpush.bf16.msra.mxu0 0
  %229 = vmatpush.bf16.msra.mxu0 0
  %230 = vmatpush.bf16.msra.mxu0 %v212
  %231 = vmatpush.bf16.msra.mxu0 %v210
  %232 = vmatpush.bf16.msra.mxu0 %v208
  %233 = vmatpush.bf16.msra.mxu0 %v206
  %234 = vmatmul.bf16.gmra.mxu0 %v224
  %v235 = vpop.f32.mrf.mxu0
  %v236 = vadd.f32 0.0, %v235
  %v237 = vpop.f32.mrf.mxu0
  %238 = vdwg.mxu0
  %239 = vmatpush.bf16.msra.mxu0 0
  %240 = vmatpush.bf16.msra.mxu0 0
  %241 = vmatpush.bf16.msra.mxu0 0
  %242 = vmatpush.bf16.msra.mxu0 0
  %243 = vmatpush.bf16.msra.mxu0 %v213
  %244 = vmatpush.bf16.msra.mxu0 %v211
  %245 = vmatpush.bf16.msra.mxu0 %v209
  %246 = vmatpush.bf16.msra.mxu0 %v207
  %247 = vmatmul.bf16.gmra.mxu0 %v224
  %v248 = vpop.f32.mrf.mxu0
  %v249 = vadd.f32 0.0, %v248
  %v250 = vpop.f32.mrf.mxu0
  %251 = vdwg.mxu0
  %s252 = smul.u32 0, 2
  %s253 = smul.addr %s252, 8
  %s254 = scalar_lea.vmem [#allocation2], %s253
  %v255 = vld [vmem:[%s254] sm:$0xff]
  %v256 = vadd.f32 %v255, %v236
  %s257 = smul.u32 7, 2
  %s258 = smul.addr %s257, 8
  %s259 = scalar_lea.vmem [#allocation2], %s258
  %v260 = vld [vmem:[%s259 + $0x8] sm:$0xff]
  %v261 = vadd.f32 %v260, %v249
  %v262 = vxor.u32 %v256, 2147483648
  %v263 = vmul.f32 %v262, 1.442695
  %v264 = vpow.pop %v263
  %v265 = vadd.f32 %v264, 1.0
  %v266 = vrcp.pop %v265
  %v267 = vmul.f32 %v265, %v266
  %v268 = vsub.f32 1.0, %v267
  %v269 = vmul.f32 %v266, %v268
  %v270 = vadd.f32 %v266, %v269
  %vm271 = vweird.f32 %v265
  %vm272 = vweird.f32 %v266
  %vm273 = vmor %vm271, %vm272
  %v274 = vsel %vm273, %v266, %v270
  %v275 = vand.u32 2147483647, %v265
  %vm276 = vcmp.eq.f32.partialorder %v275, 8.507059e+37
  %v277 = vand.u32 %v265, 2147483648
  %v278 = vor.u32 1.1754944e-38, %v277
  %v279 = vsel %vm276, %v278, %v274
  %v280 = vmul.f32 1.0, %v279
  %v281 = vtanh.pop %v256
  %v282 = vmul.f32 %v280, 0.0
  %284 = vrot.lane.b32.xlu0 %v281, 32
  %v285 = vpop.permute.xlu0 %284
  %v287 = vmul.f32 %v280, %v285
  %289 = vrot.lane.b32.xlu0 %v287, 32
  %v290 = vpop.permute.xlu0 %289
  %v292 = vadd.f32 %v282, %v290
  %v293 = vtanh.pop %v292
  %295 = vrot.lane.b32.xlu0 %v293, 32
  %v296 = vpop.permute.xlu0 %295
  %v298 = vmul.f32 %v280, %v296
  %v299 = vxor.u32 %v261, 2147483648
  %v300 = vmul.f32 %v299, 1.442695
  %v301 = vpow.pop %v300
  %v302 = vadd.f32 %v301, 1.0
  %v303 = vrcp.pop %v302
  %v304 = vmul.f32 %v302, %v303
  %v305 = vsub.f32 1.0, %v304
  %v306 = vmul.f32 %v303, %v305
  %v307 = vadd.f32 %v303, %v306
  %vm308 = vweird.f32 %v302
  %vm309 = vweird.f32 %v303
  %vm310 = vmor %vm308, %vm309
  %v311 = vsel %vm310, %v303, %v307
  %v312 = vand.u32 2147483647, %v302
  %vm313 = vcmp.eq.f32.partialorder %v312, 8.507059e+37
  %v314 = vand.u32 %v302, 2147483648
  %v315 = vor.u32 1.1754944e-38, %v314
  %v316 = vsel %vm313, %v315, %v311
  %v317 = vmul.f32 1.0, %v316
  %v318 = vtanh.pop %v261
  %v319 = vmul.f32 %v317, 0.0
  %321 = vrot.lane.b32.xlu0 %v318, 32
  %v322 = vpop.permute.xlu0 %321
  %v324 = vmul.f32 %v317, %v322
  %326 = vrot.lane.b32.xlu0 %v324, 32
  %v327 = vpop.permute.xlu0 %326
  %v329 = vadd.f32 %v319, %v327
  %v330 = vtanh.pop %v329
  %332 = vrot.lane.b32.xlu0 %v330, 32
  %v333 = vpop.permute.xlu0 %332
  %v335 = vmul.f32 %v317, %v333
  %337 = vrot.lane.b32.xlu0 %v298, 64
  %v338 = vpop.permute.xlu0 %337
  %vm340 = vcmask 261120
  %341 = vst.msk [vmem:[#allocation3] sm:$0xff] %vm340, %v338
  %343 = vrot.lane.b32.xlu0 %v335, 96
  %v344 = vpop.permute.xlu0 %343
  %s346 = scalar_lea.vmem [#allocation3], 56
  %vm347 = vcmask 523520
  %348 = vst.msk [vmem:[%s346] sm:$0xff] %vm347, %v344
  %v349 = vsel %vm340, %v338, %v344
  %351 = vrot.lane.b32.xlu0 %v292, 96
  %v352 = vpop.permute.xlu0 %351
  %v354 = vsel %vm340, %v352, %v329
  %v355 = vpack.c.bf16 %v349, %v349
  %v357 = vsel %vm222, %v355, 0
  %359 = vmatpush.bf16.msra.mxu0 0
  %360 = vmatpush.bf16.msra.mxu0 0
  %361 = vmatpush.bf16.msra.mxu0 0
  %362 = vmatpush.bf16.msra.mxu0 0
  %363 = vmatpush.bf16.msra.mxu0 %v212
  %364 = vmatpush.bf16.msra.mxu0 %v210
  %365 = vmatpush.bf16.msra.mxu0 %v208
  %366 = vmatpush.bf16.msra.mxu0 %v206
  %367 = vmatmul.bf16.gmra.mxu0 %v357
  %v368 = vpop.f32.mrf.mxu0
  %v369 = vadd.f32 0.0, %v368
  %v370 = vpop.f32.mrf.mxu0
  %371 = vdwg.mxu0
  %372 = vmatpush.bf16.msra.mxu0 0
  %373 = vmatpush.bf16.msra.mxu0 0
  %374 = vmatpush.bf16.msra.mxu0 0
  %375 = vmatpush.bf16.msra.mxu0 0
  %376 = vmatpush.bf16.msra.mxu0 %v213
  %377 = vmatpush.bf16.msra.mxu0 %v211
  %378 = vmatpush.bf16.msra.mxu0 %v209
  %379 = vmatpush.bf16.msra.mxu0 %v207
  %380 = vmatmul.bf16.gmra.mxu0 %v357
  %v381 = vpop.f32.mrf.mxu0
  %v382 = vadd.f32 0.0, %v381
  %v383 = vpop.f32.mrf.mxu0
  %384 = vdwg.mxu0
  %s385 = smul.u32 1, 2
  %s386 = smul.addr %s385, 8
  %s387 = scalar_lea.vmem [#allocation2], %s386
  %v388 = vld [vmem:[%s387] sm:$0xff]
  %v389 = vadd.f32 %v388, %v369
  %s390 = smul.u32 6, 2
  %s391 = smul.addr %s390, 8
  %s392 = scalar_lea.vmem [#allocation2], %s391
  %v393 = vld [vmem:[%s392 + $0x8] sm:$0xff]
  %v394 = vadd.f32 %v393, %v382
  %v395 = vxor.u32 %v389, 2147483648
  %v396 = vmul.f32 %v395, 1.442695
  %v397 = vpow.pop %v396
  %v398 = vadd.f32 %v397, 1.0
  %v399 = vrcp.pop %v398
  %v400 = vmul.f32 %v398, %v399
  %v401 = vsub.f32 1.0, %v400
  %v402 = vmul.f32 %v399, %v401
  %v403 = vadd.f32 %v399, %v402
  %vm404 = vweird.f32 %v398
  %vm405 = vweird.f32 %v399
  %vm406 = vmor %vm404, %vm405
  %v407 = vsel %vm406, %v399, %v403
  %v408 = vand.u32 2147483647, %v398
  %vm409 = vcmp.eq.f32.partialorder %v408, 8.507059e+37
  %v410 = vand.u32 %v398, 2147483648
  %v411 = vor.u32 1.1754944e-38, %v410
  %v412 = vsel %vm409, %v411, %v407
  %v413 = vmul.f32 1.0, %v412
  %v414 = vtanh.pop %v389
  %416 = vrot.lane.b32.xlu0 %v354, 32
  %v417 = vpop.permute.xlu0 %416
  %v419 = vmul.f32 %v413, %v417
  %421 = vrot.lane.b32.xlu0 %v414, 32
  %v422 = vpop.permute.xlu0 %421
  %v424 = vmul.f32 %v413, %v422
  %426 = vrot.lane.b32.xlu0 %v424, 32
  %v427 = vpop.permute.xlu0 %426
  %v429 = vadd.f32 %v419, %v427
  %v430 = vtanh.pop %v429
  %432 = vrot.lane.b32.xlu0 %v430, 32
  %v433 = vpop.permute.xlu0 %432
  %v435 = vmul.f32 %v413, %v433
  %v436 = vxor.u32 %v394, 2147483648
  %v437 = vmul.f32 %v436, 1.442695
  %v438 = vpow.pop %v437
  %v439 = vadd.f32 %v438, 1.0
  %v440 = vrcp.pop %v439
  %v441 = vmul.f32 %v439, %v440
  %v442 = vsub.f32 1.0, %v441
  %v443 = vmul.f32 %v440, %v442
  %v444 = vadd.f32 %v440, %v443
  %vm445 = vweird.f32 %v439
  %vm446 = vweird.f32 %v440
  %vm447 = vmor %vm445, %vm446
  %v448 = vsel %vm447, %v440, %v444
  %v449 = vand.u32 2147483647, %v439
  %vm450 = vcmp.eq.f32.partialorder %v449, 8.507059e+37
  %v451 = vand.u32 %v439, 2147483648
  %v452 = vor.u32 1.1754944e-38, %v451
  %v453 = vsel %vm450, %v452, %v448
  %v454 = vmul.f32 1.0, %v453
  %v455 = vtanh.pop %v394
  %v456 = vmul.f32 %v454, %v354
  %458 = vrot.lane.b32.xlu0 %v455, 32
  %v459 = vpop.permute.xlu0 %458
  %v461 = vmul.f32 %v454, %v459
  %463 = vrot.lane.b32.xlu0 %v461, 32
  %v464 = vpop.permute.xlu0 %463
  %v466 = vadd.f32 %v456, %v464
  %v467 = vtanh.pop %v466
  %469 = vrot.lane.b32.xlu0 %v467, 32
  %v470 = vpop.permute.xlu0 %469
  %v472 = vmul.f32 %v454, %v470
  %474 = vrot.lane.b32.xlu0 %v435, 64
  %v475 = vpop.permute.xlu0 %474
  %s477 = scalar_lea.vmem [#allocation3], 8
  %478 = vst.msk [vmem:[%s477] sm:$0xff] %vm340, %v475
  %480 = vrot.lane.b32.xlu0 %v472, 96
  %v481 = vpop.permute.xlu0 %480
  %s483 = scalar_lea.vmem [#allocation3], 48
  %484 = vst.msk [vmem:[%s483] sm:$0xff] %vm347, %v481
  %v485 = vsel %vm340, %v475, %v481
  %487 = vrot.lane.b32.xlu0 %v429, 96
  %v488 = vpop.permute.xlu0 %487
  %v490 = vsel %vm340, %v488, %v466
  %v491 = vpack.c.bf16 %v485, %v485
  %v493 = vsel %vm222, %v491, 0
  %495 = vmatpush.bf16.msra.mxu0 0
  %496 = vmatpush.bf16.msra.mxu0 0
  %497 = vmatpush.bf16.msra.mxu0 0
  %498 = vmatpush.bf16.msra.mxu0 0
  %499 = vmatpush.bf16.msra.mxu0 %v212
  %500 = vmatpush.bf16.msra.mxu0 %v210
  %501 = vmatpush.bf16.msra.mxu0 %v208
  %502 = vmatpush.bf16.msra.mxu0 %v206
  %503 = vmatmul.bf16.gmra.mxu0 %v493
  %v504 = vpop.f32.mrf.mxu0
  %v505 = vadd.f32 0.0, %v504
  %v506 = vpop.f32.mrf.mxu0
  %507 = vdwg.mxu0
  %508 = vmatpush.bf16.msra.mxu0 0
  %509 = vmatpush.bf16.msra.mxu0 0
  %510 = vmatpush.bf16.msra.mxu0 0
  %511 = vmatpush.bf16.msra.mxu0 0
  %512 = vmatpush.bf16.msra.mxu0 %v213
  %513 = vmatpush.bf16.msra.mxu0 %v211
  %514 = vmatpush.bf16.msra.mxu0 %v209
  %515 = vmatpush.bf16.msra.mxu0 %v207
  %516 = vmatmul.bf16.gmra.mxu0 %v493
  %v517 = vpop.f32.mrf.mxu0
  %v518 = vadd.f32 0.0, %v517
  %v519 = vpop.f32.mrf.mxu0
  %520 = vdwg.mxu0
  %s521 = smul.u32 2, 2
  %s522 = smul.addr %s521, 8
  %s523 = scalar_lea.vmem [#allocation2], %s522
  %v524 = vld [vmem:[%s523] sm:$0xff]
  %v525 = vadd.f32 %v524, %v505
  %s526 = smul.u32 5, 2
  %s527 = smul.addr %s526, 8
  %s528 = scalar_lea.vmem [#allocation2], %s527
  %v529 = vld [vmem:[%s528 + $0x8] sm:$0xff]
  %v530 = vadd.f32 %v529, %v518
  %v531 = vxor.u32 %v525, 2147483648
  %v532 = vmul.f32 %v531, 1.442695
  %v533 = vpow.pop %v532
  %v534 = vadd.f32 %v533, 1.0
  %v535 = vrcp.pop %v534
  %v536 = vmul.f32 %v534, %v535
  %v537 = vsub.f32 1.0, %v536
  %v538 = vmul.f32 %v535, %v537
  %v539 = vadd.f32 %v535, %v538
  %vm540 = vweird.f32 %v534
  %vm541 = vweird.f32 %v535
  %vm542 = vmor %vm540, %vm541
  %v543 = vsel %vm542, %v535, %v539
  %v544 = vand.u32 2147483647, %v534
  %vm545 = vcmp.eq.f32.partialorder %v544, 8.507059e+37
  %v546 = vand.u32 %v534, 2147483648
  %v547 = vor.u32 1.1754944e-38, %v546
  %v548 = vsel %vm545, %v547, %v543
  %v549 = vmul.f32 1.0, %v548
  %v550 = vtanh.pop %v525
  %552 = vrot.lane.b32.xlu0 %v490, 32
  %v553 = vpop.permute.xlu0 %552
  %v555 = vmul.f32 %v549, %v553
  %557 = vrot.lane.b32.xlu0 %v550, 32
  %v558 = vpop.permute.xlu0 %557
  %v560 = vmul.f32 %v549, %v558
  %562 = vrot.lane.b32.xlu0 %v560, 32
  %v563 = vpop.permute.xlu0 %562
  %v565 = vadd.f32 %v555, %v563
  %v566 = vtanh.pop %v565
  %568 = vrot.lane.b32.xlu0 %v566, 32
  %v569 = vpop.permute.xlu0 %568
  %v571 = vmul.f32 %v549, %v569
  %v572 = vxor.u32 %v530, 2147483648
  %v573 = vmul.f32 %v572, 1.442695
  %v574 = vpow.pop %v573
  %v575 = vadd.f32 %v574, 1.0
  %v576 = vrcp.pop %v575
  %v577 = vmul.f32 %v575, %v576
  %v578 = vsub.f32 1.0, %v577
  %v579 = vmul.f32 %v576, %v578
  %v580 = vadd.f32 %v576, %v579
  %vm581 = vweird.f32 %v575
  %vm582 = vweird.f32 %v576
  %vm583 = vmor %vm581, %vm582
  %v584 = vsel %vm583, %v576, %v580
  %v585 = vand.u32 2147483647, %v575
  %vm586 = vcmp.eq.f32.partialorder %v585, 8.507059e+37
  %v587 = vand.u32 %v575, 2147483648
  %v588 = vor.u32 1.1754944e-38, %v587
  %v589 = vsel %vm586, %v588, %v584
  %v590 = vmul.f32 1.0, %v589
  %v591 = vtanh.pop %v530
  %v592 = vmul.f32 %v590, %v490
  %594 = vrot.lane.b32.xlu0 %v591, 32
  %v595 = vpop.permute.xlu0 %594
  %v597 = vmul.f32 %v590, %v595
  %599 = vrot.lane.b32.xlu0 %v597, 32
  %v600 = vpop.permute.xlu0 %599
  %v602 = vadd.f32 %v592, %v600
  %v603 = vtanh.pop %v602
  %605 = vrot.lane.b32.xlu0 %v603, 32
  %v606 = vpop.permute.xlu0 %605
  %v608 = vmul.f32 %v590, %v606
  %610 = vrot.lane.b32.xlu0 %v571, 64
  %v611 = vpop.permute.xlu0 %610
  %s613 = scalar_lea.vmem [#allocation3], 16
  %614 = vst.msk [vmem:[%s613] sm:$0xff] %vm340, %v611
  %616 = vrot.lane.b32.xlu0 %v608, 96
  %v617 = vpop.permute.xlu0 %616
  %s619 = scalar_lea.vmem [#allocation3], 40
  %620 = vst.msk [vmem:[%s619] sm:$0xff] %vm347, %v617
  %v621 = vsel %vm340, %v611, %v617
  %623 = vrot.lane.b32.xlu0 %v565, 96
  %v624 = vpop.permute.xlu0 %623
  %v626 = vsel %vm340, %v624, %v602
  %v627 = vpack.c.bf16 %v621, %v621
  %v629 = vsel %vm222, %v627, 0
  %631 = vmatpush.bf16.msra.mxu0 0
  %632 = vmatpush.bf16.msra.mxu0 0
  %633 = vmatpush.bf16.msra.mxu0 0
  %634 = vmatpush.bf16.msra.mxu0 0
  %635 = vmatpush.bf16.msra.mxu0 %v212
  %636 = vmatpush.bf16.msra.mxu0 %v210
  %637 = vmatpush.bf16.msra.mxu0 %v208
  %638 = vmatpush.bf16.msra.mxu0 %v206
  %639 = vmatmul.bf16.gmra.mxu0 %v629
  %v640 = vpop.f32.mrf.mxu0
  %v641 = vadd.f32 0.0, %v640
  %v642 = vpop.f32.mrf.mxu0
  %643 = vdwg.mxu0
  %644 = vmatpush.bf16.msra.mxu0 0
  %645 = vmatpush.bf16.msra.mxu0 0
  %646 = vmatpush.bf16.msra.mxu0 0
  %647 = vmatpush.bf16.msra.mxu0 0
  %648 = vmatpush.bf16.msra.mxu0 %v213
  %649 = vmatpush.bf16.msra.mxu0 %v211
  %650 = vmatpush.bf16.msra.mxu0 %v209
  %651 = vmatpush.bf16.msra.mxu0 %v207
  %652 = vmatmul.bf16.gmra.mxu0 %v629
  %v653 = vpop.f32.mrf.mxu0
  %v654 = vadd.f32 0.0, %v653
  %v655 = vpop.f32.mrf.mxu0
  %656 = vdwg.mxu0
  %s657 = smul.u32 3, 2
  %s658 = smul.addr %s657, 8
  %s659 = scalar_lea.vmem [#allocation2], %s658
  %v660 = vld [vmem:[%s659] sm:$0xff]
  %v661 = vadd.f32 %v660, %v641
  %s662 = smul.u32 4, 2
  %s663 = smul.addr %s662, 8
  %s664 = scalar_lea.vmem [#allocation2], %s663
  %v665 = vld [vmem:[%s664 + $0x8] sm:$0xff]
  %v666 = vadd.f32 %v665, %v654
  %v667 = vxor.u32 %v661, 2147483648
  %v668 = vmul.f32 %v667, 1.442695
  %v669 = vpow.pop %v668
  %v670 = vadd.f32 %v669, 1.0
  %v671 = vrcp.pop %v670
  %v672 = vmul.f32 %v670, %v671
  %v673 = vsub.f32 1.0, %v672
  %v674 = vmul.f32 %v671, %v673
  %v675 = vadd.f32 %v671, %v674
  %vm676 = vweird.f32 %v670
  %vm677 = vweird.f32 %v671
  %vm678 = vmor %vm676, %vm677
  %v679 = vsel %vm678, %v671, %v675
  %v680 = vand.u32 2147483647, %v670
  %vm681 = vcmp.eq.f32.partialorder %v680, 8.507059e+37
  %v682 = vand.u32 %v670, 2147483648
  %v683 = vor.u32 1.1754944e-38, %v682
  %v684 = vsel %vm681, %v683, %v679
  %v685 = vmul.f32 1.0, %v684
  %v686 = vtanh.pop %v661
  %688 = vrot.lane.b32.xlu0 %v626, 32
  %v689 = vpop.permute.xlu0 %688
  %v691 = vmul.f32 %v685, %v689
  %693 = vrot.lane.b32.xlu0 %v686, 32
  %v694 = vpop.permute.xlu0 %693
  %v696 = vmul.f32 %v685, %v694
  %698 = vrot.lane.b32.xlu0 %v696, 32
  %v699 = vpop.permute.xlu0 %698
  %v701 = vadd.f32 %v691, %v699
  %v702 = vtanh.pop %v701
  %704 = vrot.lane.b32.xlu0 %v702, 32
  %v705 = vpop.permute.xlu0 %704
  %v707 = vmul.f32 %v685, %v705
  %v708 = vxor.u32 %v666, 2147483648
  %v709 = vmul.f32 %v708, 1.442695
  %v710 = vpow.pop %v709
  %v711 = vadd.f32 %v710, 1.0
  %v712 = vrcp.pop %v711
  %v713 = vmul.f32 %v711, %v712
  %v714 = vsub.f32 1.0, %v713
  %v715 = vmul.f32 %v712, %v714
  %v716 = vadd.f32 %v712, %v715
  %vm717 = vweird.f32 %v711
  %vm718 = vweird.f32 %v712
  %vm719 = vmor %vm717, %vm718
  %v720 = vsel %vm719, %v712, %v716
  %v721 = vand.u32 2147483647, %v711
  %vm722 = vcmp.eq.f32.partialorder %v721, 8.507059e+37
  %v723 = vand.u32 %v711, 2147483648
  %v724 = vor.u32 1.1754944e-38, %v723
  %v725 = vsel %vm722, %v724, %v720
  %v726 = vmul.f32 1.0, %v725
  %v727 = vtanh.pop %v666
  %v728 = vmul.f32 %v726, %v626
  %730 = vrot.lane.b32.xlu0 %v727, 32
  %v731 = vpop.permute.xlu0 %730
  %v733 = vmul.f32 %v726, %v731
  %735 = vrot.lane.b32.xlu0 %v733, 32
  %v736 = vpop.permute.xlu0 %735
  %v738 = vadd.f32 %v728, %v736
  %v739 = vtanh.pop %v738
  %741 = vrot.lane.b32.xlu0 %v739, 32
  %v742 = vpop.permute.xlu0 %741
  %v744 = vmul.f32 %v726, %v742
  %746 = vrot.lane.b32.xlu0 %v707, 64
  %v747 = vpop.permute.xlu0 %746
  %s749 = scalar_lea.vmem [#allocation3], 24
  %750 = vst.msk [vmem:[%s749] sm:$0xff] %vm340, %v747
  %752 = vrot.lane.b32.xlu0 %v744, 96
  %v753 = vpop.permute.xlu0 %752
  %s755 = scalar_lea.vmem [#allocation3], 32
  %756 = vst.msk [vmem:[%s755] sm:$0xff] %vm347, %v753
  %v757 = vsel %vm340, %v747, %v753
  %759 = vrot.lane.b32.xlu0 %v701, 96
  %v760 = vpop.permute.xlu0 %759
  %v762 = vsel %vm340, %v760, %v738
  %v763 = vpack.c.bf16 %v757, %v757
  %v765 = vsel %vm222, %v763, 0
  %767 = vmatpush.bf16.msra.mxu0 0
  %768 = vmatpush.bf16.msra.mxu0 0
  %769 = vmatpush.bf16.msra.mxu0 0
  %770 = vmatpush.bf16.msra.mxu0 0
  %771 = vmatpush.bf16.msra.mxu0 %v212
  %772 = vmatpush.bf16.msra.mxu0 %v210
  %773 = vmatpush.bf16.msra.mxu0 %v208
  %774 = vmatpush.bf16.msra.mxu0 %v206
  %775 = vmatmul.bf16.gmra.mxu0 %v765
  %v776 = vpop.f32.mrf.mxu0
  %v777 = vadd.f32 0.0, %v776
  %v778 = vpop.f32.mrf.mxu0
  %779 = vdwg.mxu0
  %780 = vmatpush.bf16.msra.mxu0 0
  %781 = vmatpush.bf16.msra.mxu0 0
  %782 = vmatpush.bf16.msra.mxu0 0
  %783 = vmatpush.bf16.msra.mxu0 0
  %784 = vmatpush.bf16.msra.mxu0 %v213
  %785 = vmatpush.bf16.msra.mxu0 %v211
  %786 = vmatpush.bf16.msra.mxu0 %v209
  %787 = vmatpush.bf16.msra.mxu0 %v207
  %788 = vmatmul.bf16.gmra.mxu0 %v765
  %v789 = vpop.f32.mrf.mxu0
  %v790 = vadd.f32 0.0, %v789
  %v791 = vpop.f32.mrf.mxu0
  %792 = vdwg.mxu0
  %v793 = vld [vmem:[%s664] sm:$0xff]
  %v794 = vadd.f32 %v793, %v777
  %v795 = vld [vmem:[%s659 + $0x8] sm:$0xff]
  %v796 = vadd.f32 %v795, %v790
  %v797 = vxor.u32 %v794, 2147483648
  %v798 = vmul.f32 %v797, 1.442695
  %v799 = vpow.pop %v798
  %v800 = vadd.f32 %v799, 1.0
  %v801 = vrcp.pop %v800
  %v802 = vmul.f32 %v800, %v801
  %v803 = vsub.f32 1.0, %v802
  %v804 = vmul.f32 %v801, %v803
  %v805 = vadd.f32 %v801, %v804
  %vm806 = vweird.f32 %v800
  %vm807 = vweird.f32 %v801
  %vm808 = vmor %vm806, %vm807
  %v809 = vsel %vm808, %v801, %v805
  %v810 = vand.u32 2147483647, %v800
  %vm811 = vcmp.eq.f32.partialorder %v810, 8.507059e+37
  %v812 = vand.u32 %v800, 2147483648
  %v813 = vor.u32 1.1754944e-38, %v812
  %v814 = vsel %vm811, %v813, %v809
  %v815 = vmul.f32 1.0, %v814
  %v816 = vtanh.pop %v794
  %818 = vrot.lane.b32.xlu0 %v762, 32
  %v819 = vpop.permute.xlu0 %818
  %v821 = vmul.f32 %v815, %v819
  %823 = vrot.lane.b32.xlu0 %v816, 32
  %v824 = vpop.permute.xlu0 %823
  %v826 = vmul.f32 %v815, %v824
  %828 = vrot.lane.b32.xlu0 %v826, 32
  %v829 = vpop.permute.xlu0 %828
  %v831 = vadd.f32 %v821, %v829
  %v832 = vtanh.pop %v831
  %834 = vrot.lane.b32.xlu0 %v832, 32
  %v835 = vpop.permute.xlu0 %834
  %v837 = vmul.f32 %v815, %v835
  %v838 = vxor.u32 %v796, 2147483648
  %v839 = vmul.f32 %v838, 1.442695
  %v840 = vpow.pop %v839
  %v841 = vadd.f32 %v840, 1.0
  %v842 = vrcp.pop %v841
  %v843 = vmul.f32 %v841, %v842
  %v844 = vsub.f32 1.0, %v843
  %v845 = vmul.f32 %v842, %v844
  %v846 = vadd.f32 %v842, %v845
  %vm847 = vweird.f32 %v841
  %vm848 = vweird.f32 %v842
  %vm849 = vmor %vm847, %vm848
  %v850 = vsel %vm849, %v842, %v846
  %v851 = vand.u32 2147483647, %v841
  %vm852 = vcmp.eq.f32.partialorder %v851, 8.507059e+37
  %v853 = vand.u32 %v841, 2147483648
  %v854 = vor.u32 1.1754944e-38, %v853
  %v855 = vsel %vm852, %v854, %v850
  %v856 = vmul.f32 1.0, %v855
  %v857 = vtanh.pop %v796
  %v858 = vmul.f32 %v856, %v762
  %860 = vrot.lane.b32.xlu0 %v857, 32
  %v861 = vpop.permute.xlu0 %860
  %v863 = vmul.f32 %v856, %v861
  %865 = vrot.lane.b32.xlu0 %v863, 32
  %v866 = vpop.permute.xlu0 %865
  %v868 = vadd.f32 %v858, %v866
  %v869 = vtanh.pop %v868
  %871 = vrot.lane.b32.xlu0 %v869, 32
  %v872 = vpop.permute.xlu0 %871
  %v874 = vmul.f32 %v856, %v872
  %876 = vrot.lane.b32.xlu0 %v837, 64
  %v877 = vpop.permute.xlu0 %876
  %879 = vst.msk [vmem:[%s755] sm:$0xff] %vm340, %v877
  %881 = vrot.lane.b32.xlu0 %v874, 96
  %v882 = vpop.permute.xlu0 %881
  %884 = vst.msk [vmem:[%s749] sm:$0xff] %vm347, %v882
  %v885 = vsel %vm340, %v877, %v882
  %887 = vrot.lane.b32.xlu0 %v831, 96
  %v888 = vpop.permute.xlu0 %887
  %v890 = vsel %vm340, %v888, %v868
  %v891 = vpack.c.bf16 %v885, %v885
  %v893 = vsel %vm222, %v891, 0
  %895 = vmatpush.bf16.msra.mxu0 0
  %896 = vmatpush.bf16.msra.mxu0 0
  %897 = vmatpush.bf16.msra.mxu0 0
  %898 = vmatpush.bf16.msra.mxu0 0
  %899 = vmatpush.bf16.msra.mxu0 %v212
  %900 = vmatpush.bf16.msra.mxu0 %v210
  %901 = vmatpush.bf16.msra.mxu0 %v208
  %902 = vmatpush.bf16.msra.mxu0 %v206
  %903 = vmatmul.bf16.gmra.mxu0 %v893
  %v904 = vpop.f32.mrf.mxu0
  %v905 = vadd.f32 0.0, %v904
  %v906 = vpop.f32.mrf.mxu0
  %907 = vdwg.mxu0
  %908 = vmatpush.bf16.msra.mxu0 0
  %909 = vmatpush.bf16.msra.mxu0 0
  %910 = vmatpush.bf16.msra.mxu0 0
  %911 = vmatpush.bf16.msra.mxu0 0
  %912 = vmatpush.bf16.msra.mxu0 %v213
  %913 = vmatpush.bf16.msra.mxu0 %v211
  %914 = vmatpush.bf16.msra.mxu0 %v209
  %915 = vmatpush.bf16.msra.mxu0 %v207
  %916 = vmatmul.bf16.gmra.mxu0 %v893
  %v917 = vpop.f32.mrf.mxu0
  %v918 = vadd.f32 0.0, %v917
  %v919 = vpop.f32.mrf.mxu0
  %920 = vdwg.mxu0
  %v921 = vld [vmem:[%s528] sm:$0xff]
  %v922 = vadd.f32 %v921, %v905
  %v923 = vld [vmem:[%s523 + $0x8] sm:$0xff]
  %v924 = vadd.f32 %v923, %v918
  %v925 = vxor.u32 %v922, 2147483648
  %v926 = vmul.f32 %v925, 1.442695
  %v927 = vpow.pop %v926
  %v928 = vadd.f32 %v927, 1.0
  %v929 = vrcp.pop %v928
  %v930 = vmul.f32 %v928, %v929
  %v931 = vsub.f32 1.0, %v930
  %v932 = vmul.f32 %v929, %v931
  %v933 = vadd.f32 %v929, %v932
  %vm934 = vweird.f32 %v928
  %vm935 = vweird.f32 %v929
  %vm936 = vmor %vm934, %vm935
  %v937 = vsel %vm936, %v929, %v933
  %v938 = vand.u32 2147483647, %v928
  %vm939 = vcmp.eq.f32.partialorder %v938, 8.507059e+37
  %v940 = vand.u32 %v928, 2147483648
  %v941 = vor.u32 1.1754944e-38, %v940
  %v942 = vsel %vm939, %v941, %v937
  %v943 = vmul.f32 1.0, %v942
  %v944 = vtanh.pop %v922
  %946 = vrot.lane.b32.xlu0 %v890, 32
  %v947 = vpop.permute.xlu0 %946
  %v949 = vmul.f32 %v943, %v947
  %951 = vrot.lane.b32.xlu0 %v944, 32
  %v952 = vpop.permute.xlu0 %951
  %v954 = vmul.f32 %v943, %v952
  %956 = vrot.lane.b32.xlu0 %v954, 32
  %v957 = vpop.permute.xlu0 %956
  %v959 = vadd.f32 %v949, %v957
  %v960 = vtanh.pop %v959
  %962 = vrot.lane.b32.xlu0 %v960, 32
  %v963 = vpop.permute.xlu0 %962
  %v965 = vmul.f32 %v943, %v963
  %v966 = vxor.u32 %v924, 2147483648
  %v967 = vmul.f32 %v966, 1.442695
  %v968 = vpow.pop %v967
  %v969 = vadd.f32 %v968, 1.0
  %v970 = vrcp.pop %v969
  %v971 = vmul.f32 %v969, %v970
  %v972 = vsub.f32 1.0, %v971
  %v973 = vmul.f32 %v970, %v972
  %v974 = vadd.f32 %v970, %v973
  %vm975 = vweird.f32 %v969
  %vm976 = vweird.f32 %v970
  %vm977 = vmor %vm975, %vm976
  %v978 = vsel %vm977, %v970, %v974
  %v979 = vand.u32 2147483647, %v969
  %vm980 = vcmp.eq.f32.partialorder %v979, 8.507059e+37
  %v981 = vand.u32 %v969, 2147483648
  %v982 = vor.u32 1.1754944e-38, %v981
  %v983 = vsel %vm980, %v982, %v978
  %v984 = vmul.f32 1.0, %v983
  %v985 = vtanh.pop %v924
  %v986 = vmul.f32 %v984, %v890
  %988 = vrot.lane.b32.xlu0 %v985, 32
  %v989 = vpop.permute.xlu0 %988
  %v991 = vmul.f32 %v984, %v989
  %993 = vrot.lane.b32.xlu0 %v991, 32
  %v994 = vpop.permute.xlu0 %993
  %v996 = vadd.f32 %v986, %v994
  %v997 = vtanh.pop %v996
  %999 = vrot.lane.b32.xlu0 %v997, 32
  %v1000 = vpop.permute.xlu0 %999
  %v1002 = vmul.f32 %v984, %v1000
  %1004 = vrot.lane.b32.xlu0 %v965, 64
  %v1005 = vpop.permute.xlu0 %1004
  %1007 = vst.msk [vmem:[%s619] sm:$0xff] %vm340, %v1005
  %1009 = vrot.lane.b32.xlu0 %v1002, 96
  %v1010 = vpop.permute.xlu0 %1009
  %1012 = vst.msk [vmem:[%s613] sm:$0xff] %vm347, %v1010
  %v1013 = vsel %vm340, %v1005, %v1010
  %1015 = vrot.lane.b32.xlu0 %v959, 96
  %v1016 = vpop.permute.xlu0 %1015
  %v1018 = vsel %vm340, %v1016, %v996
  %v1019 = vpack.c.bf16 %v1013, %v1013
  %v1021 = vsel %vm222, %v1019, 0
  %1023 = vmatpush.bf16.msra.mxu0 0
  %1024 = vmatpush.bf16.msra.mxu0 0
  %1025 = vmatpush.bf16.msra.mxu0 0
  %1026 = vmatpush.bf16.msra.mxu0 0
  %1027 = vmatpush.bf16.msra.mxu0 %v212
  %1028 = vmatpush.bf16.msra.mxu0 %v210
  %1029 = vmatpush.bf16.msra.mxu0 %v208
  %1030 = vmatpush.bf16.msra.mxu0 %v206
  %1031 = vmatmul.bf16.gmra.mxu0 %v1021
  %v1032 = vpop.f32.mrf.mxu0
  %v1033 = vadd.f32 0.0, %v1032
  %v1034 = vpop.f32.mrf.mxu0
  %1035 = vdwg.mxu0
  %1036 = vmatpush.bf16.msra.mxu0 0
  %1037 = vmatpush.bf16.msra.mxu0 0
  %1038 = vmatpush.bf16.msra.mxu0 0
  %1039 = vmatpush.bf16.msra.mxu0 0
  %1040 = vmatpush.bf16.msra.mxu0 %v213
  %1041 = vmatpush.bf16.msra.mxu0 %v211
  %1042 = vmatpush.bf16.msra.mxu0 %v209
  %1043 = vmatpush.bf16.msra.mxu0 %v207
  %1044 = vmatmul.bf16.gmra.mxu0 %v1021
  %v1045 = vpop.f32.mrf.mxu0
  %v1046 = vadd.f32 0.0, %v1045
  %v1047 = vpop.f32.mrf.mxu0
  %1048 = vdwg.mxu0
  %v1049 = vld [vmem:[%s392] sm:$0xff]
  %v1050 = vadd.f32 %v1049, %v1033
  %v1051 = vld [vmem:[%s387 + $0x8] sm:$0xff]
  %v1052 = vadd.f32 %v1051, %v1046
  %v1053 = vxor.u32 %v1050, 2147483648
  %v1054 = vmul.f32 %v1053, 1.442695
  %v1055 = vpow.pop %v1054
  %v1056 = vadd.f32 %v1055, 1.0
  %v1057 = vrcp.pop %v1056
  %v1058 = vmul.f32 %v1056, %v1057
  %v1059 = vsub.f32 1.0, %v1058
  %v1060 = vmul.f32 %v1057, %v1059
  %v1061 = vadd.f32 %v1057, %v1060
  %vm1062 = vweird.f32 %v1056
  %vm1063 = vweird.f32 %v1057
  %vm1064 = vmor %vm1062, %vm1063
  %v1065 = vsel %vm1064, %v1057, %v1061
  %v1066 = vand.u32 2147483647, %v1056
  %vm1067 = vcmp.eq.f32.partialorder %v1066, 8.507059e+37
  %v1068 = vand.u32 %v1056, 2147483648
  %v1069 = vor.u32 1.1754944e-38, %v1068
  %v1070 = vsel %vm1067, %v1069, %v1065
  %v1071 = vmul.f32 1.0, %v1070
  %v1072 = vtanh.pop %v1050
  %1074 = vrot.lane.b32.xlu0 %v1018, 32
  %v1075 = vpop.permute.xlu0 %1074
  %v1077 = vmul.f32 %v1071, %v1075
  %1079 = vrot.lane.b32.xlu0 %v1072, 32
  %v1080 = vpop.permute.xlu0 %1079
  %v1082 = vmul.f32 %v1071, %v1080
  %1084 = vrot.lane.b32.xlu0 %v1082, 32
  %v1085 = vpop.permute.xlu0 %1084
  %v1087 = vadd.f32 %v1077, %v1085
  %v1088 = vtanh.pop %v1087
  %1090 = vrot.lane.b32.xlu0 %v1088, 32
  %v1091 = vpop.permute.xlu0 %1090
  %v1093 = vmul.f32 %v1071, %v1091
  %v1094 = vxor.u32 %v1052, 2147483648
  %v1095 = vmul.f32 %v1094, 1.442695
  %v1096 = vpow.pop %v1095
  %v1097 = vadd.f32 %v1096, 1.0
  %v1098 = vrcp.pop %v1097
  %v1099 = vmul.f32 %v1097, %v1098
  %v1100 = vsub.f32 1.0, %v1099
  %v1101 = vmul.f32 %v1098, %v1100
  %v1102 = vadd.f32 %v1098, %v1101
  %vm1103 = vweird.f32 %v1097
  %vm1104 = vweird.f32 %v1098
  %vm1105 = vmor %vm1103, %vm1104
  %v1106 = vsel %vm1105, %v1098, %v1102
  %v1107 = vand.u32 2147483647, %v1097
  %vm1108 = vcmp.eq.f32.partialorder %v1107, 8.507059e+37
  %v1109 = vand.u32 %v1097, 2147483648
  %v1110 = vor.u32 1.1754944e-38, %v1109
  %v1111 = vsel %vm1108, %v1110, %v1106
  %v1112 = vmul.f32 1.0, %v1111
  %v1113 = vtanh.pop %v1052
  %v1114 = vmul.f32 %v1112, %v1018
  %1116 = vrot.lane.b32.xlu0 %v1113, 32
  %v1117 = vpop.permute.xlu0 %1116
  %v1119 = vmul.f32 %v1112, %v1117
  %1121 = vrot.lane.b32.xlu0 %v1119, 32
  %v1122 = vpop.permute.xlu0 %1121
  %v1124 = vadd.f32 %v1114, %v1122
  %v1125 = vtanh.pop %v1124
  %1127 = vrot.lane.b32.xlu0 %v1125, 32
  %v1128 = vpop.permute.xlu0 %1127
  %v1130 = vmul.f32 %v1112, %v1128
  %1132 = vrot.lane.b32.xlu0 %v1093, 64
  %v1133 = vpop.permute.xlu0 %1132
  %1135 = vst.msk [vmem:[%s483] sm:$0xff] %vm340, %v1133
  %1137 = vrot.lane.b32.xlu0 %v1130, 96
  %v1138 = vpop.permute.xlu0 %1137
  %1140 = vst.msk [vmem:[%s477] sm:$0xff] %vm347, %v1138
  %v1141 = vsel %vm340, %v1133, %v1138
  %1143 = vrot.lane.b32.xlu0 %v1087, 96
  %v1144 = vpop.permute.xlu0 %1143
  %v1146 = vsel %vm340, %v1144, %v1124
  %v1147 = vpack.c.bf16 %v1141, %v1141
  %v1149 = vsel %vm222, %v1147, 0
  %1151 = vmatpush.bf16.msra.mxu0 0
  %1152 = vmatpush.bf16.msra.mxu0 0
  %1153 = vmatpush.bf16.msra.mxu0 0
  %1154 = vmatpush.bf16.msra.mxu0 0
  %1155 = vmatpush.bf16.msra.mxu0 %v212
  %1156 = vmatpush.bf16.msra.mxu0 %v210
  %1157 = vmatpush.bf16.msra.mxu0 %v208
  %1158 = vmatpush.bf16.msra.mxu0 %v206
  %1159 = vmatmul.bf16.gmra.mxu0 %v1149
  %v1160 = vpop.f32.mrf.mxu0
  %v1161 = vadd.f32 0.0, %v1160
  %v1162 = vpop.f32.mrf.mxu0
  %1163 = vdwg.mxu0
  %1164 = vmatpush.bf16.msra.mxu0 0
  %1165 = vmatpush.bf16.msra.mxu0 0
  %1166 = vmatpush.bf16.msra.mxu0 0
  %1167 = vmatpush.bf16.msra.mxu0 0
  %1168 = vmatpush.bf16.msra.mxu0 %v213
  %1169 = vmatpush.bf16.msra.mxu0 %v211
  %1170 = vmatpush.bf16.msra.mxu0 %v209
  %1171 = vmatpush.bf16.msra.mxu0 %v207
  %1172 = vmatmul.bf16.gmra.mxu0 %v1149
  %v1173 = vpop.f32.mrf.mxu0
  %v1174 = vadd.f32 0.0, %v1173
  %v1175 = vpop.f32.mrf.mxu0
  %1176 = vdwg.mxu0
  %v1177 = vld [vmem:[%s259] sm:$0xff]
  %v1178 = vadd.f32 %v1177, %v1161
  %v1179 = vld [vmem:[%s254 + $0x8] sm:$0xff]
  %v1180 = vadd.f32 %v1179, %v1174
  %v1181 = vxor.u32 %v1178, 2147483648
  %v1182 = vmul.f32 %v1181, 1.442695
  %v1183 = vpow.pop %v1182
  %v1184 = vadd.f32 %v1183, 1.0
  %v1185 = vrcp.pop %v1184
  %v1186 = vmul.f32 %v1184, %v1185
  %v1187 = vsub.f32 1.0, %v1186
  %v1188 = vmul.f32 %v1185, %v1187
  %v1189 = vadd.f32 %v1185, %v1188
  %vm1190 = vweird.f32 %v1184
  %vm1191 = vweird.f32 %v1185
  %vm1192 = vmor %vm1190, %vm1191
  %v1193 = vsel %vm1192, %v1185, %v1189
  %v1194 = vand.u32 2147483647, %v1184
  %vm1195 = vcmp.eq.f32.partialorder %v1194, 8.507059e+37
  %v1196 = vand.u32 %v1184, 2147483648
  %v1197 = vor.u32 1.1754944e-38, %v1196
  %v1198 = vsel %vm1195, %v1197, %v1193
  %v1199 = vmul.f32 1.0, %v1198
  %v1200 = vtanh.pop %v1178
  %1202 = vrot.lane.b32.xlu0 %v1146, 32
  %v1203 = vpop.permute.xlu0 %1202
  %v1205 = vmul.f32 %v1199, %v1203
  %1207 = vrot.lane.b32.xlu0 %v1200, 32
  %v1208 = vpop.permute.xlu0 %1207
  %v1210 = vmul.f32 %v1199, %v1208
  %1212 = vrot.lane.b32.xlu0 %v1210, 32
  %v1213 = vpop.permute.xlu0 %1212
  %v1215 = vadd.f32 %v1205, %v1213
  %v1216 = vtanh.pop %v1215
  %1218 = vrot.lane.b32.xlu0 %v1216, 32
  %v1219 = vpop.permute.xlu0 %1218
  %v1221 = vmul.f32 %v1199, %v1219
  %v1222 = vxor.u32 %v1180, 2147483648
  %v1223 = vmul.f32 %v1222, 1.442695
  %v1224 = vpow.pop %v1223
  %v1225 = vadd.f32 %v1224, 1.0
  %v1226 = vrcp.pop %v1225
  %v1227 = vmul.f32 %v1225, %v1226
  %v1228 = vsub.f32 1.0, %v1227
  %v1229 = vmul.f32 %v1226, %v1228
  %v1230 = vadd.f32 %v1226, %v1229
  %vm1231 = vweird.f32 %v1225
  %vm1232 = vweird.f32 %v1226
  %vm1233 = vmor %vm1231, %vm1232
  %v1234 = vsel %vm1233, %v1226, %v1230
  %v1235 = vand.u32 2147483647, %v1225
  %vm1236 = vcmp.eq.f32.partialorder %v1235, 8.507059e+37
  %v1237 = vand.u32 %v1225, 2147483648
  %v1238 = vor.u32 1.1754944e-38, %v1237
  %v1239 = vsel %vm1236, %v1238, %v1234
  %v1240 = vmul.f32 1.0, %v1239
  %v1241 = vtanh.pop %v1180
  %v1242 = vmul.f32 %v1240, %v1146
  %1244 = vrot.lane.b32.xlu0 %v1241, 32
  %v1245 = vpop.permute.xlu0 %1244
  %v1247 = vmul.f32 %v1240, %v1245
  %1249 = vrot.lane.b32.xlu0 %v1247, 32
  %v1250 = vpop.permute.xlu0 %1249
  %v1252 = vadd.f32 %v1242, %v1250
  %v1253 = vtanh.pop %v1252
  %1255 = vrot.lane.b32.xlu0 %v1253, 32
  %v1256 = vpop.permute.xlu0 %1255
  %v1258 = vmul.f32 %v1240, %v1256
  %1260 = vrot.lane.b32.xlu0 %v1221, 64
  %v1261 = vpop.permute.xlu0 %1260
  %1263 = vst.msk [vmem:[%s346] sm:$0xff] %vm340, %v1261
  %1265 = vrot.lane.b32.xlu0 %v1258, 96
  %v1266 = vpop.permute.xlu0 %1265
  %1268 = vst.msk [vmem:[#allocation3] sm:$0xff] %vm347, %v1266
  %v1269 = vld [vmem:[%s4] sm:$0xff]
  %v1270 = vld [vmem:[%s4 + $0x8] sm:$0xff]
  %v1271 = vld [vmem:[%s4 + $0x10] sm:$0xff]
  %v1272 = vld [vmem:[%s4 + $0x18] sm:$0xff]
  %v1273 = vld [vmem:[%s4 + $0x20] sm:$0xff]
  %v1274 = vld [vmem:[%s4 + $0x28] sm:$0xff]
  %v1275 = vld [vmem:[%s4 + $0x30] sm:$0xff]
  %v1276 = vld [vmem:[%s4 + $0x38] sm:$0xff]
  %v1277 = vld [vmem:[%s5] sm:$0xff]
  %v1278 = vld [vmem:[%s5 + $0x8] sm:$0xff]
  %v1279 = vld [vmem:[%s5 + $0x10] sm:$0xff]
  %v1280 = vld [vmem:[%s5 + $0x18] sm:$0xff]
  %v1281 = vld [vmem:[%s5 + $0x20] sm:$0xff]
  %v1282 = vld [vmem:[%s5 + $0x28] sm:$0xff]
  %v1283 = vld [vmem:[%s5 + $0x30] sm:$0xff]
  %v1284 = vld [vmem:[%s5 + $0x38] sm:$0xff]
  %v1285 = vld [vmem:[%s6] sm:$0x3]
  %v1286 = vld [vmem:[#allocation3] sm:$0xff]
  %v1287 = vld [vmem:[#allocation3 + $0x8] sm:$0xff]
  %v1288 = vld [vmem:[#allocation3 + $0x10] sm:$0xff]
  %v1289 = vld [vmem:[#allocation3 + $0x18] sm:$0xff]
  %v1290 = vld [vmem:[#allocation3 + $0x20] sm:$0xff]
  %v1291 = vld [vmem:[#allocation3 + $0x28] sm:$0xff]
  %v1292 = vld [vmem:[#allocation3 + $0x30] sm:$0xff]
  %v1293 = vld [vmem:[#allocation3 + $0x38] sm:$0xff]
  %v1294 = vpack.c.bf16 %v1287, %v1286
  %v1295 = vpack.c.bf16 %v1289, %v1288
  %v1296 = vpack.c.bf16 %v1291, %v1290
  %v1297 = vpack.c.bf16 %v1293, %v1292
  %v1299 = vperm.slane %v1285, 0
  %v1300 = vperm.slane %v1285, 1
  %v1311 = vunpack.c.l.b16 %v1269
  %v1312 = vunpack.c.h.b16 %v1269
  %v1313 = vunpack.c.l.b16 %v1270
  %v1314 = vunpack.c.h.b16 %v1270
  %v1315 = vunpack.c.l.b16 %v1271
  %v1316 = vunpack.c.h.b16 %v1271
  %v1317 = vunpack.c.l.b16 %v1272
  %v1318 = vunpack.c.h.b16 %v1272
  %v1319 = vunpack.c.l.b16 %v1273
  %v1320 = vunpack.c.h.b16 %v1273
  %v1321 = vunpack.c.l.b16 %v1274
  %v1322 = vunpack.c.h.b16 %v1274
  %v1323 = vunpack.c.l.b16 %v1275
  %v1324 = vunpack.c.h.b16 %v1275
  %v1325 = vunpack.c.l.b16 %v1276
  %v1326 = vunpack.c.h.b16 %v1276
  %v1327 = vpack.c.b16 %v1313, %v1311
  %v1328 = vpack.c.b16 %v1314, %v1312
  %v1329 = vpack.c.b16 %v1317, %v1315
  %v1330 = vpack.c.b16 %v1318, %v1316
  %v1331 = vpack.c.b16 %v1321, %v1319
  %v1332 = vpack.c.b16 %v1322, %v1320
  %v1333 = vpack.c.b16 %v1325, %v1323
  %v1334 = vpack.c.b16 %v1326, %v1324
  %v1344 = vsel %vm222, %v1294, 0
  %v1347 = vsel %vm222, %v1295, 0
  %v1350 = vsel %vm222, %v1296, 0
  %v1353 = vsel %vm222, %v1297, 0
  %1355 = vmatpush.bf16.msra.mxu0 0
  %1356 = vmatpush.bf16.msra.mxu0 0
  %1357 = vmatpush.bf16.msra.mxu0 0
  %1358 = vmatpush.bf16.msra.mxu0 0
  %1359 = vmatpush.bf16.msra.mxu0 %v1333
  %1360 = vmatpush.bf16.msra.mxu0 %v1331
  %1361 = vmatpush.bf16.msra.mxu0 %v1329
  %1362 = vmatpush.bf16.msra.mxu0 %v1327
  %1363 = vmatmul.bf16.gmra.mxu0 %v1344
  %v1364 = vpop.f32.mrf.mxu0
  %v1365 = vadd.f32 %v1299, %v1364
  %v1366 = vpop.f32.mrf.mxu0
  %v1367 = vadd.f32 %v1299, %v1366
  %1368 = vmatmul.bf16.gmra.mxu0 %v1347
  %v1369 = vpop.f32.mrf.mxu0
  %v1370 = vadd.f32 %v1299, %v1369
  %v1371 = vpop.f32.mrf.mxu0
  %v1372 = vadd.f32 %v1299, %v1371
  %1373 = vmatmul.bf16.gmra.mxu0 %v1350
  %v1374 = vpop.f32.mrf.mxu0
  %v1375 = vadd.f32 %v1299, %v1374
  %v1376 = vpop.f32.mrf.mxu0
  %v1377 = vadd.f32 %v1299, %v1376
  %1378 = vmatmul.bf16.gmra.mxu0 %v1353
  %v1379 = vpop.f32.mrf.mxu0
  %v1380 = vadd.f32 %v1299, %v1379
  %v1381 = vpop.f32.mrf.mxu0
  %v1382 = vadd.f32 %v1299, %v1381
  %1383 = vdwg.mxu0
  %1384 = vmatpush.bf16.msra.mxu0 0
  %1385 = vmatpush.bf16.msra.mxu0 0
  %1386 = vmatpush.bf16.msra.mxu0 0
  %1387 = vmatpush.bf16.msra.mxu0 0
  %1388 = vmatpush.bf16.msra.mxu0 %v1334
  %1389 = vmatpush.bf16.msra.mxu0 %v1332
  %1390 = vmatpush.bf16.msra.mxu0 %v1330
  %1391 = vmatpush.bf16.msra.mxu0 %v1328
  %1392 = vmatmul.bf16.gmra.mxu0 %v1344
  %v1393 = vpop.f32.mrf.mxu0
  %v1394 = vadd.f32 %v1300, %v1393
  %v1395 = vpop.f32.mrf.mxu0
  %v1396 = vadd.f32 %v1300, %v1395
  %1397 = vmatmul.bf16.gmra.mxu0 %v1347
  %v1398 = vpop.f32.mrf.mxu0
  %v1399 = vadd.f32 %v1300, %v1398
  %v1400 = vpop.f32.mrf.mxu0
  %v1401 = vadd.f32 %v1300, %v1400
  %1402 = vmatmul.bf16.gmra.mxu0 %v1350
  %v1403 = vpop.f32.mrf.mxu0
  %v1404 = vadd.f32 %v1300, %v1403
  %v1405 = vpop.f32.mrf.mxu0
  %v1406 = vadd.f32 %v1300, %v1405
  %1407 = vmatmul.bf16.gmra.mxu0 %v1353
  %v1408 = vpop.f32.mrf.mxu0
  %v1409 = vadd.f32 %v1300, %v1408
  %v1410 = vpop.f32.mrf.mxu0
  %v1411 = vadd.f32 %v1300, %v1410
  %1412 = vdwg.mxu0
  %1413 = vst [vmem:[#allocation2] sm:$0xff] %v1365
  %1414 = vst [vmem:[#allocation2 + $0x8] sm:$0xff] %v1394
  %1415 = vst [vmem:[#allocation2 + $0x10] sm:$0xff] %v1367
  %1416 = vst [vmem:[#allocation2 + $0x18] sm:$0xff] %v1396
  %1417 = vst [vmem:[#allocation2 + $0x20] sm:$0xff] %v1370
  %1418 = vst [vmem:[#allocation2 + $0x28] sm:$0xff] %v1399
  %1419 = vst [vmem:[#allocation2 + $0x30] sm:$0xff] %v1372
  %1420 = vst [vmem:[#allocation2 + $0x38] sm:$0xff] %v1401
  %1421 = vst [vmem:[#allocation2 + $0x40] sm:$0xff] %v1375
  %1422 = vst [vmem:[#allocation2 + $0x48] sm:$0xff] %v1404
  %1423 = vst [vmem:[#allocation2 + $0x50] sm:$0xff] %v1377
  %1424 = vst [vmem:[#allocation2 + $0x58] sm:$0xff] %v1406
  %1425 = vst [vmem:[#allocation2 + $0x60] sm:$0xff] %v1380
  %1426 = vst [vmem:[#allocation2 + $0x68] sm:$0xff] %v1409
  %1427 = vst [vmem:[#allocation2 + $0x70] sm:$0xff] %v1382
  %1428 = vst [vmem:[#allocation2 + $0x78] sm:$0xff] %v1411
  %v1437 = vunpack.c.l.b16 %v1277
  %v1438 = vunpack.c.h.b16 %v1277
  %v1439 = vunpack.c.l.b16 %v1278
  %v1440 = vunpack.c.h.b16 %v1278
  %v1441 = vunpack.c.l.b16 %v1279
  %v1442 = vunpack.c.h.b16 %v1279
  %v1443 = vunpack.c.l.b16 %v1280
  %v1444 = vunpack.c.h.b16 %v1280
  %v1445 = vunpack.c.l.b16 %v1281
  %v1446 = vunpack.c.h.b16 %v1281
  %v1447 = vunpack.c.l.b16 %v1282
  %v1448 = vunpack.c.h.b16 %v1282
  %v1449 = vunpack.c.l.b16 %v1283
  %v1450 = vunpack.c.h.b16 %v1283
  %v1451 = vunpack.c.l.b16 %v1284
  %v1452 = vunpack.c.h.b16 %v1284
  %v1453 = vpack.c.b16 %v1439, %v1437
  %v1454 = vpack.c.b16 %v1440, %v1438
  %v1455 = vpack.c.b16 %v1443, %v1441
  %v1456 = vpack.c.b16 %v1444, %v1442
  %v1457 = vpack.c.b16 %v1447, %v1445
  %v1458 = vpack.c.b16 %v1448, %v1446
  %v1459 = vpack.c.b16 %v1451, %v1449
  %v1460 = vpack.c.b16 %v1452, %v1450
  %1469 = vmatpush.bf16.msra.mxu0 0
  %1470 = vmatpush.bf16.msra.mxu0 0
  %1471 = vmatpush.bf16.msra.mxu0 0
  %1472 = vmatpush.bf16.msra.mxu0 0
  %1473 = vmatpush.bf16.msra.mxu0 %v1459
  %1474 = vmatpush.bf16.msra.mxu0 %v1457
  %1475 = vmatpush.bf16.msra.mxu0 %v1455
  %1476 = vmatpush.bf16.msra.mxu0 %v1453
  %1477 = vmatmul.bf16.gmra.mxu0 %v224
  %v1478 = vpop.f32.mrf.mxu0
  %v1479 = vadd.f32 0.0, %v1478
  %v1480 = vpop.f32.mrf.mxu0
  %1481 = vdwg.mxu0
  %1482 = vmatpush.bf16.msra.mxu0 0
  %1483 = vmatpush.bf16.msra.mxu0 0
  %1484 = vmatpush.bf16.msra.mxu0 0
  %1485 = vmatpush.bf16.msra.mxu0 0
  %1486 = vmatpush.bf16.msra.mxu0 %v1460
  %1487 = vmatpush.bf16.msra.mxu0 %v1458
  %1488 = vmatpush.bf16.msra.mxu0 %v1456
  %1489 = vmatpush.bf16.msra.mxu0 %v1454
  %1490 = vmatmul.bf16.gmra.mxu0 %v224
  %v1491 = vpop.f32.mrf.mxu0
  %v1492 = vadd.f32 0.0, %v1491
  %v1493 = vpop.f32.mrf.mxu0
  %1494 = vdwg.mxu0
  %v1495 = vld [vmem:[%s254] sm:$0xff]
  %v1496 = vadd.f32 %v1495, %v1479
  %v1497 = vld [vmem:[%s259 + $0x8] sm:$0xff]
  %v1498 = vadd.f32 %v1497, %v1492
  %v1499 = vxor.u32 %v1496, 2147483648
  %v1500 = vmul.f32 %v1499, 1.442695
  %v1501 = vpow.pop %v1500
  %v1502 = vadd.f32 %v1501, 1.0
  %v1503 = vrcp.pop %v1502
  %v1504 = vmul.f32 %v1502, %v1503
  %v1505 = vsub.f32 1.0, %v1504
  %v1506 = vmul.f32 %v1503, %v1505
  %v1507 = vadd.f32 %v1503, %v1506
  %vm1508 = vweird.f32 %v1502
  %vm1509 = vweird.f32 %v1503
  %vm1510 = vmor %vm1508, %vm1509
  %v1511 = vsel %vm1510, %v1503, %v1507
  %v1512 = vand.u32 2147483647, %v1502
  %vm1513 = vcmp.eq.f32.partialorder %v1512, 8.507059e+37
  %v1514 = vand.u32 %v1502, 2147483648
  %v1515 = vor.u32 1.1754944e-38, %v1514
  %v1516 = vsel %vm1513, %v1515, %v1511
  %v1517 = vmul.f32 1.0, %v1516
  %v1518 = vtanh.pop %v1496
  %v1519 = vmul.f32 %v1517, 0.0
  %1521 = vrot.lane.b32.xlu0 %v1518, 32
  %v1522 = vpop.permute.xlu0 %1521
  %v1524 = vmul.f32 %v1517, %v1522
  %1526 = vrot.lane.b32.xlu0 %v1524, 32
  %v1527 = vpop.permute.xlu0 %1526
  %v1529 = vadd.f32 %v1519, %v1527
  %v1530 = vtanh.pop %v1529
  %1532 = vrot.lane.b32.xlu0 %v1530, 32
  %v1533 = vpop.permute.xlu0 %1532
  %v1535 = vmul.f32 %v1517, %v1533
  %v1536 = vxor.u32 %v1498, 2147483648
  %v1537 = vmul.f32 %v1536, 1.442695
  %v1538 = vpow.pop %v1537
  %v1539 = vadd.f32 %v1538, 1.0
  %v1540 = vrcp.pop %v1539
  %v1541 = vmul.f32 %v1539, %v1540
  %v1542 = vsub.f32 1.0, %v1541
  %v1543 = vmul.f32 %v1540, %v1542
  %v1544 = vadd.f32 %v1540, %v1543
  %vm1545 = vweird.f32 %v1539
  %vm1546 = vweird.f32 %v1540
  %vm1547 = vmor %vm1545, %vm1546
  %v1548 = vsel %vm1547, %v1540, %v1544
  %v1549 = vand.u32 2147483647, %v1539
  %vm1550 = vcmp.eq.f32.partialorder %v1549, 8.507059e+37
  %v1551 = vand.u32 %v1539, 2147483648
  %v1552 = vor.u32 1.1754944e-38, %v1551
  %v1553 = vsel %vm1550, %v1552, %v1548
  %v1554 = vmul.f32 1.0, %v1553
  %v1555 = vtanh.pop %v1498
  %v1556 = vmul.f32 %v1554, 0.0
  %1558 = vrot.lane.b32.xlu0 %v1555, 32
  %v1559 = vpop.permute.xlu0 %1558
  %v1561 = vmul.f32 %v1554, %v1559
  %1563 = vrot.lane.b32.xlu0 %v1561, 32
  %v1564 = vpop.permute.xlu0 %1563
  %v1566 = vadd.f32 %v1556, %v1564
  %v1567 = vtanh.pop %v1566
  %1569 = vrot.lane.b32.xlu0 %v1567, 32
  %v1570 = vpop.permute.xlu0 %1569
  %v1572 = vmul.f32 %v1554, %v1570
  %1574 = vrot.lane.b32.xlu0 %v1535, 64
  %v1575 = vpop.permute.xlu0 %1574
  %1577 = vst.msk [vmem:[#allocation3] sm:$0xff] %vm340, %v1575
  %1579 = vrot.lane.b32.xlu0 %v1572, 96
  %v1580 = vpop.permute.xlu0 %1579
  %1582 = vst.msk [vmem:[%s346] sm:$0xff] %vm347, %v1580
  %v1583 = vsel %vm340, %v1575, %v1580
  %1585 = vrot.lane.b32.xlu0 %v1529, 96
  %v1586 = vpop.permute.xlu0 %1585
  %v1588 = vsel %vm340, %v1586, %v1566
  %v1589 = vpack.c.bf16 %v1583, %v1583
  %v1591 = vsel %vm222, %v1589, 0
  %1593 = vmatpush.bf16.msra.mxu0 0
  %1594 = vmatpush.bf16.msra.mxu0 0
  %1595 = vmatpush.bf16.msra.mxu0 0
  %1596 = vmatpush.bf16.msra.mxu0 0
  %1597 = vmatpush.bf16.msra.mxu0 %v1459
  %1598 = vmatpush.bf16.msra.mxu0 %v1457
  %1599 = vmatpush.bf16.msra.mxu0 %v1455
  %1600 = vmatpush.bf16.msra.mxu0 %v1453
  %1601 = vmatmul.bf16.gmra.mxu0 %v1591
  %v1602 = vpop.f32.mrf.mxu0
  %v1603 = vadd.f32 0.0, %v1602
  %v1604 = vpop.f32.mrf.mxu0
  %1605 = vdwg.mxu0
  %1606 = vmatpush.bf16.msra.mxu0 0
  %1607 = vmatpush.bf16.msra.mxu0 0
  %1608 = vmatpush.bf16.msra.mxu0 0
  %1609 = vmatpush.bf16.msra.mxu0 0
  %1610 = vmatpush.bf16.msra.mxu0 %v1460
  %1611 = vmatpush.bf16.msra.mxu0 %v1458
  %1612 = vmatpush.bf16.msra.mxu0 %v1456
  %1613 = vmatpush.bf16.msra.mxu0 %v1454
  %1614 = vmatmul.bf16.gmra.mxu0 %v1591
  %v1615 = vpop.f32.mrf.mxu0
  %v1616 = vadd.f32 0.0, %v1615
  %v1617 = vpop.f32.mrf.mxu0
  %1618 = vdwg.mxu0
  %v1619 = vld [vmem:[%s387] sm:$0xff]
  %v1620 = vadd.f32 %v1619, %v1603
  %v1621 = vld [vmem:[%s392 + $0x8] sm:$0xff]
  %v1622 = vadd.f32 %v1621, %v1616
  %v1623 = vxor.u32 %v1620, 2147483648
  %v1624 = vmul.f32 %v1623, 1.442695
  %v1625 = vpow.pop %v1624
  %v1626 = vadd.f32 %v1625, 1.0
  %v1627 = vrcp.pop %v1626
  %v1628 = vmul.f32 %v1626, %v1627
  %v1629 = vsub.f32 1.0, %v1628
  %v1630 = vmul.f32 %v1627, %v1629
  %v1631 = vadd.f32 %v1627, %v1630
  %vm1632 = vweird.f32 %v1626
  %vm1633 = vweird.f32 %v1627
  %vm1634 = vmor %vm1632, %vm1633
  %v1635 = vsel %vm1634, %v1627, %v1631
  %v1636 = vand.u32 2147483647, %v1626
  %vm1637 = vcmp.eq.f32.partialorder %v1636, 8.507059e+37
  %v1638 = vand.u32 %v1626, 2147483648
  %v1639 = vor.u32 1.1754944e-38, %v1638
  %v1640 = vsel %vm1637, %v1639, %v1635
  %v1641 = vmul.f32 1.0, %v1640
  %v1642 = vtanh.pop %v1620
  %1644 = vrot.lane.b32.xlu0 %v1588, 32
  %v1645 = vpop.permute.xlu0 %1644
  %v1647 = vmul.f32 %v1641, %v1645
  %1649 = vrot.lane.b32.xlu0 %v1642, 32
  %v1650 = vpop.permute.xlu0 %1649
  %v1652 = vmul.f32 %v1641, %v1650
  %1654 = vrot.lane.b32.xlu0 %v1652, 32
  %v1655 = vpop.permute.xlu0 %1654
  %v1657 = vadd.f32 %v1647, %v1655
  %v1658 = vtanh.pop %v1657
  %1660 = vrot.lane.b32.xlu0 %v1658, 32
  %v1661 = vpop.permute.xlu0 %1660
  %v1663 = vmul.f32 %v1641, %v1661
  %v1664 = vxor.u32 %v1622, 2147483648
  %v1665 = vmul.f32 %v1664, 1.442695
  %v1666 = vpow.pop %v1665
  %v1667 = vadd.f32 %v1666, 1.0
  %v1668 = vrcp.pop %v1667
  %v1669 = vmul.f32 %v1667, %v1668
  %v1670 = vsub.f32 1.0, %v1669
  %v1671 = vmul.f32 %v1668, %v1670
  %v1672 = vadd.f32 %v1668, %v1671
  %vm1673 = vweird.f32 %v1667
  %vm1674 = vweird.f32 %v1668
  %vm1675 = vmor %vm1673, %vm1674
  %v1676 = vsel %vm1675, %v1668, %v1672
  %v1677 = vand.u32 2147483647, %v1667
  %vm1678 = vcmp.eq.f32.partialorder %v1677, 8.507059e+37
  %v1679 = vand.u32 %v1667, 2147483648
  %v1680 = vor.u32 1.1754944e-38, %v1679
  %v1681 = vsel %vm1678, %v1680, %v1676
  %v1682 = vmul.f32 1.0, %v1681
  %v1683 = vtanh.pop %v1622
  %v1684 = vmul.f32 %v1682, %v1588
  %1686 = vrot.lane.b32.xlu0 %v1683, 32
  %v1687 = vpop.permute.xlu0 %1686
  %v1689 = vmul.f32 %v1682, %v1687
  %1691 = vrot.lane.b32.xlu0 %v1689, 32
  %v1692 = vpop.permute.xlu0 %1691
  %v1694 = vadd.f32 %v1684, %v1692
  %v1695 = vtanh.pop %v1694
  %1697 = vrot.lane.b32.xlu0 %v1695, 32
  %v1698 = vpop.permute.xlu0 %1697
  %v1700 = vmul.f32 %v1682, %v1698
  %1702 = vrot.lane.b32.xlu0 %v1663, 64
  %v1703 = vpop.permute.xlu0 %1702
  %1705 = vst.msk [vmem:[%s477] sm:$0xff] %vm340, %v1703
  %1707 = vrot.lane.b32.xlu0 %v1700, 96
  %v1708 = vpop.permute.xlu0 %1707
  %1710 = vst.msk [vmem:[%s483] sm:$0xff] %vm347, %v1708
  %v1711 = vsel %vm340, %v1703, %v1708
  %1713 = vrot.lane.b32.xlu0 %v1657, 96
  %v1714 = vpop.permute.xlu0 %1713
  %v1716 = vsel %vm340, %v1714, %v1694
  %v1717 = vpack.c.bf16 %v1711, %v1711
  %v1719 = vsel %vm222, %v1717, 0
  %1721 = vmatpush.bf16.msra.mxu0 0
  %1722 = vmatpush.bf16.msra.mxu0 0
  %1723 = vmatpush.bf16.msra.mxu0 0
  %1724 = vmatpush.bf16.msra.mxu0 0
  %1725 = vmatpush.bf16.msra.mxu0 %v1459
  %1726 = vmatpush.bf16.msra.mxu0 %v1457
  %1727 = vmatpush.bf16.msra.mxu0 %v1455
  %1728 = vmatpush.bf16.msra.mxu0 %v1453
  %1729 = vmatmul.bf16.gmra.mxu0 %v1719
  %v1730 = vpop.f32.mrf.mxu0
  %v1731 = vadd.f32 0.0, %v1730
  %v1732 = vpop.f32.mrf.mxu0
  %1733 = vdwg.mxu0
  %1734 = vmatpush.bf16.msra.mxu0 0
  %1735 = vmatpush.bf16.msra.mxu0 0
  %1736 = vmatpush.bf16.msra.mxu0 0
  %1737 = vmatpush.bf16.msra.mxu0 0
  %1738 = vmatpush.bf16.msra.mxu0 %v1460
  %1739 = vmatpush.bf16.msra.mxu0 %v1458
  %1740 = vmatpush.bf16.msra.mxu0 %v1456
  %1741 = vmatpush.bf16.msra.mxu0 %v1454
  %1742 = vmatmul.bf16.gmra.mxu0 %v1719
  %v1743 = vpop.f32.mrf.mxu0
  %v1744 = vadd.f32 0.0, %v1743
  %v1745 = vpop.f32.mrf.mxu0
  %1746 = vdwg.mxu0
  %v1747 = vld [vmem:[%s523] sm:$0xff]
  %v1748 = vadd.f32 %v1747, %v1731
  %v1749 = vld [vmem:[%s528 + $0x8] sm:$0xff]
  %v1750 = vadd.f32 %v1749, %v1744
  %v1751 = vxor.u32 %v1748, 2147483648
  %v1752 = vmul.f32 %v1751, 1.442695
  %v1753 = vpow.pop %v1752
  %v1754 = vadd.f32 %v1753, 1.0
  %v1755 = vrcp.pop %v1754
  %v1756 = vmul.f32 %v1754, %v1755
  %v1757 = vsub.f32 1.0, %v1756
  %v1758 = vmul.f32 %v1755, %v1757
  %v1759 = vadd.f32 %v1755, %v1758
  %vm1760 = vweird.f32 %v1754
  %vm1761 = vweird.f32 %v1755
  %vm1762 = vmor %vm1760, %vm1761
  %v1763 = vsel %vm1762, %v1755, %v1759
  %v1764 = vand.u32 2147483647, %v1754
  %vm1765 = vcmp.eq.f32.partialorder %v1764, 8.507059e+37
  %v1766 = vand.u32 %v1754, 2147483648
  %v1767 = vor.u32 1.1754944e-38, %v1766
  %v1768 = vsel %vm1765, %v1767, %v1763
  %v1769 = vmul.f32 1.0, %v1768
  %v1770 = vtanh.pop %v1748
  %1772 = vrot.lane.b32.xlu0 %v1716, 32
  %v1773 = vpop.permute.xlu0 %1772
  %v1775 = vmul.f32 %v1769, %v1773
  %1777 = vrot.lane.b32.xlu0 %v1770, 32
  %v1778 = vpop.permute.xlu0 %1777
  %v1780 = vmul.f32 %v1769, %v1778
  %1782 = vrot.lane.b32.xlu0 %v1780, 32
  %v1783 = vpop.permute.xlu0 %1782
  %v1785 = vadd.f32 %v1775, %v1783
  %v1786 = vtanh.pop %v1785
  %1788 = vrot.lane.b32.xlu0 %v1786, 32
  %v1789 = vpop.permute.xlu0 %1788
  %v1791 = vmul.f32 %v1769, %v1789
  %v1792 = vxor.u32 %v1750, 2147483648
  %v1793 = vmul.f32 %v1792, 1.442695
  %v1794 = vpow.pop %v1793
  %v1795 = vadd.f32 %v1794, 1.0
  %v1796 = vrcp.pop %v1795
  %v1797 = vmul.f32 %v1795, %v1796
  %v1798 = vsub.f32 1.0, %v1797
  %v1799 = vmul.f32 %v1796, %v1798
  %v1800 = vadd.f32 %v1796, %v1799
  %vm1801 = vweird.f32 %v1795
  %vm1802 = vweird.f32 %v1796
  %vm1803 = vmor %vm1801, %vm1802
  %v1804 = vsel %vm1803, %v1796, %v1800
  %v1805 = vand.u32 2147483647, %v1795
  %vm1806 = vcmp.eq.f32.partialorder %v1805, 8.507059e+37
  %v1807 = vand.u32 %v1795, 2147483648
  %v1808 = vor.u32 1.1754944e-38, %v1807
  %v1809 = vsel %vm1806, %v1808, %v1804
  %v1810 = vmul.f32 1.0, %v1809
  %v1811 = vtanh.pop %v1750
  %v1812 = vmul.f32 %v1810, %v1716
  %1814 = vrot.lane.b32.xlu0 %v1811, 32
  %v1815 = vpop.permute.xlu0 %1814
  %v1817 = vmul.f32 %v1810, %v1815
  %1819 = vrot.lane.b32.xlu0 %v1817, 32
  %v1820 = vpop.permute.xlu0 %1819
  %v1822 = vadd.f32 %v1812, %v1820
  %v1823 = vtanh.pop %v1822
  %1825 = vrot.lane.b32.xlu0 %v1823, 32
  %v1826 = vpop.permute.xlu0 %1825
  %v1828 = vmul.f32 %v1810, %v1826
  %1830 = vrot.lane.b32.xlu0 %v1791, 64
  %v1831 = vpop.permute.xlu0 %1830
  %1833 = vst.msk [vmem:[%s613] sm:$0xff] %vm340, %v1831
  %1835 = vrot.lane.b32.xlu0 %v1828, 96
  %v1836 = vpop.permute.xlu0 %1835
  %1838 = vst.msk [vmem:[%s619] sm:$0xff] %vm347, %v1836
  %v1839 = vsel %vm340, %v1831, %v1836
  %1841 = vrot.lane.b32.xlu0 %v1785, 96
  %v1842 = vpop.permute.xlu0 %1841
  %v1844 = vsel %vm340, %v1842, %v1822
  %v1845 = vpack.c.bf16 %v1839, %v1839
  %v1847 = vsel %vm222, %v1845, 0
  %1849 = vmatpush.bf16.msra.mxu0 0
  %1850 = vmatpush.bf16.msra.mxu0 0
  %1851 = vmatpush.bf16.msra.mxu0 0
  %1852 = vmatpush.bf16.msra.mxu0 0
  %1853 = vmatpush.bf16.msra.mxu0 %v1459
  %1854 = vmatpush.bf16.msra.mxu0 %v1457
  %1855 = vmatpush.bf16.msra.mxu0 %v1455
  %1856 = vmatpush.bf16.msra.mxu0 %v1453
  %1857 = vmatmul.bf16.gmra.mxu0 %v1847
  %v1858 = vpop.f32.mrf.mxu0
  %v1859 = vadd.f32 0.0, %v1858
  %v1860 = vpop.f32.mrf.mxu0
  %1861 = vdwg.mxu0
  %1862 = vmatpush.bf16.msra.mxu0 0
  %1863 = vmatpush.bf16.msra.mxu0 0
  %1864 = vmatpush.bf16.msra.mxu0 0
  %1865 = vmatpush.bf16.msra.mxu0 0
  %1866 = vmatpush.bf16.msra.mxu0 %v1460
  %1867 = vmatpush.bf16.msra.mxu0 %v1458
  %1868 = vmatpush.bf16.msra.mxu0 %v1456
  %1869 = vmatpush.bf16.msra.mxu0 %v1454
  %1870 = vmatmul.bf16.gmra.mxu0 %v1847
  %v1871 = vpop.f32.mrf.mxu0
  %v1872 = vadd.f32 0.0, %v1871
  %v1873 = vpop.f32.mrf.mxu0
  %1874 = vdwg.mxu0
  %v1875 = vld [vmem:[%s659] sm:$0xff]
  %v1876 = vadd.f32 %v1875, %v1859
  %v1877 = vld [vmem:[%s664 + $0x8] sm:$0xff]
  %v1878 = vadd.f32 %v1877, %v1872
  %v1879 = vxor.u32 %v1876, 2147483648
  %v1880 = vmul.f32 %v1879, 1.442695
  %v1881 = vpow.pop %v1880
  %v1882 = vadd.f32 %v1881, 1.0
  %v1883 = vrcp.pop %v1882
  %v1884 = vmul.f32 %v1882, %v1883
  %v1885 = vsub.f32 1.0, %v1884
  %v1886 = vmul.f32 %v1883, %v1885
  %v1887 = vadd.f32 %v1883, %v1886
  %vm1888 = vweird.f32 %v1882
  %vm1889 = vweird.f32 %v1883
  %vm1890 = vmor %vm1888, %vm1889
  %v1891 = vsel %vm1890, %v1883, %v1887
  %v1892 = vand.u32 2147483647, %v1882
  %vm1893 = vcmp.eq.f32.partialorder %v1892, 8.507059e+37
  %v1894 = vand.u32 %v1882, 2147483648
  %v1895 = vor.u32 1.1754944e-38, %v1894
  %v1896 = vsel %vm1893, %v1895, %v1891
  %v1897 = vmul.f32 1.0, %v1896
  %v1898 = vtanh.pop %v1876
  %1900 = vrot.lane.b32.xlu0 %v1844, 32
  %v1901 = vpop.permute.xlu0 %1900
  %v1903 = vmul.f32 %v1897, %v1901
  %1905 = vrot.lane.b32.xlu0 %v1898, 32
  %v1906 = vpop.permute.xlu0 %1905
  %v1908 = vmul.f32 %v1897, %v1906
  %1910 = vrot.lane.b32.xlu0 %v1908, 32
  %v1911 = vpop.permute.xlu0 %1910
  %v1913 = vadd.f32 %v1903, %v1911
  %v1914 = vtanh.pop %v1913
  %1916 = vrot.lane.b32.xlu0 %v1914, 32
  %v1917 = vpop.permute.xlu0 %1916
  %v1919 = vmul.f32 %v1897, %v1917
  %v1920 = vxor.u32 %v1878, 2147483648
  %v1921 = vmul.f32 %v1920, 1.442695
  %v1922 = vpow.pop %v1921
  %v1923 = vadd.f32 %v1922, 1.0
  %v1924 = vrcp.pop %v1923
  %v1925 = vmul.f32 %v1923, %v1924
  %v1926 = vsub.f32 1.0, %v1925
  %v1927 = vmul.f32 %v1924, %v1926
  %v1928 = vadd.f32 %v1924, %v1927
  %vm1929 = vweird.f32 %v1923
  %vm1930 = vweird.f32 %v1924
  %vm1931 = vmor %vm1929, %vm1930
  %v1932 = vsel %vm1931, %v1924, %v1928
  %v1933 = vand.u32 2147483647, %v1923
  %vm1934 = vcmp.eq.f32.partialorder %v1933, 8.507059e+37
  %v1935 = vand.u32 %v1923, 2147483648
  %v1936 = vor.u32 1.1754944e-38, %v1935
  %v1937 = vsel %vm1934, %v1936, %v1932
  %v1938 = vmul.f32 1.0, %v1937
  %v1939 = vtanh.pop %v1878
  %v1940 = vmul.f32 %v1938, %v1844
  %1942 = vrot.lane.b32.xlu0 %v1939, 32
  %v1943 = vpop.permute.xlu0 %1942
  %v1945 = vmul.f32 %v1938, %v1943
  %1947 = vrot.lane.b32.xlu0 %v1945, 32
  %v1948 = vpop.permute.xlu0 %1947
  %v1950 = vadd.f32 %v1940, %v1948
  %v1951 = vtanh.pop %v1950
  %1953 = vrot.lane.b32.xlu0 %v1951, 32
  %v1954 = vpop.permute.xlu0 %1953
  %v1956 = vmul.f32 %v1938, %v1954
  %1958 = vrot.lane.b32.xlu0 %v1919, 64
  %v1959 = vpop.permute.xlu0 %1958
  %1961 = vst.msk [vmem:[%s749] sm:$0xff] %vm340, %v1959
  %1963 = vrot.lane.b32.xlu0 %v1956, 96
  %v1964 = vpop.permute.xlu0 %1963
  %1966 = vst.msk [vmem:[%s755] sm:$0xff] %vm347, %v1964
  %v1967 = vsel %vm340, %v1959, %v1964
  %1969 = vrot.lane.b32.xlu0 %v1913, 96
  %v1970 = vpop.permute.xlu0 %1969
  %v1972 = vsel %vm340, %v1970, %v1950
  %v1973 = vpack.c.bf16 %v1967, %v1967
  %v1975 = vsel %vm222, %v1973, 0
  %1977 = vmatpush.bf16.msra.mxu0 0
  %1978 = vmatpush.bf16.msra.mxu0 0
  %1979 = vmatpush.bf16.msra.mxu0 0
  %1980 = vmatpush.bf16.msra.mxu0 0
  %1981 = vmatpush.bf16.msra.mxu0 %v1459
  %1982 = vmatpush.bf16.msra.mxu0 %v1457
  %1983 = vmatpush.bf16.msra.mxu0 %v1455
  %1984 = vmatpush.bf16.msra.mxu0 %v1453
  %1985 = vmatmul.bf16.gmra.mxu0 %v1975
  %v1986 = vpop.f32.mrf.mxu0
  %v1987 = vadd.f32 0.0, %v1986
  %v1988 = vpop.f32.mrf.mxu0
  %1989 = vdwg.mxu0
  %1990 = vmatpush.bf16.msra.mxu0 0
  %1991 = vmatpush.bf16.msra.mxu0 0
  %1992 = vmatpush.bf16.msra.mxu0 0
  %1993 = vmatpush.bf16.msra.mxu0 0
  %1994 = vmatpush.bf16.msra.mxu0 %v1460
  %1995 = vmatpush.bf16.msra.mxu0 %v1458
  %1996 = vmatpush.bf16.msra.mxu0 %v1456
  %1997 = vmatpush.bf16.msra.mxu0 %v1454
  %1998 = vmatmul.bf16.gmra.mxu0 %v1975
  %v1999 = vpop.f32.mrf.mxu0
  %v2000 = vadd.f32 0.0, %v1999
  %v2001 = vpop.f32.mrf.mxu0
  %2002 = vdwg.mxu0
  %v2003 = vld [vmem:[%s664] sm:$0xff]
  %v2004 = vadd.f32 %v2003, %v1987
  %v2005 = vld [vmem:[%s659 + $0x8] sm:$0xff]
  %v2006 = vadd.f32 %v2005, %v2000
  %v2007 = vxor.u32 %v2004, 2147483648
  %v2008 = vmul.f32 %v2007, 1.442695
  %v2009 = vpow.pop %v2008
  %v2010 = vadd.f32 %v2009, 1.0
  %v2011 = vrcp.pop %v2010
  %v2012 = vmul.f32 %v2010, %v2011
  %v2013 = vsub.f32 1.0, %v2012
  %v2014 = vmul.f32 %v2011, %v2013
  %v2015 = vadd.f32 %v2011, %v2014
  %vm2016 = vweird.f32 %v2010
  %vm2017 = vweird.f32 %v2011
  %vm2018 = vmor %vm2016, %vm2017
  %v2019 = vsel %vm2018, %v2011, %v2015
  %v2020 = vand.u32 2147483647, %v2010
  %vm2021 = vcmp.eq.f32.partialorder %v2020, 8.507059e+37
  %v2022 = vand.u32 %v2010, 2147483648
  %v2023 = vor.u32 1.1754944e-38, %v2022
  %v2024 = vsel %vm2021, %v2023, %v2019
  %v2025 = vmul.f32 1.0, %v2024
  %v2026 = vtanh.pop %v2004
  %2028 = vrot.lane.b32.xlu0 %v1972, 32
  %v2029 = vpop.permute.xlu0 %2028
  %v2031 = vmul.f32 %v2025, %v2029
  %2033 = vrot.lane.b32.xlu0 %v2026, 32
  %v2034 = vpop.permute.xlu0 %2033
  %v2036 = vmul.f32 %v2025, %v2034
  %2038 = vrot.lane.b32.xlu0 %v2036, 32
  %v2039 = vpop.permute.xlu0 %2038
  %v2041 = vadd.f32 %v2031, %v2039
  %v2042 = vtanh.pop %v2041
  %2044 = vrot.lane.b32.xlu0 %v2042, 32
  %v2045 = vpop.permute.xlu0 %2044
  %v2047 = vmul.f32 %v2025, %v2045
  %v2048 = vxor.u32 %v2006, 2147483648
  %v2049 = vmul.f32 %v2048, 1.442695
  %v2050 = vpow.pop %v2049
  %v2051 = vadd.f32 %v2050, 1.0
  %v2052 = vrcp.pop %v2051
  %v2053 = vmul.f32 %v2051, %v2052
  %v2054 = vsub.f32 1.0, %v2053
  %v2055 = vmul.f32 %v2052, %v2054
  %v2056 = vadd.f32 %v2052, %v2055
  %vm2057 = vweird.f32 %v2051
  %vm2058 = vweird.f32 %v2052
  %vm2059 = vmor %vm2057, %vm2058
  %v2060 = vsel %vm2059, %v2052, %v2056
  %v2061 = vand.u32 2147483647, %v2051
  %vm2062 = vcmp.eq.f32.partialorder %v2061, 8.507059e+37
  %v2063 = vand.u32 %v2051, 2147483648
  %v2064 = vor.u32 1.1754944e-38, %v2063
  %v2065 = vsel %vm2062, %v2064, %v2060
  %v2066 = vmul.f32 1.0, %v2065
  %v2067 = vtanh.pop %v2006
  %v2068 = vmul.f32 %v2066, %v1972
  %2070 = vrot.lane.b32.xlu0 %v2067, 32
  %v2071 = vpop.permute.xlu0 %2070
  %v2073 = vmul.f32 %v2066, %v2071
  %2075 = vrot.lane.b32.xlu0 %v2073, 32
  %v2076 = vpop.permute.xlu0 %2075
  %v2078 = vadd.f32 %v2068, %v2076
  %v2079 = vtanh.pop %v2078
  %2081 = vrot.lane.b32.xlu0 %v2079, 32
  %v2082 = vpop.permute.xlu0 %2081
  %v2084 = vmul.f32 %v2066, %v2082
  %2086 = vrot.lane.b32.xlu0 %v2047, 64
  %v2087 = vpop.permute.xlu0 %2086
  %2089 = vst.msk [vmem:[%s755] sm:$0xff] %vm340, %v2087
  %2091 = vrot.lane.b32.xlu0 %v2084, 96
  %v2092 = vpop.permute.xlu0 %2091
  %2094 = vst.msk [vmem:[%s749] sm:$0xff] %vm347, %v2092
  %v2095 = vsel %vm340, %v2087, %v2092
  %2097 = vrot.lane.b32.xlu0 %v2041, 96
  %v2098 = vpop.permute.xlu0 %2097
  %v2100 = vsel %vm340, %v2098, %v2078
  %v2101 = vpack.c.bf16 %v2095, %v2095
  %v2103 = vsel %vm222, %v2101, 0
  %2105 = vmatpush.bf16.msra.mxu0 0
  %2106 = vmatpush.bf16.msra.mxu0 0
  %2107 = vmatpush.bf16.msra.mxu0 0
  %2108 = vmatpush.bf16.msra.mxu0 0
  %2109 = vmatpush.bf16.msra.mxu0 %v1459
  %2110 = vmatpush.bf16.msra.mxu0 %v1457
  %2111 = vmatpush.bf16.msra.mxu0 %v1455
  %2112 = vmatpush.bf16.msra.mxu0 %v1453
  %2113 = vmatmul.bf16.gmra.mxu0 %v2103
  %v2114 = vpop.f32.mrf.mxu0
  %v2115 = vadd.f32 0.0, %v2114
  %v2116 = vpop.f32.mrf.mxu0
  %2117 = vdwg.mxu0
  %2118 = vmatpush.bf16.msra.mxu0 0
  %2119 = vmatpush.bf16.msra.mxu0 0
  %2120 = vmatpush.bf16.msra.mxu0 0
  %2121 = vmatpush.bf16.msra.mxu0 0
  %2122 = vmatpush.bf16.msra.mxu0 %v1460
  %2123 = vmatpush.bf16.msra.mxu0 %v1458
  %2124 = vmatpush.bf16.msra.mxu0 %v1456
  %2125 = vmatpush.bf16.msra.mxu0 %v1454
  %2126 = vmatmul.bf16.gmra.mxu0 %v2103
  %v2127 = vpop.f32.mrf.mxu0
  %v2128 = vadd.f32 0.0, %v2127
  %v2129 = vpop.f32.mrf.mxu0
  %2130 = vdwg.mxu0
  %v2131 = vld [vmem:[%s528] sm:$0xff]
  %v2132 = vadd.f32 %v2131, %v2115
  %v2133 = vld [vmem:[%s523 + $0x8] sm:$0xff]
  %v2134 = vadd.f32 %v2133, %v2128
  %v2135 = vxor.u32 %v2132, 2147483648
  %v2136 = vmul.f32 %v2135, 1.442695
  %v2137 = vpow.pop %v2136
  %v2138 = vadd.f32 %v2137, 1.0
  %v2139 = vrcp.pop %v2138
  %v2140 = vmul.f32 %v2138, %v2139
  %v2141 = vsub.f32 1.0, %v2140
  %v2142 = vmul.f32 %v2139, %v2141
  %v2143 = vadd.f32 %v2139, %v2142
  %vm2144 = vweird.f32 %v2138
  %vm2145 = vweird.f32 %v2139
  %vm2146 = vmor %vm2144, %vm2145
  %v2147 = vsel %vm2146, %v2139, %v2143
  %v2148 = vand.u32 2147483647, %v2138
  %vm2149 = vcmp.eq.f32.partialorder %v2148, 8.507059e+37
  %v2150 = vand.u32 %v2138, 2147483648
  %v2151 = vor.u32 1.1754944e-38, %v2150
  %v2152 = vsel %vm2149, %v2151, %v2147
  %v2153 = vmul.f32 1.0, %v2152
  %v2154 = vtanh.pop %v2132
  %2156 = vrot.lane.b32.xlu0 %v2100, 32
  %v2157 = vpop.permute.xlu0 %2156
  %v2159 = vmul.f32 %v2153, %v2157
  %2161 = vrot.lane.b32.xlu0 %v2154, 32
  %v2162 = vpop.permute.xlu0 %2161
  %v2164 = vmul.f32 %v2153, %v2162
  %2166 = vrot.lane.b32.xlu0 %v2164, 32
  %v2167 = vpop.permute.xlu0 %2166
  %v2169 = vadd.f32 %v2159, %v2167
  %v2170 = vtanh.pop %v2169
  %2172 = vrot.lane.b32.xlu0 %v2170, 32
  %v2173 = vpop.permute.xlu0 %2172
  %v2175 = vmul.f32 %v2153, %v2173
  %v2176 = vxor.u32 %v2134, 2147483648
  %v2177 = vmul.f32 %v2176, 1.442695
  %v2178 = vpow.pop %v2177
  %v2179 = vadd.f32 %v2178, 1.0
  %v2180 = vrcp.pop %v2179
  %v2181 = vmul.f32 %v2179, %v2180
  %v2182 = vsub.f32 1.0, %v2181
  %v2183 = vmul.f32 %v2180, %v2182
  %v2184 = vadd.f32 %v2180, %v2183
  %vm2185 = vweird.f32 %v2179
  %vm2186 = vweird.f32 %v2180
  %vm2187 = vmor %vm2185, %vm2186
  %v2188 = vsel %vm2187, %v2180, %v2184
  %v2189 = vand.u32 2147483647, %v2179
  %vm2190 = vcmp.eq.f32.partialorder %v2189, 8.507059e+37
  %v2191 = vand.u32 %v2179, 2147483648
  %v2192 = vor.u32 1.1754944e-38, %v2191
  %v2193 = vsel %vm2190, %v2192, %v2188
  %v2194 = vmul.f32 1.0, %v2193
  %v2195 = vtanh.pop %v2134
  %v2196 = vmul.f32 %v2194, %v2100
  %2198 = vrot.lane.b32.xlu0 %v2195, 32
  %v2199 = vpop.permute.xlu0 %2198
  %v2201 = vmul.f32 %v2194, %v2199
  %2203 = vrot.lane.b32.xlu0 %v2201, 32
  %v2204 = vpop.permute.xlu0 %2203
  %v2206 = vadd.f32 %v2196, %v2204
  %v2207 = vtanh.pop %v2206
  %2209 = vrot.lane.b32.xlu0 %v2207, 32
  %v2210 = vpop.permute.xlu0 %2209
  %v2212 = vmul.f32 %v2194, %v2210
  %2214 = vrot.lane.b32.xlu0 %v2175, 64
  %v2215 = vpop.permute.xlu0 %2214
  %2217 = vst.msk [vmem:[%s619] sm:$0xff] %vm340, %v2215
  %2219 = vrot.lane.b32.xlu0 %v2212, 96
  %v2220 = vpop.permute.xlu0 %2219
  %2222 = vst.msk [vmem:[%s613] sm:$0xff] %vm347, %v2220
  %v2223 = vsel %vm340, %v2215, %v2220
  %2225 = vrot.lane.b32.xlu0 %v2169, 96
  %v2226 = vpop.permute.xlu0 %2225
  %v2228 = vsel %vm340, %v2226, %v2206
  %v2229 = vpack.c.bf16 %v2223, %v2223
  %v2231 = vsel %vm222, %v2229, 0
  %2233 = vmatpush.bf16.msra.mxu0 0
  %2234 = vmatpush.bf16.msra.mxu0 0
  %2235 = vmatpush.bf16.msra.mxu0 0
  %2236 = vmatpush.bf16.msra.mxu0 0
  %2237 = vmatpush.bf16.msra.mxu0 %v1459
  %2238 = vmatpush.bf16.msra.mxu0 %v1457
  %2239 = vmatpush.bf16.msra.mxu0 %v1455
  %2240 = vmatpush.bf16.msra.mxu0 %v1453
  %2241 = vmatmul.bf16.gmra.mxu0 %v2231
  %v2242 = vpop.f32.mrf.mxu0
  %v2243 = vadd.f32 0.0, %v2242
  %v2244 = vpop.f32.mrf.mxu0
  %2245 = vdwg.mxu0
  %2246 = vmatpush.bf16.msra.mxu0 0
  %2247 = vmatpush.bf16.msra.mxu0 0
  %2248 = vmatpush.bf16.msra.mxu0 0
  %2249 = vmatpush.bf16.msra.mxu0 0
  %2250 = vmatpush.bf16.msra.mxu0 %v1460
  %2251 = vmatpush.bf16.msra.mxu0 %v1458
  %2252 = vmatpush.bf16.msra.mxu0 %v1456
  %2253 = vmatpush.bf16.msra.mxu0 %v1454
  %2254 = vmatmul.bf16.gmra.mxu0 %v2231
  %v2255 = vpop.f32.mrf.mxu0
  %v2256 = vadd.f32 0.0, %v2255
  %v2257 = vpop.f32.mrf.mxu0
  %2258 = vdwg.mxu0
  %v2259 = vld [vmem:[%s392] sm:$0xff]
  %v2260 = vadd.f32 %v2259, %v2243
  %v2261 = vld [vmem:[%s387 + $0x8] sm:$0xff]
  %v2262 = vadd.f32 %v2261, %v2256
  %v2263 = vxor.u32 %v2260, 2147483648
  %v2264 = vmul.f32 %v2263, 1.442695
  %v2265 = vpow.pop %v2264
  %v2266 = vadd.f32 %v2265, 1.0
  %v2267 = vrcp.pop %v2266
  %v2268 = vmul.f32 %v2266, %v2267
  %v2269 = vsub.f32 1.0, %v2268
  %v2270 = vmul.f32 %v2267, %v2269
  %v2271 = vadd.f32 %v2267, %v2270
  %vm2272 = vweird.f32 %v2266
  %vm2273 = vweird.f32 %v2267
  %vm2274 = vmor %vm2272, %vm2273
  %v2275 = vsel %vm2274, %v2267, %v2271
  %v2276 = vand.u32 2147483647, %v2266
  %vm2277 = vcmp.eq.f32.partialorder %v2276, 8.507059e+37
  %v2278 = vand.u32 %v2266, 2147483648
  %v2279 = vor.u32 1.1754944e-38, %v2278
  %v2280 = vsel %vm2277, %v2279, %v2275
  %v2281 = vmul.f32 1.0, %v2280
  %v2282 = vtanh.pop %v2260
  %2284 = vrot.lane.b32.xlu0 %v2228, 32
  %v2285 = vpop.permute.xlu0 %2284
  %v2287 = vmul.f32 %v2281, %v2285
  %2289 = vrot.lane.b32.xlu0 %v2282, 32
  %v2290 = vpop.permute.xlu0 %2289
  %v2292 = vmul.f32 %v2281, %v2290
  %2294 = vrot.lane.b32.xlu0 %v2292, 32
  %v2295 = vpop.permute.xlu0 %2294
  %v2297 = vadd.f32 %v2287, %v2295
  %v2298 = vtanh.pop %v2297
  %2300 = vrot.lane.b32.xlu0 %v2298, 32
  %v2301 = vpop.permute.xlu0 %2300
  %v2303 = vmul.f32 %v2281, %v2301
  %v2304 = vxor.u32 %v2262, 2147483648
  %v2305 = vmul.f32 %v2304, 1.442695
  %v2306 = vpow.pop %v2305
  %v2307 = vadd.f32 %v2306, 1.0
  %v2308 = vrcp.pop %v2307
  %v2309 = vmul.f32 %v2307, %v2308
  %v2310 = vsub.f32 1.0, %v2309
  %v2311 = vmul.f32 %v2308, %v2310
  %v2312 = vadd.f32 %v2308, %v2311
  %vm2313 = vweird.f32 %v2307
  %vm2314 = vweird.f32 %v2308
  %vm2315 = vmor %vm2313, %vm2314
  %v2316 = vsel %vm2315, %v2308, %v2312
  %v2317 = vand.u32 2147483647, %v2307
  %vm2318 = vcmp.eq.f32.partialorder %v2317, 8.507059e+37
  %v2319 = vand.u32 %v2307, 2147483648
  %v2320 = vor.u32 1.1754944e-38, %v2319
  %v2321 = vsel %vm2318, %v2320, %v2316
  %v2322 = vmul.f32 1.0, %v2321
  %v2323 = vtanh.pop %v2262
  %v2324 = vmul.f32 %v2322, %v2228
  %2326 = vrot.lane.b32.xlu0 %v2323, 32
  %v2327 = vpop.permute.xlu0 %2326
  %v2329 = vmul.f32 %v2322, %v2327
  %2331 = vrot.lane.b32.xlu0 %v2329, 32
  %v2332 = vpop.permute.xlu0 %2331
  %v2334 = vadd.f32 %v2324, %v2332
  %v2335 = vtanh.pop %v2334
  %2337 = vrot.lane.b32.xlu0 %v2335, 32
  %v2338 = vpop.permute.xlu0 %2337
  %v2340 = vmul.f32 %v2322, %v2338
  %2342 = vrot.lane.b32.xlu0 %v2303, 64
  %v2343 = vpop.permute.xlu0 %2342
  %2345 = vst.msk [vmem:[%s483] sm:$0xff] %vm340, %v2343
  %2347 = vrot.lane.b32.xlu0 %v2340, 96
  %v2348 = vpop.permute.xlu0 %2347
  %2350 = vst.msk [vmem:[%s477] sm:$0xff] %vm347, %v2348
  %v2351 = vsel %vm340, %v2343, %v2348
  %2353 = vrot.lane.b32.xlu0 %v2297, 96
  %v2354 = vpop.permute.xlu0 %2353
  %v2356 = vsel %vm340, %v2354, %v2334
  %v2357 = vpack.c.bf16 %v2351, %v2351
  %v2359 = vsel %vm222, %v2357, 0
  %2361 = vmatpush.bf16.msra.mxu0 0
  %2362 = vmatpush.bf16.msra.mxu0 0
  %2363 = vmatpush.bf16.msra.mxu0 0
  %2364 = vmatpush.bf16.msra.mxu0 0
  %2365 = vmatpush.bf16.msra.mxu0 %v1459
  %2366 = vmatpush.bf16.msra.mxu0 %v1457
  %2367 = vmatpush.bf16.msra.mxu0 %v1455
  %2368 = vmatpush.bf16.msra.mxu0 %v1453
  %2369 = vmatmul.bf16.gmra.mxu0 %v2359
  %v2370 = vpop.f32.mrf.mxu0
  %v2371 = vadd.f32 0.0, %v2370
  %v2372 = vpop.f32.mrf.mxu0
  %2373 = vdwg.mxu0
  %2374 = vmatpush.bf16.msra.mxu0 0
  %2375 = vmatpush.bf16.msra.mxu0 0
  %2376 = vmatpush.bf16.msra.mxu0 0
  %2377 = vmatpush.bf16.msra.mxu0 0
  %2378 = vmatpush.bf16.msra.mxu0 %v1460
  %2379 = vmatpush.bf16.msra.mxu0 %v1458
  %2380 = vmatpush.bf16.msra.mxu0 %v1456
  %2381 = vmatpush.bf16.msra.mxu0 %v1454
  %2382 = vmatmul.bf16.gmra.mxu0 %v2359
  %v2383 = vpop.f32.mrf.mxu0
  %v2384 = vadd.f32 0.0, %v2383
  %v2385 = vpop.f32.mrf.mxu0
  %2386 = vdwg.mxu0
  %v2387 = vld [vmem:[%s259] sm:$0xff]
  %v2388 = vadd.f32 %v2387, %v2371
  %v2389 = vld [vmem:[%s254 + $0x8] sm:$0xff]
  %v2390 = vadd.f32 %v2389, %v2384
  %v2391 = vxor.u32 %v2388, 2147483648
  %v2392 = vmul.f32 %v2391, 1.442695
  %v2393 = vpow.pop %v2392
  %v2394 = vadd.f32 %v2393, 1.0
  %v2395 = vrcp.pop %v2394
  %v2396 = vmul.f32 %v2394, %v2395
  %v2397 = vsub.f32 1.0, %v2396
  %v2398 = vmul.f32 %v2395, %v2397
  %v2399 = vadd.f32 %v2395, %v2398
  %vm2400 = vweird.f32 %v2394
  %vm2401 = vweird.f32 %v2395
  %vm2402 = vmor %vm2400, %vm2401
  %v2403 = vsel %vm2402, %v2395, %v2399
  %v2404 = vand.u32 2147483647, %v2394
  %vm2405 = vcmp.eq.f32.partialorder %v2404, 8.507059e+37
  %v2406 = vand.u32 %v2394, 2147483648
  %v2407 = vor.u32 1.1754944e-38, %v2406
  %v2408 = vsel %vm2405, %v2407, %v2403
  %v2409 = vmul.f32 1.0, %v2408
  %v2410 = vtanh.pop %v2388
  %2412 = vrot.lane.b32.xlu0 %v2356, 32
  %v2413 = vpop.permute.xlu0 %2412
  %v2415 = vmul.f32 %v2409, %v2413
  %2417 = vrot.lane.b32.xlu0 %v2410, 32
  %v2418 = vpop.permute.xlu0 %2417
  %v2420 = vmul.f32 %v2409, %v2418
  %2422 = vrot.lane.b32.xlu0 %v2420, 32
  %v2423 = vpop.permute.xlu0 %2422
  %v2425 = vadd.f32 %v2415, %v2423
  %v2426 = vtanh.pop %v2425
  %2428 = vrot.lane.b32.xlu0 %v2426, 32
  %v2429 = vpop.permute.xlu0 %2428
  %v2431 = vmul.f32 %v2409, %v2429
  %v2432 = vxor.u32 %v2390, 2147483648
  %v2433 = vmul.f32 %v2432, 1.442695
  %v2434 = vpow.pop %v2433
  %v2435 = vadd.f32 %v2434, 1.0
  %v2436 = vrcp.pop %v2435
  %v2437 = vmul.f32 %v2435, %v2436
  %v2438 = vsub.f32 1.0, %v2437
  %v2439 = vmul.f32 %v2436, %v2438
  %v2440 = vadd.f32 %v2436, %v2439
  %vm2441 = vweird.f32 %v2435
  %vm2442 = vweird.f32 %v2436
  %vm2443 = vmor %vm2441, %vm2442
  %v2444 = vsel %vm2443, %v2436, %v2440
  %v2445 = vand.u32 2147483647, %v2435
  %vm2446 = vcmp.eq.f32.partialorder %v2445, 8.507059e+37
  %v2447 = vand.u32 %v2435, 2147483648
  %v2448 = vor.u32 1.1754944e-38, %v2447
  %v2449 = vsel %vm2446, %v2448, %v2444
  %v2450 = vmul.f32 1.0, %v2449
  %v2451 = vtanh.pop %v2390
  %v2452 = vmul.f32 %v2450, %v2356
  %2454 = vrot.lane.b32.xlu0 %v2451, 32
  %v2455 = vpop.permute.xlu0 %2454
  %v2457 = vmul.f32 %v2450, %v2455
  %2459 = vrot.lane.b32.xlu0 %v2457, 32
  %v2460 = vpop.permute.xlu0 %2459
  %v2462 = vadd.f32 %v2452, %v2460
  %v2463 = vtanh.pop %v2462
  %2465 = vrot.lane.b32.xlu0 %v2463, 32
  %v2466 = vpop.permute.xlu0 %2465
  %v2468 = vmul.f32 %v2450, %v2466
  %2470 = vrot.lane.b32.xlu0 %v2431, 64
  %v2471 = vpop.permute.xlu0 %2470
  %2473 = vst.msk [vmem:[%s346] sm:$0xff] %vm340, %v2471
  %2475 = vrot.lane.b32.xlu0 %v2468, 96
  %v2476 = vpop.permute.xlu0 %2475
  %2478 = vst.msk [vmem:[#allocation3] sm:$0xff] %vm347, %v2476
  %v2479 = vld [vmem:[#allocation3] sm:$0xff]
  %v2480 = vld [vmem:[#allocation3 + $0x8] sm:$0xff]
  %v2481 = vld [vmem:[#allocation3 + $0x10] sm:$0xff]
  %v2482 = vld [vmem:[#allocation3 + $0x18] sm:$0xff]
  %v2483 = vld [vmem:[#allocation3 + $0x20] sm:$0xff]
  %v2484 = vld [vmem:[#allocation3 + $0x28] sm:$0xff]
  %v2485 = vld [vmem:[#allocation3 + $0x30] sm:$0xff]
  %v2486 = vld [vmem:[#allocation3 + $0x38] sm:$0xff]
  %v2487 = vld [vmem:[%s7] sm:$0xff]
  %v2488 = vld [vmem:[%s7 + $0x8] sm:$0xff]
  %v2489 = vld [vmem:[%s7 + $0x10] sm:$0xff]
  %v2490 = vld [vmem:[%s7 + $0x18] sm:$0xff]
  %v2491 = vld [vmem:[%s7 + $0x20] sm:$0xff]
  %v2492 = vld [vmem:[%s7 + $0x28] sm:$0xff]
  %v2493 = vld [vmem:[%s7 + $0x30] sm:$0xff]
  %v2494 = vld [vmem:[%s7 + $0x38] sm:$0xff]
  %v2495 = vld [vmem:[%s8] sm:$0x1]
  %v2497 = vperm.slane %v2495, 0
  %v2500 = vsel %vm222, %v2479, 0
  %v2503 = vsel %vm222, %v2480, 0
  %v2506 = vsel %vm222, %v2481, 0
  %v2509 = vsel %vm222, %v2482, 0
  %v2512 = vsel %vm222, %v2483, 0
  %v2515 = vsel %vm222, %v2484, 0
  %v2518 = vsel %vm222, %v2485, 0
  %v2521 = vsel %vm222, %v2486, 0
  %2523 = vmatpush.msra.mxu0 0.0
  %2524 = vmatpush.msra.mxu0 0.0
  %2525 = vmatpush.msra.mxu0 0.0
  %2526 = vmatpush.msra.mxu0 0.0
  %2527 = vmatpush.msra.mxu0 0.0
  %2528 = vmatpush.msra.mxu0 0.0
  %2529 = vmatpush.msra.mxu0 0.0
  %2530 = vmatpush.msra.mxu0 0.0
  %2531 = vmatpush.msra.mxu0 %v2494
  %2532 = vmatpush.msra.mxu0 %v2493
  %2533 = vmatpush.msra.mxu0 %v2492
  %2534 = vmatpush.msra.mxu0 %v2491
  %2535 = vmatpush.msra.mxu0 %v2490
  %2536 = vmatpush.msra.mxu0 %v2489
  %2537 = vmatpush.msra.mxu0 %v2488
  %2538 = vmatpush.msra.mxu0 %v2487
  %2539 = vmatmul.f32.gmra.mxu0 %v2500
  %v2540 = vpop.f32.mrf.mxu0
  %v2541 = vadd.f32 %v2497, %v2540
  %2542 = vmatmul.f32.gmra.mxu0 %v2503
  %v2543 = vpop.f32.mrf.mxu0
  %v2544 = vadd.f32 %v2497, %v2543
  %2545 = vmatmul.f32.gmra.mxu0 %v2506
  %v2546 = vpop.f32.mrf.mxu0
  %v2547 = vadd.f32 %v2497, %v2546
  %2548 = vmatmul.f32.gmra.mxu0 %v2509
  %v2549 = vpop.f32.mrf.mxu0
  %v2550 = vadd.f32 %v2497, %v2549
  %2551 = vmatmul.f32.gmra.mxu0 %v2512
  %v2552 = vpop.f32.mrf.mxu0
  %v2553 = vadd.f32 %v2497, %v2552
  %2554 = vmatmul.f32.gmra.mxu0 %v2515
  %v2555 = vpop.f32.mrf.mxu0
  %v2556 = vadd.f32 %v2497, %v2555
  %2557 = vmatmul.f32.gmra.mxu0 %v2518
  %v2558 = vpop.f32.mrf.mxu0
  %v2559 = vadd.f32 %v2497, %v2558
  %2560 = vmatmul.f32.gmra.mxu0 %v2521
  %v2561 = vpop.f32.mrf.mxu0
  %v2562 = vadd.f32 %v2497, %v2561
  %2563 = vdwg.mxu0
  %v2564 = vtanh.pop %v2541
  %v2565 = vtanh.pop %v2544
  %v2566 = vtanh.pop %v2547
  %v2567 = vtanh.pop %v2550
  %v2568 = vtanh.pop %v2553
  %v2569 = vtanh.pop %v2556
  %v2570 = vtanh.pop %v2559
  %v2571 = vtanh.pop %v2562
  %v2572 = vld [vmem:[%s9] sm:$0x1]
  %v2574 = vperm.slane %v2572, 0
  %v2576 = vmul.f32 %v2564, %v2574
  %v2577 = vmul.f32 %v2565, %v2574
  %v2578 = vmul.f32 %v2566, %v2574
  %v2579 = vmul.f32 %v2567, %v2574
  %v2580 = vmul.f32 %v2568, %v2574
  %v2581 = vmul.f32 %v2569, %v2574
  %v2582 = vmul.f32 %v2570, %v2574
  %v2583 = vmul.f32 %v2571, %v2574
  %v2584 = vsel %vm340, %v2576, 0.0
  %2585 = vadd.xlane.f32.xlu0 %v2584
  %v2586 = vpop.xlane.xlu0 %2585
  %v2587 = vsel %vm340, %v2577, 0.0
  %2588 = vadd.xlane.f32.xlu0 %v2587
  %v2589 = vpop.xlane.xlu0 %2588
  %v2590 = vsel %vm340, %v2578, 0.0
  %2591 = vadd.xlane.f32.xlu0 %v2590
  %v2592 = vpop.xlane.xlu0 %2591
  %v2593 = vsel %vm340, %v2579, 0.0
  %2594 = vadd.xlane.f32.xlu0 %v2593
  %v2595 = vpop.xlane.xlu0 %2594
  %v2596 = vsel %vm340, %v2580, 0.0
  %2597 = vadd.xlane.f32.xlu0 %v2596
  %v2598 = vpop.xlane.xlu0 %2597
  %v2599 = vsel %vm340, %v2581, 0.0
  %2600 = vadd.xlane.f32.xlu0 %v2599
  %v2601 = vpop.xlane.xlu0 %2600
  %v2602 = vsel %vm340, %v2582, 0.0
  %2603 = vadd.xlane.f32.xlu0 %v2602
  %v2604 = vpop.xlane.xlu0 %2603
  %v2605 = vsel %vm340, %v2583, 0.0
  %2606 = vadd.xlane.f32.xlu0 %v2605
  %v2607 = vpop.xlane.xlu0 %2606
  %v2608 = vmax.f32 %v2586, %v2598
  %v2609 = vmax.f32 %v2589, %v2601
  %v2610 = vmax.f32 %v2592, %v2604
  %v2611 = vmax.f32 %v2595, %v2607
  %v2612 = vmax.f32 %v2608, %v2609
  %v2613 = vmax.f32 %v2610, %v2611
  %v2614 = vmax.f32 %v2612, %v2613
  %v2615 = vsub.f32 %v2586, %v2614
  %v2616 = vsub.f32 %v2589, %v2614
  %v2617 = vsub.f32 %v2592, %v2614
  %v2618 = vsub.f32 %v2595, %v2614
  %v2619 = vsub.f32 %v2598, %v2614
  %v2620 = vsub.f32 %v2601, %v2614
  %v2621 = vsub.f32 %v2604, %v2614
  %v2622 = vsub.f32 %v2607, %v2614
  %v2623 = vmul.f32 %v2615, 1.442695
  %v2624 = vpow.pop %v2623
  %v2625 = vmul.f32 %v2616, 1.442695
  %v2626 = vpow.pop %v2625
  %v2627 = vmul.f32 %v2617, 1.442695
  %v2628 = vpow.pop %v2627
  %v2629 = vmul.f32 %v2618, 1.442695
  %v2630 = vpow.pop %v2629
  %v2631 = vmul.f32 %v2619, 1.442695
  %v2632 = vpow.pop %v2631
  %v2633 = vmul.f32 %v2620, 1.442695
  %v2634 = vpow.pop %v2633
  %v2635 = vmul.f32 %v2621, 1.442695
  %v2636 = vpow.pop %v2635
  %v2637 = vmul.f32 %v2622, 1.442695
  %v2638 = vpow.pop %v2637
  %v2639 = vadd.f32 %v2624, %v2626
  %v2640 = vadd.f32 %v2639, %v2628
  %v2641 = vadd.f32 %v2640, %v2630
  %v2642 = vadd.f32 %v2641, %v2632
  %v2643 = vadd.f32 %v2642, %v2634
  %v2644 = vadd.f32 %v2643, %v2636
  %v2645 = vadd.f32 %v2644, %v2638
  %v2646 = vmul.f32 %v2624, %v2479
  %v2647 = vmul.f32 %v2626, %v2480
  %v2648 = vmul.f32 %v2628, %v2481
  %v2649 = vmul.f32 %v2630, %v2482
  %v2650 = vmul.f32 %v2632, %v2483
  %v2651 = vmul.f32 %v2634, %v2484
  %v2652 = vmul.f32 %v2636, %v2485
  %v2653 = vmul.f32 %v2638, %v2486
  %v2654 = vsel %vm222, %v2646, 0.0
  %v2655 = vsel %vm222, %v2647, 0.0
  %v2656 = vadd.f32 %v2654, %v2655
  %v2657 = vsel %vm222, %v2648, 0.0
  %v2658 = vadd.f32 %v2656, %v2657
  %v2659 = vsel %vm222, %v2649, 0.0
  %v2660 = vadd.f32 %v2658, %v2659
  %v2661 = vsel %vm222, %v2650, 0.0
  %v2662 = vadd.f32 %v2660, %v2661
  %v2663 = vsel %vm222, %v2651, 0.0
  %v2664 = vadd.f32 %v2662, %v2663
  %v2665 = vsel %vm222, %v2652, 0.0
  %v2666 = vadd.f32 %v2664, %v2665
  %v2667 = vsel %vm222, %v2653, 0.0
  %v2668 = vadd.f32 %v2666, %v2667
  %v2669 = vrcp.pop %v2645
  %v2670 = vmul.f32 %v2668, %v2669
  %v2671 = vld [vmem:[%s10] sm:$0xff]
  %v2672 = vld [vmem:[%s10 + $0x8] sm:$0xff]
  %v2673 = vld [vmem:[%s10 + $0x10] sm:$0xff]
  %v2674 = vld [vmem:[%s10 + $0x18] sm:$0xff]
  %v2675 = vld [vmem:[%s10 + $0x20] sm:$0xff]
  %v2676 = vld [vmem:[%s10 + $0x28] sm:$0xff]
  %v2677 = vld [vmem:[%s10 + $0x30] sm:$0xff]
  %v2678 = vld [vmem:[%s10 + $0x38] sm:$0xff]
  %v2679 = vld [vmem:[%s11] sm:$0x1]
  %v2681 = vperm.slane %v2679, 0
  %v2684 = vsel %vm222, %v2670, 0
  %2686 = vmatpush.msra.mxu0 0.0
  %2687 = vmatpush.msra.mxu0 0.0
  %2688 = vmatpush.msra.mxu0 0.0
  %2689 = vmatpush.msra.mxu0 0.0
  %2690 = vmatpush.msra.mxu0 0.0
  %2691 = vmatpush.msra.mxu0 0.0
  %2692 = vmatpush.msra.mxu0 0.0
  %2693 = vmatpush.msra.mxu0 0.0
  %2694 = vmatpush.msra.mxu0 %v2678
  %2695 = vmatpush.msra.mxu0 %v2677
  %2696 = vmatpush.msra.mxu0 %v2676
  %2697 = vmatpush.msra.mxu0 %v2675
  %2698 = vmatpush.msra.mxu0 %v2674
  %2699 = vmatpush.msra.mxu0 %v2673
  %2700 = vmatpush.msra.mxu0 %v2672
  %2701 = vmatpush.msra.mxu0 %v2671
  %2702 = vmatmul.f32.gmra.mxu0 %v2684
  %v2703 = vpop.f32.mrf.mxu0
  %v2704 = vadd.f32 %v2681, %v2703
  %2705 = vdwg.mxu0
  %v2706 = vmax.f32 %v2704, 0.0
  %v2707 = vld [vmem:[%s12] sm:$0xff]
  %v2708 = vld [vmem:[%s12 + $0x8] sm:$0xff]
  %v2709 = vld [vmem:[%s12 + $0x10] sm:$0xff]
  %v2710 = vld [vmem:[%s12 + $0x18] sm:$0xff]
  %v2711 = vld [vmem:[%s12 + $0x20] sm:$0xff]
  %v2712 = vld [vmem:[%s12 + $0x28] sm:$0xff]
  %v2713 = vld [vmem:[%s12 + $0x30] sm:$0xff]
  %v2714 = vld [vmem:[%s12 + $0x38] sm:$0xff]
  %v2715 = vld [vmem:[%s12 + $0x40] sm:$0xff]
  %v2716 = vld [vmem:[%s12 + $0x48] sm:$0xff]
  %v2717 = vld [vmem:[%s12 + $0x50] sm:$0xff]
  %v2718 = vld [vmem:[%s12 + $0x58] sm:$0xff]
  %v2719 = vld [vmem:[%s12 + $0x60] sm:$0xff]
  %v2720 = vld [vmem:[%s12 + $0x68] sm:$0xff]
  %v2721 = vld [vmem:[%s12 + $0x70] sm:$0xff]
  %v2722 = vld [vmem:[%s12 + $0x78] sm:$0xff]
  %v2723 = vld [vmem:[%s13] sm:$0x1]
  %v2725 = vperm.slane %v2723, 0
  %2727 = vmatpush.msra.mxu0 %v2722
  %2728 = vmatpush.msra.mxu0 %v2721
  %2729 = vmatpush.msra.mxu0 %v2720
  %2730 = vmatpush.msra.mxu0 %v2719
  %2731 = vmatpush.msra.mxu0 %v2718
  %2732 = vmatpush.msra.mxu0 %v2717
  %2733 = vmatpush.msra.mxu0 %v2716
  %2734 = vmatpush.msra.mxu0 %v2715
  %2735 = vmatpush.msra.mxu0 %v2714
  %2736 = vmatpush.msra.mxu0 %v2713
  %2737 = vmatpush.msra.mxu0 %v2712
  %2738 = vmatpush.msra.mxu0 %v2711
  %2739 = vmatpush.msra.mxu0 %v2710
  %2740 = vmatpush.msra.mxu0 %v2709
  %2741 = vmatpush.msra.mxu0 %v2708
  %2742 = vmatpush.msra.mxu0 %v2707
  %2743 = vmatmul.f32.gmra.mxu0 %v2706
  %v2744 = vpop.f32.mrf.mxu0
  %v2745 = vadd.f32 %v2725, %v2744
  %2746 = vdwg.mxu0
  %v2747 = vmax.f32 %v2745, 0.0
  %v2748 = vld [vmem:[%s14] sm:$0x1]
  %v2750 = vperm.slane %v2748, 0
  %v2752 = vmul.f32 %v2747, %v2750
  %v2753 = vsel %vm222, %v2752, 0.0
  %2754 = vadd.xlane.f32.xlu0 %v2753
  %v2755 = vpop.xlane.xlu0 %2754
  %v2756 = vld [vmem:[#allocation4] sm:$0x1]
  %v2758 = vperm.slane %v2756, 0
  %v2760 = vadd.f32 %v2755, %v2758
  %v2761 = vxor.u32 %v2760, 2147483648
  %v2762 = vmul.f32 %v2761, 1.442695
  %v2763 = vpow.pop %v2762
  %v2764 = vadd.f32 %v2763, 1.0
  %v2765 = vrcp.pop %v2764
  %v2766 = vmul.f32 %v2764, %v2765
  %v2767 = vsub.f32 1.0, %v2766
  %v2768 = vmul.f32 %v2765, %v2767
  %v2769 = vadd.f32 %v2765, %v2768
  %vm2770 = vweird.f32 %v2764
  %vm2771 = vweird.f32 %v2765
  %vm2772 = vmor %vm2770, %vm2771
  %v2773 = vsel %vm2772, %v2765, %v2769
  %v2774 = vand.u32 2147483647, %v2764
  %vm2775 = vcmp.eq.f32.partialorder %v2774, 8.507059e+37
  %v2776 = vand.u32 %v2764, 2147483648
  %v2777 = vor.u32 1.1754944e-38, %v2776
  %v2778 = vsel %vm2775, %v2777, %v2773
  %v2779 = vmul.f32 1.0, %v2778
  %vm2780 = vcmask 7168
  %2781 = vst.msk [vmem:[%s16] sm:$0xff] %vm2780, %v2779
  // Predicated region
  $region66: #{enhanced_lstm_trader_forward.1} parent=0 // pred_check
    _
  $region67: #{enhanced_lstm_trader_forward.1} parent=0 // pred_check_branch
    %2783 = sbr.rel (0) target = $region69
  $region68: #{enhanced_lstm_trader_forward.1} parent=0 // pred_region
    _
  $region69: #{enhanced_lstm_trader_forward.1} parent=0 // pred_fallthru
    _
  // Predicated region
  $region70: #{enhanced_lstm_trader_forward.1} parent=0 // pred_check
    _
  $region71: #{enhanced_lstm_trader_forward.1} parent=0 // pred_check_branch
    %2785 = sbr.rel (0) target = $region73
  $region72: #{enhanced_lstm_trader_forward.1} parent=0 // pred_region
    _
  $region73: #{enhanced_lstm_trader_forward.1} parent=0 // pred_fallthru
    _

</llo_original>
